<compile_context>
chip_gen: v5e
topology: v5e:2x2
jax: 0.10.0
libtpu: 0.0.40
codegen_flags: <defaults>
</compile_context>

<pallas_src>
import functools

import jax
import jax.numpy as jnp
from jax.experimental import pallas as pl
from jax.experimental.pallas import tpu as pltpu


def _layer3_tiling(out_f):
    """Return (padded_out, tile): tile is a multiple of 256, <= 2048, and
    divides padded_out exactly (no wasted w3 columns beyond 256-alignment)."""
    out_fp = ((out_f + 255) // 256) * 256
    tn = 256
    for cand in range(256, min(2048, out_fp) + 1, 256):
        if out_fp % cand == 0:
            tn = cand
    return out_fp, tn


def _fc_decoder_kernel(feat_ref, w1_ref, b1_ref, w2_ref, b2_ref,
                       w3_ref, b3_ref, out_ref):
    j = pl.program_id(0)

    # Layers 1+2 recomputed per output tile from resident VMEM inputs.  The
    # two small matmuls hide under the w3 tile DMA; keeping the grid axis
    # carry-free allows dimension_semantics=("parallel",) (megacore on v7x).
    h1 = jnp.dot(feat_ref[...], w1_ref[...],
                 preferred_element_type=jnp.float32) + b1_ref[...]
    h1 = jnp.maximum(h1, 0.0).astype(jnp.bfloat16)
    h2 = jnp.dot(h1, w2_ref[...],
                 preferred_element_type=jnp.float32) + b2_ref[...]
    h2 = jnp.maximum(h2, 0.0).astype(jnp.bfloat16)

    # Layer 3 for this output tile (no activation).  w3 tile is contiguous in
    # HBM (tile-major pack); b3 is resident and indexed by tile id.
    out = jnp.dot(h2, w3_ref[0], preferred_element_type=jnp.float32) + b3_ref[j]
    out_ref[...] = out.astype(out_ref.dtype)


@functools.partial(jax.jit, static_argnames=("num_point", "dim"))
def fc_decoder_forward(feat, packed_params, *, num_point, dim):
    """Pallas-fused 3-layer MLP decoder. feat: (B, 128) -> (B, num_point, dim)."""
    w1, b1, w2, b2, w3, b3 = packed_params
    B = feat.shape[0]
    out_f = num_point * dim

    n_tiles, k_dim, tn = w3.shape            # tile-major packed w3
    out_fp = n_tiles * tn
    assert k_dim == 1024, "w3 must be packed as (n_tiles, 1024, TN)"
    assert tn % 256 == 0, "layer-3 tile must be a multiple of 256 lanes"
    assert out_fp >= out_f, "packed w3 does not cover num_point*dim outputs"
    assert b3.shape == (n_tiles, 1, tn), "b3 must be packed as (n_tiles, 1, TN)"

    Bp = max(8, ((B + 7) // 8) * 8)          # sublane-aligned batch

    # Pad batch; activations in bf16 (f32 accumulation on the MXU inside).
    feat_p = jnp.zeros((Bp, 128), jnp.bfloat16).at[:B].set(
        feat.astype(jnp.bfloat16))

    resident = pl.Buffered(1)                # constant-index inputs: single-buffer
    w3_mode = pl.Buffered(min(max(n_tiles, 1), 3))

    out_flat = pl.pallas_call(
        _fc_decoder_kernel,
        out_shape=jax.ShapeDtypeStruct((Bp, out_fp), jnp.float32),
        grid=(n_tiles,),
        in_specs=[
            pl.BlockSpec((Bp, 128), lambda j: (0, 0), pipeline_mode=resident),
            pl.BlockSpec((128, 1024), lambda j: (0, 0), pipeline_mode=resident),
            pl.BlockSpec((1, 1024), lambda j: (0, 0), pipeline_mode=resident),
            pl.BlockSpec((1024, 1024), lambda j: (0, 0), pipeline_mode=resident),
            pl.BlockSpec((1, 1024), lambda j: (0, 0), pipeline_mode=resident),
            # w3: streamed tile-by-tile, contiguous per tile, up to 3 buffers.
            pl.BlockSpec((1, 1024, tn), lambda j: (j, 0, 0), pipeline_mode=w3_mode),
            # b3: fully resident, indexed by tile id inside the kernel.
            pl.BlockSpec((n_tiles, 1, tn), lambda j: (0, 0, 0),
                         pipeline_mode=resident),
        ],
        out_specs=pl.BlockSpec((Bp, tn), lambda j: (0, j)),
        compiler_params=pltpu.CompilerParams(
            dimension_semantics=("parallel",),   # carry-free -> megacore on v7x
            vmem_limit_bytes=32 << 20,
        ),
    )(feat_p, w1, b1, w2, b2, w3, b3)

    return out_flat[:B, :out_f].reshape(B, num_point, dim)


def init_fc_decoder_params(key, num_point, dim):
    """Deterministic f32 params, weight layout (in_features, out_features)."""
    k1, k2, k3, k4, k5, k6 = jax.random.split(key, 6)
    out_f = num_point * dim
    scale1 = 1.0 / jnp.sqrt(128.0)
    scale2 = 1.0 / jnp.sqrt(1024.0)
    w1 = jax.random.uniform(k1, (128, 1024), jnp.float32, -scale1, scale1)
    b1 = jax.random.uniform(k2, (1, 1024), jnp.float32, -scale1, scale1)
    w2 = jax.random.uniform(k3, (1024, 1024), jnp.float32, -scale2, scale2)
    b2 = jax.random.uniform(k4, (1, 1024), jnp.float32, -scale2, scale2)
    w3 = jax.random.uniform(k5, (1024, out_f), jnp.float32, -scale2, scale2)
    b3 = jax.random.uniform(k6, (1, out_f), jnp.float32, -scale2, scale2)
    return (w1, b1, w2, b2, w3, b3)


def pack_fc_decoder_params(params, num_point, dim):
    """One-time packing: bf16 weights, f32 biases, layer-3 padded + tile-major."""
    w1, b1, w2, b2, w3, b3 = params
    out_f = num_point * dim
    out_fp, tn = _layer3_tiling(out_f)
    n_tiles = out_fp // tn
    assert out_fp % tn == 0

    # Pad layer-3 columns with zeros, then repack tile-major so each output
    # tile of w3 is one contiguous HBM slab: (n_tiles, 1024, tn).
    w3p = jnp.zeros((1024, out_fp), jnp.bfloat16).at[:, :out_f].set(
        w3.astype(jnp.bfloat16))
    w3p = w3p.reshape(1024, n_tiles, tn).transpose(1, 0, 2)
    b3p = jnp.zeros((1, out_fp), jnp.float32).at[:, :out_f].set(
        b3.astype(jnp.float32))
    b3p = b3p.reshape(n_tiles, 1, tn)

    return (w1.astype(jnp.bfloat16), b1.astype(jnp.float32),
            w2.astype(jnp.bfloat16), b2.astype(jnp.float32), w3p, b3p)


def fc_decoder_reference_f32(feat, params, dim):
    """Pure-JAX f32 reference matching the PyTorch forward exactly."""
    w1, b1, w2, b2, w3, b3 = params
    net = jax.nn.relu(feat @ w1 + b1)
    net = jax.nn.relu(net @ w2 + b2)
    net = net @ w3 + b3
    return net.reshape(feat.shape[0], -1, dim)


def fc_decoder_reference_bf16(feat, params, dim):
    """Reference with the same bf16-operand / f32-accumulate scheme as the kernel."""
    w1, b1, w2, b2, w3, b3 = params
    x = feat.astype(jnp.bfloat16)
    h1 = jnp.dot(x, w1.astype(jnp.bfloat16),
                 preferred_element_type=jnp.float32) + b1
    h1 = jnp.maximum(h1, 0.0).astype(jnp.bfloat16)
    h2 = jnp.dot(h1, w2.astype(jnp.bfloat16),
                 preferred_element_type=jnp.float32) + b2
    h2 = jnp.maximum(h2, 0.0).astype(jnp.bfloat16)
    out = jnp.dot(h2, w3.astype(jnp.bfloat16),
                  preferred_element_type=jnp.float32) + b3
    return out.reshape(feat.shape[0], -1, dim)


if __name__ == "__main__":
    base_key = jax.random.PRNGKey(0)

    def run_case(num_point, dim, batch):
        k_feat, k_params = jax.random.split(jax.random.fold_in(base_key, num_point))
        feat = jax.random.normal(k_feat, (batch, 128), dtype=jnp.float32)
        params = init_fc_decoder_params(k_params, num_point, dim)
        packed = pack_fc_decoder_params(params, num_point, dim)

        out = fc_decoder_forward(feat, packed, num_point=num_point, dim=dim)
        out = jax.block_until_ready(out)
        assert out.shape == (batch, num_point, dim), out.shape

        ref_mixed = fc_decoder_reference_bf16(feat, params, dim)
        ref_f32 = fc_decoder_reference_f32(feat, params, dim)
        # Tight check against a reference using identical bf16/f32 arithmetic.
        assert jnp.allclose(out, ref_mixed, atol=2e-3, rtol=2e-3), \
            f"mismatch vs mixed-precision reference (num_point={num_point})"
        # Loose sanity check against the full-f32 PyTorch-equivalent reference.
        assert jnp.allclose(out, ref_f32, atol=5e-2, rtol=5e-2), \
            f"mismatch vs f32 reference (num_point={num_point})"

    # Small case: single layer-3 tile (768 lanes), grid of 1.
    run_case(num_point=256, dim=3, batch=2)
    # Module-default case: 6144 outputs -> 3 tiles of 2048, Buffered(3) path.
    run_case(num_point=2048, dim=3, batch=2)

    print("KERNEL_OK")
</pallas_src>

<mosaic_0001>
module attributes {stable_mosaic.version = 11 : i64} {
  func.func @_fc_decoder_kernel(%arg0: i32, %arg1: memref<8x128xbf16, #tpu.memory_space<vmem>>, %arg2: memref<128x1024xbf16, #tpu.memory_space<vmem>>, %arg3: memref<1x1024xf32, #tpu.memory_space<vmem>>, %arg4: memref<1024x1024xbf16, #tpu.memory_space<vmem>>, %arg5: memref<1x1024xf32, #tpu.memory_space<vmem>>, %arg6: memref<1x1024x768xbf16, #tpu.memory_space<vmem>>, %arg7: memref<1x1x768xf32, #tpu.memory_space<vmem>>, %arg8: memref<8x768xf32, #tpu.memory_space<vmem>>) attributes {dimension_semantics = [#tpu.dimension_semantics<parallel>], iteration_bounds = array<i64: 1>, scalar_prefetch = 0 : i64, scratch_operands = 0 : i64, tpu.core_type = #tpu.core_type<tc>, window_params = [{pipeline_mode = #tpu.pipeline_mode<synchronous>, transform_indices = @transform_0, window_bounds = array<i64: 8, 128>}, {pipeline_mode = #tpu.pipeline_mode<synchronous>, transform_indices = @transform_1, window_bounds = array<i64: 128, 1024>}, {pipeline_mode = #tpu.pipeline_mode<synchronous>, transform_indices = @transform_2, window_bounds = array<i64: 1, 1024>}, {pipeline_mode = #tpu.pipeline_mode<synchronous>, transform_indices = @transform_3, window_bounds = array<i64: 1024, 1024>}, {pipeline_mode = #tpu.pipeline_mode<synchronous>, transform_indices = @transform_4, window_bounds = array<i64: 1, 1024>}, {pipeline_mode = #tpu.pipeline_mode<synchronous>, transform_indices = @transform_5, window_bounds = array<i64: 1, 1024, 768>}, {pipeline_mode = #tpu.pipeline_mode<synchronous>, transform_indices = @transform_6, window_bounds = array<i64: 1, 1, 768>}, {transform_indices = @transform_7, window_bounds = array<i64: 8, 768>}]} {
    %c0 = arith.constant 0 : index
    %c0_0 = arith.constant 0 : index
    %0 = vector.load %arg1[%c0, %c0_0] : memref<8x128xbf16, #tpu.memory_space<vmem>>, vector<8x128xbf16>
    %c0_1 = arith.constant 0 : index
    %c0_2 = arith.constant 0 : index
    %1 = vector.load %arg2[%c0_1, %c0_2] : memref<128x1024xbf16, #tpu.memory_space<vmem>>, vector<128x1024xbf16>
    %cst = arith.constant dense<0.000000e+00> : vector<8x1024xf32>
    %2 = tpu.matmul %0, %1, %cst {dimension_numbers = #tpu.dot_dimension_numbers<[1], [0], [0], [1], [0, 0, 1, 1], [], []>} : vector<8x128xbf16>, vector<128x1024xbf16>, vector<8x1024xf32> -> vector<8x1024xf32>
    %c0_3 = arith.constant 0 : index
    %c0_4 = arith.constant 0 : index
    %3 = vector.load %arg3[%c0_3, %c0_4] : memref<1x1024xf32, #tpu.memory_space<vmem>>, vector<1x1024xf32>
    %4 = vector.broadcast %3 : vector<1x1024xf32> to vector<8x1024xf32>
    %5 = arith.addf %2, %4 : vector<8x1024xf32>
    %cst_5 = arith.constant 0.000000e+00 : f32
    %6 = vector.broadcast %cst_5 : f32 to vector<8x1024xf32>
    %7 = arith.maximumf %5, %6 : vector<8x1024xf32>
    %8 = arith.truncf %7 : vector<8x1024xf32> to vector<8x1024xbf16>
    %c0_6 = arith.constant 0 : index
    %c0_7 = arith.constant 0 : index
    %9 = vector.load %arg4[%c0_6, %c0_7] : memref<1024x1024xbf16, #tpu.memory_space<vmem>>, vector<1024x1024xbf16>
    %cst_8 = arith.constant dense<0.000000e+00> : vector<8x1024xf32>
    %10 = tpu.matmul %8, %9, %cst_8 {dimension_numbers = #tpu.dot_dimension_numbers<[1], [0], [0], [1], [0, 0, 1, 1], [], []>} : vector<8x1024xbf16>, vector<1024x1024xbf16>, vector<8x1024xf32> -> vector<8x1024xf32>
    %c0_9 = arith.constant 0 : index
    %c0_10 = arith.constant 0 : index
    %11 = vector.load %arg5[%c0_9, %c0_10] : memref<1x1024xf32, #tpu.memory_space<vmem>>, vector<1x1024xf32>
    %12 = vector.broadcast %11 : vector<1x1024xf32> to vector<8x1024xf32>
    %13 = arith.addf %10, %12 : vector<8x1024xf32>
    %cst_11 = arith.constant 0.000000e+00 : f32
    %14 = vector.broadcast %cst_11 : f32 to vector<8x1024xf32>
    %15 = arith.maximumf %13, %14 : vector<8x1024xf32>
    %16 = arith.truncf %15 : vector<8x1024xf32> to vector<8x1024xbf16>
    %c0_12 = arith.constant 0 : index
    %c0_13 = arith.constant 0 : index
    %c0_14 = arith.constant 0 : index
    %17 = vector.load %arg6[%c0_12, %c0_13, %c0_14] : memref<1x1024x768xbf16, #tpu.memory_space<vmem>>, vector<1x1024x768xbf16>
    %18 = vector.shape_cast %17 : vector<1x1024x768xbf16> to vector<1024x768xbf16>
    %cst_15 = arith.constant dense<0.000000e+00> : vector<8x768xf32>
    %19 = tpu.matmul %16, %18, %cst_15 {dimension_numbers = #tpu.dot_dimension_numbers<[1], [0], [0], [1], [0, 0, 1, 1], [], []>} : vector<8x1024xbf16>, vector<1024x768xbf16>, vector<8x768xf32> -> vector<8x768xf32>
    %20 = arith.index_cast %arg0 : i32 to index
    %c0_16 = arith.constant 0 : index
    %c0_17 = arith.constant 0 : index
    %21 = vector.load %arg7[%20, %c0_16, %c0_17] : memref<1x1x768xf32, #tpu.memory_space<vmem>>, vector<1x1x768xf32>
    %22 = vector.shape_cast %21 : vector<1x1x768xf32> to vector<1x768xf32>
    %23 = vector.broadcast %22 : vector<1x768xf32> to vector<8x768xf32>
    %24 = arith.addf %19, %23 : vector<8x768xf32>
    %c0_18 = arith.constant 0 : index
    %c0_19 = arith.constant 0 : index
    %25 = vector.load %arg8[%c0_18, %c0_19] : memref<8x768xf32, #tpu.memory_space<vmem>>, vector<8x768xf32>
    tpu.vector_store %arg8[%c0_18, %c0_19], %24 {strides = array<i32>} : memref<8x768xf32, #tpu.memory_space<vmem>>, vector<8x768xf32>,
    return
  }
  func.func @transform_0(%arg0: i32) -> (i32, i32) {
    %c0_i32 = arith.constant 0 : i32
    %c0_i32_0 = arith.constant 0 : i32
    %c0_i32_1 = arith.constant 0 : i32
    return %c0_i32, %c0_i32_0 : i32, i32
  }
  func.func @transform_1(%arg0: i32) -> (i32, i32) {
    %c0_i32 = arith.constant 0 : i32
    %c0_i32_0 = arith.constant 0 : i32
    %c0_i32_1 = arith.constant 0 : i32
    return %c0_i32, %c0_i32_0 : i32, i32
  }
  func.func @transform_2(%arg0: i32) -> (i32, i32) {
    %c0_i32 = arith.constant 0 : i32
    %c0_i32_0 = arith.constant 0 : i32
    %c0_i32_1 = arith.constant 0 : i32
    return %c0_i32, %c0_i32_0 : i32, i32
  }
  func.func @transform_3(%arg0: i32) -> (i32, i32) {
    %c0_i32 = arith.constant 0 : i32
    %c0_i32_0 = arith.constant 0 : i32
    %c0_i32_1 = arith.constant 0 : i32
    return %c0_i32, %c0_i32_0 : i32, i32
  }
  func.func @transform_4(%arg0: i32) -> (i32, i32) {
    %c0_i32 = arith.constant 0 : i32
    %c0_i32_0 = arith.constant 0 : i32
    %c0_i32_1 = arith.constant 0 : i32
    return %c0_i32, %c0_i32_0 : i32, i32
  }
  func.func @transform_5(%arg0: i32) -> (i32, i32, i32) {
    %c0_i32 = arith.constant 0 : i32
    %c0_i32_0 = arith.constant 0 : i32
    %c0_i32_1 = arith.constant 0 : i32
    return %arg0, %c0_i32, %c0_i32_0 : i32, i32, i32
  }
  func.func @transform_6(%arg0: i32) -> (i32, i32, i32) {
    %c0_i32 = arith.constant 0 : i32
    %c0_i32_0 = arith.constant 0 : i32
    %c0_i32_1 = arith.constant 0 : i32
    %c0_i32_2 = arith.constant 0 : i32
    return %c0_i32, %c0_i32_0, %c0_i32_1 : i32, i32, i32
  }
  func.func @transform_7(%arg0: i32) -> (i32, i32) {
    %c0_i32 = arith.constant 0 : i32
    %c0_i32_0 = arith.constant 0 : i32
    return %c0_i32, %arg0 : i32, i32
  }
}

</mosaic_0001>

<llo_original>
// kernel: fc_decoder_forward.1
$region0: #{fc_decoder_forward.1}
  #allocation0 [shape = 'u32[]', space=smem, size = 0x4, offset = 0x4, fixed_abs, tag = 'smem constant byte address 0x4 - core index']
  #allocation1 [shape = 'u32[72,128]{1,0:T(1,128)}', space=vmem, size = 0x9000, scoped, tag = 'internal scratch']
  %s0 = inlined_call_operand.vmem [shape: bf16[8,128], index: 0, kind: input, shape index: {}]
  %s1 = inlined_call_operand.hbm [shape: bf16[128,1024], index: 1, kind: input, shape index: {}]
  %s2 = inlined_call_operand.hbm [shape: f32[1,1024], index: 2, kind: input, shape index: {}]
  %s3 = inlined_call_operand.hbm [shape: bf16[1024,1024], index: 3, kind: input, shape index: {}]
  %s4 = inlined_call_operand.hbm [shape: f32[1,1024], index: 4, kind: input, shape index: {}]
  %s5 = inlined_call_operand.hbm [shape: bf16[1,1024,768], index: 5, kind: input, shape index: {}]
  %s6 = inlined_call_operand.hbm [shape: f32[1,1,768], index: 6, kind: input, shape index: {}]
  %s7 = inlined_call_operand.vmem [shape: f32[8,768], index: 7, kind: output, shape index: {}]
  %s8 = sld [smem:[#allocation0]]
  $region62: #{fc_decoder_forward.1} parent=0
    _
  %s10 = ssub.s32 1, %s8
  %s11 = scalar_select 0, %s10, %s8
  $region1: #{fc_decoder_forward.1} parent=0
    #allocation2 [shape = 'u8[262144]{0}', space=vmem, size = 0x40000, scoped, tag = 'input window, operand 1, single buffered']
    #allocation3 [shape = 's32[1]{0}', space=sflag, size = 0x4, scoped, tag = 'scoped memory for fc_decoder_forward.1']
    #allocation4 [shape = 'u8[4096]{0}', space=vmem, size = 0x1000, scoped, tag = 'input window, operand 2, single buffered']
    #allocation5 [shape = 's32[1]{0}', space=sflag, size = 0x4, scoped, tag = 'scoped memory for fc_decoder_forward.1']
    #allocation6 [shape = 'u8[2097152]{0}', space=vmem, size = 0x200000, scoped, tag = 'input window, operand 3, single buffered']
    #allocation7 [shape = 'u8[4096]{0}', space=vmem, size = 0x1000, scoped, tag = 'input window, operand 4, single buffered']
    #allocation8 [shape = 's32[1]{0}', space=sflag, size = 0x4, scoped, tag = 'scoped memory for fc_decoder_forward.1']
    #allocation9 [shape = 'u8[1572864]{0}', space=vmem, size = 0x180000, scoped, tag = 'input window, operand 5, single buffered']
    #allocation10 [shape = 'u8[3072]{0}', space=vmem, size = 0xc00, scoped, tag = 'input window, operand 6, single buffered']
    #allocation11 [shape = 's32[1]{0}', space=sflag, size = 0x4, scoped, tag = 'scoped memory for fc_decoder_forward.1']
    %12 = vsyncpa [#allocation3], 0
    %13 = vsyncpa [#allocation5], 0
    %14 = vsyncpa [#allocation8], 0
    %15 = vsyncpa [#allocation11], 0
    // Predicated region
    $region2: #{fc_decoder_forward.1} parent=1 // pred_check
      _
    $region3: #{fc_decoder_forward.1} parent=1 // pred_check_branch
      %17 = sbr.rel (0) target = $region5
    $region4: #{fc_decoder_forward.1} parent=1 // pred_region
      _
    $region5: #{fc_decoder_forward.1} parent=1 // pred_fallthru
      _
    // Predicated region
    $region6: #{fc_decoder_forward.1} parent=1 // pred_check
      _
    $region7: #{fc_decoder_forward.1} parent=1 // pred_check_branch
      %19 = sbr.rel (0) target = $region9
    $region8: #{fc_decoder_forward.1} parent=1 // pred_region
      %21 = vsyncadd [#allocation3], 0
      %s22 = sshll.u32 %s1, 4
      %s23 = int_to_ptr.hbm [resolvable:$true] %s22
      %s24 = sshll.u32 [#allocation2], 4
      %s25 = int_to_ptr.vmem [resolvable:$true] %s24
      %30 = dma.hbm_to_vmem [thread:$0]  %s23, 8192, %s25, [#allocation3], 512, 512, 32
    $region9: #{fc_decoder_forward.1} parent=1 // pred_fallthru
      _
    // Predicated region
    $region10: #{fc_decoder_forward.1} parent=1 // pred_check
      _
    $region11: #{fc_decoder_forward.1} parent=1 // pred_check_branch
      %32 = sbr.rel (0) target = $region13
    $region12: #{fc_decoder_forward.1} parent=1 // pred_region
      %34 = vsyncadd [#allocation5], 0
      %s36 = sshll.u32 %s2, 4
      %s37 = int_to_ptr.hbm [resolvable:$true] %s36
      %s38 = sshll.u32 [#allocation4], 4
      %s39 = int_to_ptr.vmem [resolvable:$true] %s38
      %41 = dma.hbm_to_vmem [thread:$0]  %s37, 128, %s39, [#allocation5]
    $region13: #{fc_decoder_forward.1} parent=1 // pred_fallthru
      _
    // Predicated region
    $region14: #{fc_decoder_forward.1} parent=1 // pred_check
      _
    $region15: #{fc_decoder_forward.1} parent=1 // pred_check_branch
      %43 = sbr.rel (0) target = $region17
    $region16: #{fc_decoder_forward.1} parent=1 // pred_region
      %45 = vsyncadd [#allocation5], 0
      %s46 = sshll.u32 %s3, 4
      %s47 = int_to_ptr.hbm [resolvable:$true] %s46
      %s48 = sshll.u32 [#allocation6], 4
      %s49 = int_to_ptr.vmem [resolvable:$true] %s48
      %54 = dma.hbm_to_vmem [thread:$0]  %s47, 65536, %s49, [#allocation5], 512, 512, 32
    $region17: #{fc_decoder_forward.1} parent=1 // pred_fallthru
      _
    // Predicated region
    $region18: #{fc_decoder_forward.1} parent=1 // pred_check
      _
    $region19: #{fc_decoder_forward.1} parent=1 // pred_check_branch
      %56 = sbr.rel (0) target = $region21
    $region20: #{fc_decoder_forward.1} parent=1 // pred_region
      %58 = vsyncadd [#allocation8], 0
      %s60 = sshll.u32 %s4, 4
      %s61 = int_to_ptr.hbm [resolvable:$true] %s60
      %s62 = sshll.u32 [#allocation7], 4
      %s63 = int_to_ptr.vmem [resolvable:$true] %s62
      %65 = dma.hbm_to_vmem [thread:$0]  %s61, 128, %s63, [#allocation8]
    $region21: #{fc_decoder_forward.1} parent=1 // pred_fallthru
      _
    // Predicated region
    $region22: #{fc_decoder_forward.1} parent=1 // pred_check
      _
    $region23: #{fc_decoder_forward.1} parent=1 // pred_check_branch
      %67 = sbr.rel (0) target = $region25
    $region24: #{fc_decoder_forward.1} parent=1 // pred_region
      %69 = vsyncadd [#allocation8], 0
      %s70 = sshll.u32 %s5, 4
      %s71 = int_to_ptr.hbm [resolvable:$true] %s70
      %s72 = sshll.u32 [#allocation9], 4
      %s73 = int_to_ptr.vmem [resolvable:$true] %s72
      %78 = dma.hbm_to_vmem [thread:$0]  %s71, 49152, %s73, [#allocation8], 384, 384, 24
    $region25: #{fc_decoder_forward.1} parent=1 // pred_fallthru
      _
    // Predicated region
    $region26: #{fc_decoder_forward.1} parent=1 // pred_check
      _
    $region27: #{fc_decoder_forward.1} parent=1 // pred_check_branch
      %80 = sbr.rel (0) target = $region29
    $region28: #{fc_decoder_forward.1} parent=1 // pred_region
      %82 = vsyncadd [#allocation11], 0
      %s84 = sshll.u32 %s6, 4
      %s85 = int_to_ptr.hbm [resolvable:$true] %s84
      %s86 = sshll.u32 [#allocation10], 4
      %s87 = int_to_ptr.vmem [resolvable:$true] %s86
      %89 = dma.hbm_to_vmem [thread:$0]  %s85, 96, %s87, [#allocation11]
    $region29: #{fc_decoder_forward.1} parent=1 // pred_fallthru
      _
    // Predicated region
    $region30: #{fc_decoder_forward.1} parent=1 // pred_check
      _
    $region31: #{fc_decoder_forward.1} parent=1 // pred_check_branch
      %91 = sbr.rel (0) target = $region33
    $region32: #{fc_decoder_forward.1} parent=1 // pred_region
      %93 = dma.done [#allocation3], 8192
    $region33: #{fc_decoder_forward.1} parent=1 // pred_fallthru
      _
    // Predicated region
    $region34: #{fc_decoder_forward.1} parent=1 // pred_check
      _
    $region35: #{fc_decoder_forward.1} parent=1 // pred_check_branch
      %95 = sbr.rel (0) target = $region37
    $region36: #{fc_decoder_forward.1} parent=1 // pred_region
      %97 = dma.done [#allocation5], 128
    $region37: #{fc_decoder_forward.1} parent=1 // pred_fallthru
      _
    // Predicated region
    $region38: #{fc_decoder_forward.1} parent=1 // pred_check
      _
    $region39: #{fc_decoder_forward.1} parent=1 // pred_check_branch
      %99 = sbr.rel (0) target = $region41
    $region40: #{fc_decoder_forward.1} parent=1 // pred_region
      %101 = dma.done [#allocation5], 65536
    $region41: #{fc_decoder_forward.1} parent=1 // pred_fallthru
      _
    // Predicated region
    $region42: #{fc_decoder_forward.1} parent=1 // pred_check
      _
    $region43: #{fc_decoder_forward.1} parent=1 // pred_check_branch
      %103 = sbr.rel (0) target = $region45
    $region44: #{fc_decoder_forward.1} parent=1 // pred_region
      %105 = dma.done [#allocation8], 128
    $region45: #{fc_decoder_forward.1} parent=1 // pred_fallthru
      _
    // Predicated region
    $region46: #{fc_decoder_forward.1} parent=1 // pred_check
      _
    $region47: #{fc_decoder_forward.1} parent=1 // pred_check_branch
      %107 = sbr.rel (0) target = $region49
    $region48: #{fc_decoder_forward.1} parent=1 // pred_region
      %109 = dma.done [#allocation8], 49152
    $region49: #{fc_decoder_forward.1} parent=1 // pred_fallthru
      _
    // Predicated region
    $region50: #{fc_decoder_forward.1} parent=1 // pred_check
      _
    $region51: #{fc_decoder_forward.1} parent=1 // pred_check_branch
      %111 = sbr.rel (0) target = $region53
    $region52: #{fc_decoder_forward.1} parent=1 // pred_region
      %113 = dma.done [#allocation11], 96
    $region53: #{fc_decoder_forward.1} parent=1 // pred_fallthru
      _
    %v114 = vld [vmem:[%s0] sm:$0xf]
    %v115 = vld [vmem:[#allocation2] sm:$0xff]
    %v116 = vld [vmem:[#allocation2 + $0x8] sm:$0xff]
    %v117 = vld [vmem:[#allocation2 + $0x10] sm:$0xff]
    %v118 = vld [vmem:[#allocation2 + $0x18] sm:$0xff]
    %v119 = vld [vmem:[#allocation2 + $0x20] sm:$0xff]
    %v120 = vld [vmem:[#allocation2 + $0x28] sm:$0xff]
    %v121 = vld [vmem:[#allocation2 + $0x30] sm:$0xff]
    %v122 = vld [vmem:[#allocation2 + $0x38] sm:$0xff]
    %v123 = vld [vmem:[#allocation2 + $0x40] sm:$0xff]
    %v124 = vld [vmem:[#allocation2 + $0x48] sm:$0xff]
    %v125 = vld [vmem:[#allocation2 + $0x50] sm:$0xff]
    %v126 = vld [vmem:[#allocation2 + $0x58] sm:$0xff]
    %v127 = vld [vmem:[#allocation2 + $0x60] sm:$0xff]
    %v128 = vld [vmem:[#allocation2 + $0x68] sm:$0xff]
    %v129 = vld [vmem:[#allocation2 + $0x70] sm:$0xff]
    %v130 = vld [vmem:[#allocation2 + $0x78] sm:$0xff]
    %v131 = vld [vmem:[#allocation2 + $0x80] sm:$0xff]
    %v132 = vld [vmem:[#allocation2 + $0x88] sm:$0xff]
    %v133 = vld [vmem:[#allocation2 + $0x90] sm:$0xff]
    %v134 = vld [vmem:[#allocation2 + $0x98] sm:$0xff]
    %v135 = vld [vmem:[#allocation2 + $0xa0] sm:$0xff]
    %v136 = vld [vmem:[#allocation2 + $0xa8] sm:$0xff]
    %v137 = vld [vmem:[#allocation2 + $0xb0] sm:$0xff]
    %v138 = vld [vmem:[#allocation2 + $0xb8] sm:$0xff]
    %v139 = vld [vmem:[#allocation2 + $0xc0] sm:$0xff]
    %v140 = vld [vmem:[#allocation2 + $0xc8] sm:$0xff]
    %v141 = vld [vmem:[#allocation2 + $0xd0] sm:$0xff]
    %v142 = vld [vmem:[#allocation2 + $0xd8] sm:$0xff]
    %v143 = vld [vmem:[#allocation2 + $0xe0] sm:$0xff]
    %v144 = vld [vmem:[#allocation2 + $0xe8] sm:$0xff]
    %v145 = vld [vmem:[#allocation2 + $0xf0] sm:$0xff]
    %v146 = vld [vmem:[#allocation2 + $0xf8] sm:$0xff]
    %v147 = vld [vmem:[#allocation2 + $0x100] sm:$0xff]
    %v148 = vld [vmem:[#allocation2 + $0x108] sm:$0xff]
    %v149 = vld [vmem:[#allocation2 + $0x110] sm:$0xff]
    %v150 = vld [vmem:[#allocation2 + $0x118] sm:$0xff]
    %v151 = vld [vmem:[#allocation2 + $0x120] sm:$0xff]
    %v152 = vld [vmem:[#allocation2 + $0x128] sm:$0xff]
    %v153 = vld [vmem:[#allocation2 + $0x130] sm:$0xff]
    %v154 = vld [vmem:[#allocation2 + $0x138] sm:$0xff]
    %v155 = vld [vmem:[#allocation2 + $0x140] sm:$0xff]
    %v156 = vld [vmem:[#allocation2 + $0x148] sm:$0xff]
    %v157 = vld [vmem:[#allocation2 + $0x150] sm:$0xff]
    %v158 = vld [vmem:[#allocation2 + $0x158] sm:$0xff]
    %v159 = vld [vmem:[#allocation2 + $0x160] sm:$0xff]
    %v160 = vld [vmem:[#allocation2 + $0x168] sm:$0xff]
    %v161 = vld [vmem:[#allocation2 + $0x170] sm:$0xff]
    %v162 = vld [vmem:[#allocation2 + $0x178] sm:$0xff]
    %v163 = vld [vmem:[#allocation2 + $0x180] sm:$0xff]
    %v164 = vld [vmem:[#allocation2 + $0x188] sm:$0xff]
    %v165 = vld [vmem:[#allocation2 + $0x190] sm:$0xff]
    %v166 = vld [vmem:[#allocation2 + $0x198] sm:$0xff]
    %v167 = vld [vmem:[#allocation2 + $0x1a0] sm:$0xff]
    %v168 = vld [vmem:[#allocation2 + $0x1a8] sm:$0xff]
    %v169 = vld [vmem:[#allocation2 + $0x1b0] sm:$0xff]
    %v170 = vld [vmem:[#allocation2 + $0x1b8] sm:$0xff]
    %v171 = vld [vmem:[#allocation2 + $0x1c0] sm:$0xff]
    %v172 = vld [vmem:[#allocation2 + $0x1c8] sm:$0xff]
    %v173 = vld [vmem:[#allocation2 + $0x1d0] sm:$0xff]
    %v174 = vld [vmem:[#allocation2 + $0x1d8] sm:$0xff]
    %v175 = vld [vmem:[#allocation2 + $0x1e0] sm:$0xff]
    %v176 = vld [vmem:[#allocation2 + $0x1e8] sm:$0xff]
    %v177 = vld [vmem:[#allocation2 + $0x1f0] sm:$0xff]
    %v178 = vld [vmem:[#allocation2 + $0x1f8] sm:$0xff]
    %v179 = vld [vmem:[#allocation4] sm:$0xff]
    %v181 = vperm.slane %v179, 0
    %v182 = vperm.slane %v179, 1
    %v183 = vperm.slane %v179, 2
    %v184 = vperm.slane %v179, 3
    %v185 = vperm.slane %v179, 4
    %v186 = vperm.slane %v179, 5
    %v187 = vperm.slane %v179, 6
    %v188 = vperm.slane %v179, 7
    %v261 = vunpack.c.l.b16 %v115
    %v262 = vunpack.c.h.b16 %v115
    %v263 = vunpack.c.l.b16 %v116
    %v264 = vunpack.c.h.b16 %v116
    %v265 = vunpack.c.l.b16 %v117
    %v266 = vunpack.c.h.b16 %v117
    %v267 = vunpack.c.l.b16 %v118
    %v268 = vunpack.c.h.b16 %v118
    %v269 = vunpack.c.l.b16 %v119
    %v270 = vunpack.c.h.b16 %v119
    %v271 = vunpack.c.l.b16 %v120
    %v272 = vunpack.c.h.b16 %v120
    %v273 = vunpack.c.l.b16 %v121
    %v274 = vunpack.c.h.b16 %v121
    %v275 = vunpack.c.l.b16 %v122
    %v276 = vunpack.c.h.b16 %v122
    %v277 = vunpack.c.l.b16 %v123
    %v278 = vunpack.c.h.b16 %v123
    %v279 = vunpack.c.l.b16 %v124
    %v280 = vunpack.c.h.b16 %v124
    %v281 = vunpack.c.l.b16 %v125
    %v282 = vunpack.c.h.b16 %v125
    %v283 = vunpack.c.l.b16 %v126
    %v284 = vunpack.c.h.b16 %v126
    %v285 = vunpack.c.l.b16 %v127
    %v286 = vunpack.c.h.b16 %v127
    %v287 = vunpack.c.l.b16 %v128
    %v288 = vunpack.c.h.b16 %v128
    %v289 = vunpack.c.l.b16 %v129
    %v290 = vunpack.c.h.b16 %v129
    %v291 = vunpack.c.l.b16 %v130
    %v292 = vunpack.c.h.b16 %v130
    %v293 = vunpack.c.l.b16 %v131
    %v294 = vunpack.c.h.b16 %v131
    %v295 = vunpack.c.l.b16 %v132
    %v296 = vunpack.c.h.b16 %v132
    %v297 = vunpack.c.l.b16 %v133
    %v298 = vunpack.c.h.b16 %v133
    %v299 = vunpack.c.l.b16 %v134
    %v300 = vunpack.c.h.b16 %v134
    %v301 = vunpack.c.l.b16 %v135
    %v302 = vunpack.c.h.b16 %v135
    %v303 = vunpack.c.l.b16 %v136
    %v304 = vunpack.c.h.b16 %v136
    %v305 = vunpack.c.l.b16 %v137
    %v306 = vunpack.c.h.b16 %v137
    %v307 = vunpack.c.l.b16 %v138
    %v308 = vunpack.c.h.b16 %v138
    %v309 = vunpack.c.l.b16 %v139
    %v310 = vunpack.c.h.b16 %v139
    %v311 = vunpack.c.l.b16 %v140
    %v312 = vunpack.c.h.b16 %v140
    %v313 = vunpack.c.l.b16 %v141
    %v314 = vunpack.c.h.b16 %v141
    %v315 = vunpack.c.l.b16 %v142
    %v316 = vunpack.c.h.b16 %v142
    %v317 = vunpack.c.l.b16 %v143
    %v318 = vunpack.c.h.b16 %v143
    %v319 = vunpack.c.l.b16 %v144
    %v320 = vunpack.c.h.b16 %v144
    %v321 = vunpack.c.l.b16 %v145
    %v322 = vunpack.c.h.b16 %v145
    %v323 = vunpack.c.l.b16 %v146
    %v324 = vunpack.c.h.b16 %v146
    %v325 = vunpack.c.l.b16 %v147
    %v326 = vunpack.c.h.b16 %v147
    %v327 = vunpack.c.l.b16 %v148
    %v328 = vunpack.c.h.b16 %v148
    %v329 = vunpack.c.l.b16 %v149
    %v330 = vunpack.c.h.b16 %v149
    %v331 = vunpack.c.l.b16 %v150
    %v332 = vunpack.c.h.b16 %v150
    %v333 = vunpack.c.l.b16 %v151
    %v334 = vunpack.c.h.b16 %v151
    %v335 = vunpack.c.l.b16 %v152
    %v336 = vunpack.c.h.b16 %v152
    %v337 = vunpack.c.l.b16 %v153
    %v338 = vunpack.c.h.b16 %v153
    %v339 = vunpack.c.l.b16 %v154
    %v340 = vunpack.c.h.b16 %v154
    %v341 = vunpack.c.l.b16 %v155
    %v342 = vunpack.c.h.b16 %v155
    %v343 = vunpack.c.l.b16 %v156
    %v344 = vunpack.c.h.b16 %v156
    %v345 = vunpack.c.l.b16 %v157
    %v346 = vunpack.c.h.b16 %v157
    %v347 = vunpack.c.l.b16 %v158
    %v348 = vunpack.c.h.b16 %v158
    %v349 = vunpack.c.l.b16 %v159
    %v350 = vunpack.c.h.b16 %v159
    %v351 = vunpack.c.l.b16 %v160
    %v352 = vunpack.c.h.b16 %v160
    %v353 = vunpack.c.l.b16 %v161
    %v354 = vunpack.c.h.b16 %v161
    %v355 = vunpack.c.l.b16 %v162
    %v356 = vunpack.c.h.b16 %v162
    %v357 = vunpack.c.l.b16 %v163
    %v358 = vunpack.c.h.b16 %v163
    %v359 = vunpack.c.l.b16 %v164
    %v360 = vunpack.c.h.b16 %v164
    %v361 = vunpack.c.l.b16 %v165
    %v362 = vunpack.c.h.b16 %v165
    %v363 = vunpack.c.l.b16 %v166
    %v364 = vunpack.c.h.b16 %v166
    %v365 = vunpack.c.l.b16 %v167
    %v366 = vunpack.c.h.b16 %v167
    %v367 = vunpack.c.l.b16 %v168
    %v368 = vunpack.c.h.b16 %v168
    %v369 = vunpack.c.l.b16 %v169
    %v370 = vunpack.c.h.b16 %v169
    %v371 = vunpack.c.l.b16 %v170
    %v372 = vunpack.c.h.b16 %v170
    %v373 = vunpack.c.l.b16 %v171
    %v374 = vunpack.c.h.b16 %v171
    %v375 = vunpack.c.l.b16 %v172
    %v376 = vunpack.c.h.b16 %v172
    %v377 = vunpack.c.l.b16 %v173
    %v378 = vunpack.c.h.b16 %v173
    %v379 = vunpack.c.l.b16 %v174
    %v380 = vunpack.c.h.b16 %v174
    %v381 = vunpack.c.l.b16 %v175
    %v382 = vunpack.c.h.b16 %v175
    %v383 = vunpack.c.l.b16 %v176
    %v384 = vunpack.c.h.b16 %v176
    %v385 = vunpack.c.l.b16 %v177
    %v386 = vunpack.c.h.b16 %v177
    %v387 = vunpack.c.l.b16 %v178
    %v388 = vunpack.c.h.b16 %v178
    %v389 = vpack.c.b16 %v269, %v261
    %v390 = vpack.c.b16 %v270, %v262
    %v391 = vpack.c.b16 %v271, %v263
    %v392 = vpack.c.b16 %v272, %v264
    %v393 = vpack.c.b16 %v273, %v265
    %v394 = vpack.c.b16 %v274, %v266
    %v395 = vpack.c.b16 %v275, %v267
    %v396 = vpack.c.b16 %v276, %v268
    %v397 = vpack.c.b16 %v285, %v277
    %v398 = vpack.c.b16 %v286, %v278
    %v399 = vpack.c.b16 %v287, %v279
    %v400 = vpack.c.b16 %v288, %v280
    %v401 = vpack.c.b16 %v289, %v281
    %v402 = vpack.c.b16 %v290, %v282
    %v403 = vpack.c.b16 %v291, %v283
    %v404 = vpack.c.b16 %v292, %v284
    %v405 = vpack.c.b16 %v301, %v293
    %v406 = vpack.c.b16 %v302, %v294
    %v407 = vpack.c.b16 %v303, %v295
    %v408 = vpack.c.b16 %v304, %v296
    %v409 = vpack.c.b16 %v305, %v297
    %v410 = vpack.c.b16 %v306, %v298
    %v411 = vpack.c.b16 %v307, %v299
    %v412 = vpack.c.b16 %v308, %v300
    %v413 = vpack.c.b16 %v317, %v309
    %v414 = vpack.c.b16 %v318, %v310
    %v415 = vpack.c.b16 %v319, %v311
    %v416 = vpack.c.b16 %v320, %v312
    %v417 = vpack.c.b16 %v321, %v313
    %v418 = vpack.c.b16 %v322, %v314
    %v419 = vpack.c.b16 %v323, %v315
    %v420 = vpack.c.b16 %v324, %v316
    %v421 = vpack.c.b16 %v333, %v325
    %v422 = vpack.c.b16 %v334, %v326
    %v423 = vpack.c.b16 %v335, %v327
    %v424 = vpack.c.b16 %v336, %v328
    %v425 = vpack.c.b16 %v337, %v329
    %v426 = vpack.c.b16 %v338, %v330
    %v427 = vpack.c.b16 %v339, %v331
    %v428 = vpack.c.b16 %v340, %v332
    %v429 = vpack.c.b16 %v349, %v341
    %v430 = vpack.c.b16 %v350, %v342
    %v431 = vpack.c.b16 %v351, %v343
    %v432 = vpack.c.b16 %v352, %v344
    %v433 = vpack.c.b16 %v353, %v345
    %v434 = vpack.c.b16 %v354, %v346
    %v435 = vpack.c.b16 %v355, %v347
    %v436 = vpack.c.b16 %v356, %v348
    %v437 = vpack.c.b16 %v365, %v357
    %v438 = vpack.c.b16 %v366, %v358
    %v439 = vpack.c.b16 %v367, %v359
    %v440 = vpack.c.b16 %v368, %v360
    %v441 = vpack.c.b16 %v369, %v361
    %v442 = vpack.c.b16 %v370, %v362
    %v443 = vpack.c.b16 %v371, %v363
    %v444 = vpack.c.b16 %v372, %v364
    %v445 = vpack.c.b16 %v381, %v373
    %v446 = vpack.c.b16 %v382, %v374
    %v447 = vpack.c.b16 %v383, %v375
    %v448 = vpack.c.b16 %v384, %v376
    %v449 = vpack.c.b16 %v385, %v377
    %v450 = vpack.c.b16 %v386, %v378
    %v451 = vpack.c.b16 %v387, %v379
    %v452 = vpack.c.b16 %v388, %v380
    %517 = vmatpush.bf16.msra.mxu0 %v445
    %518 = vmatpush.bf16.msra.mxu0 %v437
    %519 = vmatpush.bf16.msra.mxu0 %v429
    %520 = vmatpush.bf16.msra.mxu0 %v421
    %521 = vmatpush.bf16.msra.mxu0 %v413
    %522 = vmatpush.bf16.msra.mxu0 %v405
    %523 = vmatpush.bf16.msra.mxu0 %v397
    %524 = vmatpush.bf16.msra.mxu0 %v389
    %525 = vmatmul.bf16.gmra.mxu0 %v114
    %v526 = vpop.f32.mrf.mxu0
    %v527 = vadd.f32 %v181, %v526
    %v528 = vpop.f32.mrf.mxu0
    %529 = vdwg.mxu0
    %530 = vmatpush.bf16.msra.mxu0 %v446
    %531 = vmatpush.bf16.msra.mxu0 %v438
    %532 = vmatpush.bf16.msra.mxu0 %v430
    %533 = vmatpush.bf16.msra.mxu0 %v422
    %534 = vmatpush.bf16.msra.mxu0 %v414
    %535 = vmatpush.bf16.msra.mxu0 %v406
    %536 = vmatpush.bf16.msra.mxu0 %v398
    %537 = vmatpush.bf16.msra.mxu0 %v390
    %538 = vmatmul.bf16.gmra.mxu0 %v114
    %v539 = vpop.f32.mrf.mxu0
    %v540 = vadd.f32 %v182, %v539
    %v541 = vpop.f32.mrf.mxu0
    %542 = vdwg.mxu0
    %543 = vmatpush.bf16.msra.mxu0 %v447
    %544 = vmatpush.bf16.msra.mxu0 %v439
    %545 = vmatpush.bf16.msra.mxu0 %v431
    %546 = vmatpush.bf16.msra.mxu0 %v423
    %547 = vmatpush.bf16.msra.mxu0 %v415
    %548 = vmatpush.bf16.msra.mxu0 %v407
    %549 = vmatpush.bf16.msra.mxu0 %v399
    %550 = vmatpush.bf16.msra.mxu0 %v391
    %551 = vmatmul.bf16.gmra.mxu0 %v114
    %v552 = vpop.f32.mrf.mxu0
    %v553 = vadd.f32 %v183, %v552
    %v554 = vpop.f32.mrf.mxu0
    %555 = vdwg.mxu0
    %556 = vmatpush.bf16.msra.mxu0 %v448
    %557 = vmatpush.bf16.msra.mxu0 %v440
    %558 = vmatpush.bf16.msra.mxu0 %v432
    %559 = vmatpush.bf16.msra.mxu0 %v424
    %560 = vmatpush.bf16.msra.mxu0 %v416
    %561 = vmatpush.bf16.msra.mxu0 %v408
    %562 = vmatpush.bf16.msra.mxu0 %v400
    %563 = vmatpush.bf16.msra.mxu0 %v392
    %564 = vmatmul.bf16.gmra.mxu0 %v114
    %v565 = vpop.f32.mrf.mxu0
    %v566 = vadd.f32 %v184, %v565
    %v567 = vpop.f32.mrf.mxu0
    %568 = vdwg.mxu0
    %569 = vmatpush.bf16.msra.mxu0 %v449
    %570 = vmatpush.bf16.msra.mxu0 %v441
    %571 = vmatpush.bf16.msra.mxu0 %v433
    %572 = vmatpush.bf16.msra.mxu0 %v425
    %573 = vmatpush.bf16.msra.mxu0 %v417
    %574 = vmatpush.bf16.msra.mxu0 %v409
    %575 = vmatpush.bf16.msra.mxu0 %v401
    %576 = vmatpush.bf16.msra.mxu0 %v393
    %577 = vmatmul.bf16.gmra.mxu0 %v114
    %v578 = vpop.f32.mrf.mxu0
    %v579 = vadd.f32 %v185, %v578
    %v580 = vpop.f32.mrf.mxu0
    %581 = vdwg.mxu0
    %582 = vmatpush.bf16.msra.mxu0 %v450
    %583 = vmatpush.bf16.msra.mxu0 %v442
    %584 = vmatpush.bf16.msra.mxu0 %v434
    %585 = vmatpush.bf16.msra.mxu0 %v426
    %586 = vmatpush.bf16.msra.mxu0 %v418
    %587 = vmatpush.bf16.msra.mxu0 %v410
    %588 = vmatpush.bf16.msra.mxu0 %v402
    %589 = vmatpush.bf16.msra.mxu0 %v394
    %590 = vmatmul.bf16.gmra.mxu0 %v114
    %v591 = vpop.f32.mrf.mxu0
    %v592 = vadd.f32 %v186, %v591
    %v593 = vpop.f32.mrf.mxu0
    %594 = vdwg.mxu0
    %595 = vmatpush.bf16.msra.mxu0 %v451
    %596 = vmatpush.bf16.msra.mxu0 %v443
    %597 = vmatpush.bf16.msra.mxu0 %v435
    %598 = vmatpush.bf16.msra.mxu0 %v427
    %599 = vmatpush.bf16.msra.mxu0 %v419
    %600 = vmatpush.bf16.msra.mxu0 %v411
    %601 = vmatpush.bf16.msra.mxu0 %v403
    %602 = vmatpush.bf16.msra.mxu0 %v395
    %603 = vmatmul.bf16.gmra.mxu0 %v114
    %v604 = vpop.f32.mrf.mxu0
    %v605 = vadd.f32 %v187, %v604
    %v606 = vpop.f32.mrf.mxu0
    %607 = vdwg.mxu0
    %608 = vmatpush.bf16.msra.mxu0 %v452
    %609 = vmatpush.bf16.msra.mxu0 %v444
    %610 = vmatpush.bf16.msra.mxu0 %v436
    %611 = vmatpush.bf16.msra.mxu0 %v428
    %612 = vmatpush.bf16.msra.mxu0 %v420
    %613 = vmatpush.bf16.msra.mxu0 %v412
    %614 = vmatpush.bf16.msra.mxu0 %v404
    %615 = vmatpush.bf16.msra.mxu0 %v396
    %616 = vmatmul.bf16.gmra.mxu0 %v114
    %v617 = vpop.f32.mrf.mxu0
    %v618 = vadd.f32 %v188, %v617
    %v619 = vpop.f32.mrf.mxu0
    %620 = vdwg.mxu0
    %v621 = vmax.f32 %v527, 0.0
    %v622 = vmax.f32 %v540, 0.0
    %v623 = vmax.f32 %v553, 0.0
    %v624 = vmax.f32 %v566, 0.0
    %v625 = vmax.f32 %v579, 0.0
    %v626 = vmax.f32 %v592, 0.0
    %v627 = vmax.f32 %v605, 0.0
    %v628 = vmax.f32 %v618, 0.0
    %v629 = vpack.c.bf16 %v621, %v621
    %v630 = vpack.c.bf16 %v622, %v622
    %v631 = vpack.c.bf16 %v623, %v623
    %v632 = vpack.c.bf16 %v624, %v624
    %v633 = vpack.c.bf16 %v625, %v625
    %v634 = vpack.c.bf16 %v626, %v626
    %v635 = vpack.c.bf16 %v627, %v627
    %v636 = vpack.c.bf16 %v628, %v628
    %v637 = vld [vmem:[#allocation6] sm:$0xff]
    %v638 = vld [vmem:[#allocation6 + $0x8] sm:$0xff]
    %v639 = vld [vmem:[#allocation6 + $0x10] sm:$0xff]
    %v640 = vld [vmem:[#allocation6 + $0x18] sm:$0xff]
    %v641 = vld [vmem:[#allocation6 + $0x20] sm:$0xff]
    %v642 = vld [vmem:[#allocation6 + $0x28] sm:$0xff]
    %v643 = vld [vmem:[#allocation6 + $0x30] sm:$0xff]
    %v644 = vld [vmem:[#allocation6 + $0x38] sm:$0xff]
    %v645 = vld [vmem:[#allocation6 + $0x40] sm:$0xff]
    %v646 = vld [vmem:[#allocation6 + $0x48] sm:$0xff]
    %v647 = vld [vmem:[#allocation6 + $0x50] sm:$0xff]
    %v648 = vld [vmem:[#allocation6 + $0x58] sm:$0xff]
    %v649 = vld [vmem:[#allocation6 + $0x60] sm:$0xff]
    %v650 = vld [vmem:[#allocation6 + $0x68] sm:$0xff]
    %v651 = vld [vmem:[#allocation6 + $0x70] sm:$0xff]
    %v652 = vld [vmem:[#allocation6 + $0x78] sm:$0xff]
    %v653 = vld [vmem:[#allocation6 + $0x80] sm:$0xff]
    %v654 = vld [vmem:[#allocation6 + $0x88] sm:$0xff]
    %v655 = vld [vmem:[#allocation6 + $0x90] sm:$0xff]
    %v656 = vld [vmem:[#allocation6 + $0x98] sm:$0xff]
    %v657 = vld [vmem:[#allocation6 + $0xa0] sm:$0xff]
    %v658 = vld [vmem:[#allocation6 + $0xa8] sm:$0xff]
    %v659 = vld [vmem:[#allocation6 + $0xb0] sm:$0xff]
    %v660 = vld [vmem:[#allocation6 + $0xb8] sm:$0xff]
    %v661 = vld [vmem:[#allocation6 + $0xc0] sm:$0xff]
    %v662 = vld [vmem:[#allocation6 + $0xc8] sm:$0xff]
    %v663 = vld [vmem:[#allocation6 + $0xd0] sm:$0xff]
    %v664 = vld [vmem:[#allocation6 + $0xd8] sm:$0xff]
    %v665 = vld [vmem:[#allocation6 + $0xe0] sm:$0xff]
    %v666 = vld [vmem:[#allocation6 + $0xe8] sm:$0xff]
    %v667 = vld [vmem:[#allocation6 + $0xf0] sm:$0xff]
    %v668 = vld [vmem:[#allocation6 + $0xf8] sm:$0xff]
    %v669 = vld [vmem:[#allocation6 + $0x100] sm:$0xff]
    %v670 = vld [vmem:[#allocation6 + $0x108] sm:$0xff]
    %v671 = vld [vmem:[#allocation6 + $0x110] sm:$0xff]
    %v672 = vld [vmem:[#allocation6 + $0x118] sm:$0xff]
    %v673 = vld [vmem:[#allocation6 + $0x120] sm:$0xff]
    %v674 = vld [vmem:[#allocation6 + $0x128] sm:$0xff]
    %v675 = vld [vmem:[#allocation6 + $0x130] sm:$0xff]
    %v676 = vld [vmem:[#allocation6 + $0x138] sm:$0xff]
    %v677 = vld [vmem:[#allocation6 + $0x140] sm:$0xff]
    %v678 = vld [vmem:[#allocation6 + $0x148] sm:$0xff]
    %v679 = vld [vmem:[#allocation6 + $0x150] sm:$0xff]
    %v680 = vld [vmem:[#allocation6 + $0x158] sm:$0xff]
    %v681 = vld [vmem:[#allocation6 + $0x160] sm:$0xff]
    %v682 = vld [vmem:[#allocation6 + $0x168] sm:$0xff]
    %v683 = vld [vmem:[#allocation6 + $0x170] sm:$0xff]
    %v684 = vld [vmem:[#allocation6 + $0x178] sm:$0xff]
    %v685 = vld [vmem:[#allocation6 + $0x180] sm:$0xff]
    %v686 = vld [vmem:[#allocation6 + $0x188] sm:$0xff]
    %v687 = vld [vmem:[#allocation6 + $0x190] sm:$0xff]
    %v688 = vld [vmem:[#allocation6 + $0x198] sm:$0xff]
    %v689 = vld [vmem:[#allocation6 + $0x1a0] sm:$0xff]
    %v690 = vld [vmem:[#allocation6 + $0x1a8] sm:$0xff]
    %v691 = vld [vmem:[#allocation6 + $0x1b0] sm:$0xff]
    %v692 = vld [vmem:[#allocation6 + $0x1b8] sm:$0xff]
    %v693 = vld [vmem:[#allocation6 + $0x1c0] sm:$0xff]
    %v694 = vld [vmem:[#allocation6 + $0x1c8] sm:$0xff]
    %v695 = vld [vmem:[#allocation6 + $0x1d0] sm:$0xff]
    %v696 = vld [vmem:[#allocation6 + $0x1d8] sm:$0xff]
    %v697 = vld [vmem:[#allocation6 + $0x1e0] sm:$0xff]
    %v698 = vld [vmem:[#allocation6 + $0x1e8] sm:$0xff]
    %v699 = vld [vmem:[#allocation6 + $0x1f0] sm:$0xff]
    %v700 = vld [vmem:[#allocation6 + $0x1f8] sm:$0xff]
    %v701 = vld [vmem:[#allocation6 + $0x200] sm:$0xff]
    %v702 = vld [vmem:[#allocation6 + $0x208] sm:$0xff]
    %v703 = vld [vmem:[#allocation6 + $0x210] sm:$0xff]
    %v704 = vld [vmem:[#allocation6 + $0x218] sm:$0xff]
    %v705 = vld [vmem:[#allocation6 + $0x220] sm:$0xff]
    %v706 = vld [vmem:[#allocation6 + $0x228] sm:$0xff]
    %v707 = vld [vmem:[#allocation6 + $0x230] sm:$0xff]
    %v708 = vld [vmem:[#allocation6 + $0x238] sm:$0xff]
    %v709 = vld [vmem:[#allocation6 + $0x240] sm:$0xff]
    %v710 = vld [vmem:[#allocation6 + $0x248] sm:$0xff]
    %v711 = vld [vmem:[#allocation6 + $0x250] sm:$0xff]
    %v712 = vld [vmem:[#allocation6 + $0x258] sm:$0xff]
    %v713 = vld [vmem:[#allocation6 + $0x260] sm:$0xff]
    %v714 = vld [vmem:[#allocation6 + $0x268] sm:$0xff]
    %v715 = vld [vmem:[#allocation6 + $0x270] sm:$0xff]
    %v716 = vld [vmem:[#allocation6 + $0x278] sm:$0xff]
    %v717 = vld [vmem:[#allocation6 + $0x280] sm:$0xff]
    %v718 = vld [vmem:[#allocation6 + $0x288] sm:$0xff]
    %v719 = vld [vmem:[#allocation6 + $0x290] sm:$0xff]
    %v720 = vld [vmem:[#allocation6 + $0x298] sm:$0xff]
    %v721 = vld [vmem:[#allocation6 + $0x2a0] sm:$0xff]
    %v722 = vld [vmem:[#allocation6 + $0x2a8] sm:$0xff]
    %v723 = vld [vmem:[#allocation6 + $0x2b0] sm:$0xff]
    %v724 = vld [vmem:[#allocation6 + $0x2b8] sm:$0xff]
    %v725 = vld [vmem:[#allocation6 + $0x2c0] sm:$0xff]
    %v726 = vld [vmem:[#allocation6 + $0x2c8] sm:$0xff]
    %v727 = vld [vmem:[#allocation6 + $0x2d0] sm:$0xff]
    %v728 = vld [vmem:[#allocation6 + $0x2d8] sm:$0xff]
    %v729 = vld [vmem:[#allocation6 + $0x2e0] sm:$0xff]
    %v730 = vld [vmem:[#allocation6 + $0x2e8] sm:$0xff]
    %v731 = vld [vmem:[#allocation6 + $0x2f0] sm:$0xff]
    %v732 = vld [vmem:[#allocation6 + $0x2f8] sm:$0xff]
    %v733 = vld [vmem:[#allocation6 + $0x300] sm:$0xff]
    %v734 = vld [vmem:[#allocation6 + $0x308] sm:$0xff]
    %v735 = vld [vmem:[#allocation6 + $0x310] sm:$0xff]
    %v736 = vld [vmem:[#allocation6 + $0x318] sm:$0xff]
    %v737 = vld [vmem:[#allocation6 + $0x320] sm:$0xff]
    %v738 = vld [vmem:[#allocation6 + $0x328] sm:$0xff]
    %v739 = vld [vmem:[#allocation6 + $0x330] sm:$0xff]
    %v740 = vld [vmem:[#allocation6 + $0x338] sm:$0xff]
    %v741 = vld [vmem:[#allocation6 + $0x340] sm:$0xff]
    %v742 = vld [vmem:[#allocation6 + $0x348] sm:$0xff]
    %v743 = vld [vmem:[#allocation6 + $0x350] sm:$0xff]
    %v744 = vld [vmem:[#allocation6 + $0x358] sm:$0xff]
    %v745 = vld [vmem:[#allocation6 + $0x360] sm:$0xff]
    %v746 = vld [vmem:[#allocation6 + $0x368] sm:$0xff]
    %v747 = vld [vmem:[#allocation6 + $0x370] sm:$0xff]
    %v748 = vld [vmem:[#allocation6 + $0x378] sm:$0xff]
    %v749 = vld [vmem:[#allocation6 + $0x380] sm:$0xff]
    %v750 = vld [vmem:[#allocation6 + $0x388] sm:$0xff]
    %v751 = vld [vmem:[#allocation6 + $0x390] sm:$0xff]
    %v752 = vld [vmem:[#allocation6 + $0x398] sm:$0xff]
    %v753 = vld [vmem:[#allocation6 + $0x3a0] sm:$0xff]
    %v754 = vld [vmem:[#allocation6 + $0x3a8] sm:$0xff]
    %v755 = vld [vmem:[#allocation6 + $0x3b0] sm:$0xff]
    %v756 = vld [vmem:[#allocation6 + $0x3b8] sm:$0xff]
    %v757 = vld [vmem:[#allocation6 + $0x3c0] sm:$0xff]
    %v758 = vld [vmem:[#allocation6 + $0x3c8] sm:$0xff]
    %v759 = vld [vmem:[#allocation6 + $0x3d0] sm:$0xff]
    %v760 = vld [vmem:[#allocation6 + $0x3d8] sm:$0xff]
    %v761 = vld [vmem:[#allocation6 + $0x3e0] sm:$0xff]
    %v762 = vld [vmem:[#allocation6 + $0x3e8] sm:$0xff]
    %v763 = vld [vmem:[#allocation6 + $0x3f0] sm:$0xff]
    %v764 = vld [vmem:[#allocation6 + $0x3f8] sm:$0xff]
    %v765 = vld [vmem:[#allocation6 + $0x400] sm:$0xff]
    %v766 = vld [vmem:[#allocation6 + $0x408] sm:$0xff]
    %v767 = vld [vmem:[#allocation6 + $0x410] sm:$0xff]
    %v768 = vld [vmem:[#allocation6 + $0x418] sm:$0xff]
    %v769 = vld [vmem:[#allocation6 + $0x420] sm:$0xff]
    %v770 = vld [vmem:[#allocation6 + $0x428] sm:$0xff]
    %v771 = vld [vmem:[#allocation6 + $0x430] sm:$0xff]
    %v772 = vld [vmem:[#allocation6 + $0x438] sm:$0xff]
    %v773 = vld [vmem:[#allocation6 + $0x440] sm:$0xff]
    %v774 = vld [vmem:[#allocation6 + $0x448] sm:$0xff]
    %v775 = vld [vmem:[#allocation6 + $0x450] sm:$0xff]
    %v776 = vld [vmem:[#allocation6 + $0x458] sm:$0xff]
    %v777 = vld [vmem:[#allocation6 + $0x460] sm:$0xff]
    %v778 = vld [vmem:[#allocation6 + $0x468] sm:$0xff]
    %v779 = vld [vmem:[#allocation6 + $0x470] sm:$0xff]
    %v780 = vld [vmem:[#allocation6 + $0x478] sm:$0xff]
    %v781 = vld [vmem:[#allocation6 + $0x480] sm:$0xff]
    %v782 = vld [vmem:[#allocation6 + $0x488] sm:$0xff]
    %v783 = vld [vmem:[#allocation6 + $0x490] sm:$0xff]
    %v784 = vld [vmem:[#allocation6 + $0x498] sm:$0xff]
    %v785 = vld [vmem:[#allocation6 + $0x4a0] sm:$0xff]
    %v786 = vld [vmem:[#allocation6 + $0x4a8] sm:$0xff]
    %v787 = vld [vmem:[#allocation6 + $0x4b0] sm:$0xff]
    %v788 = vld [vmem:[#allocation6 + $0x4b8] sm:$0xff]
    %v789 = vld [vmem:[#allocation6 + $0x4c0] sm:$0xff]
    %v790 = vld [vmem:[#allocation6 + $0x4c8] sm:$0xff]
    %v791 = vld [vmem:[#allocation6 + $0x4d0] sm:$0xff]
    %v792 = vld [vmem:[#allocation6 + $0x4d8] sm:$0xff]
    %v793 = vld [vmem:[#allocation6 + $0x4e0] sm:$0xff]
    %v794 = vld [vmem:[#allocation6 + $0x4e8] sm:$0xff]
    %v795 = vld [vmem:[#allocation6 + $0x4f0] sm:$0xff]
    %v796 = vld [vmem:[#allocation6 + $0x4f8] sm:$0xff]
    %v797 = vld [vmem:[#allocation6 + $0x500] sm:$0xff]
    %v798 = vld [vmem:[#allocation6 + $0x508] sm:$0xff]
    %v799 = vld [vmem:[#allocation6 + $0x510] sm:$0xff]
    %v800 = vld [vmem:[#allocation6 + $0x518] sm:$0xff]
    %v801 = vld [vmem:[#allocation6 + $0x520] sm:$0xff]
    %v802 = vld [vmem:[#allocation6 + $0x528] sm:$0xff]
    %v803 = vld [vmem:[#allocation6 + $0x530] sm:$0xff]
    %v804 = vld [vmem:[#allocation6 + $0x538] sm:$0xff]
    %v805 = vld [vmem:[#allocation6 + $0x540] sm:$0xff]
    %v806 = vld [vmem:[#allocation6 + $0x548] sm:$0xff]
    %v807 = vld [vmem:[#allocation6 + $0x550] sm:$0xff]
    %v808 = vld [vmem:[#allocation6 + $0x558] sm:$0xff]
    %v809 = vld [vmem:[#allocation6 + $0x560] sm:$0xff]
    %v810 = vld [vmem:[#allocation6 + $0x568] sm:$0xff]
    %v811 = vld [vmem:[#allocation6 + $0x570] sm:$0xff]
    %v812 = vld [vmem:[#allocation6 + $0x578] sm:$0xff]
    %v813 = vld [vmem:[#allocation6 + $0x580] sm:$0xff]
    %v814 = vld [vmem:[#allocation6 + $0x588] sm:$0xff]
    %v815 = vld [vmem:[#allocation6 + $0x590] sm:$0xff]
    %v816 = vld [vmem:[#allocation6 + $0x598] sm:$0xff]
    %v817 = vld [vmem:[#allocation6 + $0x5a0] sm:$0xff]
    %v818 = vld [vmem:[#allocation6 + $0x5a8] sm:$0xff]
    %v819 = vld [vmem:[#allocation6 + $0x5b0] sm:$0xff]
    %v820 = vld [vmem:[#allocation6 + $0x5b8] sm:$0xff]
    %v821 = vld [vmem:[#allocation6 + $0x5c0] sm:$0xff]
    %v822 = vld [vmem:[#allocation6 + $0x5c8] sm:$0xff]
    %v823 = vld [vmem:[#allocation6 + $0x5d0] sm:$0xff]
    %v824 = vld [vmem:[#allocation6 + $0x5d8] sm:$0xff]
    %v825 = vld [vmem:[#allocation6 + $0x5e0] sm:$0xff]
    %v826 = vld [vmem:[#allocation6 + $0x5e8] sm:$0xff]
    %v827 = vld [vmem:[#allocation6 + $0x5f0] sm:$0xff]
    %v828 = vld [vmem:[#allocation6 + $0x5f8] sm:$0xff]
    %v829 = vld [vmem:[#allocation6 + $0x600] sm:$0xff]
    %v830 = vld [vmem:[#allocation6 + $0x608] sm:$0xff]
    %v831 = vld [vmem:[#allocation6 + $0x610] sm:$0xff]
    %v832 = vld [vmem:[#allocation6 + $0x618] sm:$0xff]
    %v833 = vld [vmem:[#allocation6 + $0x620] sm:$0xff]
    %v834 = vld [vmem:[#allocation6 + $0x628] sm:$0xff]
    %v835 = vld [vmem:[#allocation6 + $0x630] sm:$0xff]
    %v836 = vld [vmem:[#allocation6 + $0x638] sm:$0xff]
    %v837 = vld [vmem:[#allocation6 + $0x640] sm:$0xff]
    %v838 = vld [vmem:[#allocation6 + $0x648] sm:$0xff]
    %v839 = vld [vmem:[#allocation6 + $0x650] sm:$0xff]
    %v840 = vld [vmem:[#allocation6 + $0x658] sm:$0xff]
    %v841 = vld [vmem:[#allocation6 + $0x660] sm:$0xff]
    %v842 = vld [vmem:[#allocation6 + $0x668] sm:$0xff]
    %v843 = vld [vmem:[#allocation6 + $0x670] sm:$0xff]
    %v844 = vld [vmem:[#allocation6 + $0x678] sm:$0xff]
    %v845 = vld [vmem:[#allocation6 + $0x680] sm:$0xff]
    %v846 = vld [vmem:[#allocation6 + $0x688] sm:$0xff]
    %v847 = vld [vmem:[#allocation6 + $0x690] sm:$0xff]
    %v848 = vld [vmem:[#allocation6 + $0x698] sm:$0xff]
    %v849 = vld [vmem:[#allocation6 + $0x6a0] sm:$0xff]
    %v850 = vld [vmem:[#allocation6 + $0x6a8] sm:$0xff]
    %v851 = vld [vmem:[#allocation6 + $0x6b0] sm:$0xff]
    %v852 = vld [vmem:[#allocation6 + $0x6b8] sm:$0xff]
    %v853 = vld [vmem:[#allocation6 + $0x6c0] sm:$0xff]
    %v854 = vld [vmem:[#allocation6 + $0x6c8] sm:$0xff]
    %v855 = vld [vmem:[#allocation6 + $0x6d0] sm:$0xff]
    %v856 = vld [vmem:[#allocation6 + $0x6d8] sm:$0xff]
    %v857 = vld [vmem:[#allocation6 + $0x6e0] sm:$0xff]
    %v858 = vld [vmem:[#allocation6 + $0x6e8] sm:$0xff]
    %v859 = vld [vmem:[#allocation6 + $0x6f0] sm:$0xff]
    %v860 = vld [vmem:[#allocation6 + $0x6f8] sm:$0xff]
    %v861 = vld [vmem:[#allocation6 + $0x700] sm:$0xff]
    %v862 = vld [vmem:[#allocation6 + $0x708] sm:$0xff]
    %v863 = vld [vmem:[#allocation6 + $0x710] sm:$0xff]
    %v864 = vld [vmem:[#allocation6 + $0x718] sm:$0xff]
    %v865 = vld [vmem:[#allocation6 + $0x720] sm:$0xff]
    %v866 = vld [vmem:[#allocation6 + $0x728] sm:$0xff]
    %v867 = vld [vmem:[#allocation6 + $0x730] sm:$0xff]
    %v868 = vld [vmem:[#allocation6 + $0x738] sm:$0xff]
    %v869 = vld [vmem:[#allocation6 + $0x740] sm:$0xff]
    %v870 = vld [vmem:[#allocation6 + $0x748] sm:$0xff]
    %v871 = vld [vmem:[#allocation6 + $0x750] sm:$0xff]
    %v872 = vld [vmem:[#allocation6 + $0x758] sm:$0xff]
    %v873 = vld [vmem:[#allocation6 + $0x760] sm:$0xff]
    %v874 = vld [vmem:[#allocation6 + $0x768] sm:$0xff]
    %v875 = vld [vmem:[#allocation6 + $0x770] sm:$0xff]
    %v876 = vld [vmem:[#allocation6 + $0x778] sm:$0xff]
    %v877 = vld [vmem:[#allocation6 + $0x780] sm:$0xff]
    %v878 = vld [vmem:[#allocation6 + $0x788] sm:$0xff]
    %v879 = vld [vmem:[#allocation6 + $0x790] sm:$0xff]
    %v880 = vld [vmem:[#allocation6 + $0x798] sm:$0xff]
    %v881 = vld [vmem:[#allocation6 + $0x7a0] sm:$0xff]
    %v882 = vld [vmem:[#allocation6 + $0x7a8] sm:$0xff]
    %v883 = vld [vmem:[#allocation6 + $0x7b0] sm:$0xff]
    %v884 = vld [vmem:[#allocation6 + $0x7b8] sm:$0xff]
    %v885 = vld [vmem:[#allocation6 + $0x7c0] sm:$0xff]
    %v886 = vld [vmem:[#allocation6 + $0x7c8] sm:$0xff]
    %v887 = vld [vmem:[#allocation6 + $0x7d0] sm:$0xff]
    %v888 = vld [vmem:[#allocation6 + $0x7d8] sm:$0xff]
    %v889 = vld [vmem:[#allocation6 + $0x7e0] sm:$0xff]
    %v890 = vld [vmem:[#allocation6 + $0x7e8] sm:$0xff]
    %v891 = vld [vmem:[#allocation6 + $0x7f0] sm:$0xff]
    %v892 = vld [vmem:[#allocation6 + $0x7f8] sm:$0xff]
    %v893 = vld [vmem:[#allocation6 + $0x800] sm:$0xff]
    %v894 = vld [vmem:[#allocation6 + $0x808] sm:$0xff]
    %v895 = vld [vmem:[#allocation6 + $0x810] sm:$0xff]
    %v896 = vld [vmem:[#allocation6 + $0x818] sm:$0xff]
    %v897 = vld [vmem:[#allocation6 + $0x820] sm:$0xff]
    %v898 = vld [vmem:[#allocation6 + $0x828] sm:$0xff]
    %v899 = vld [vmem:[#allocation6 + $0x830] sm:$0xff]
    %v900 = vld [vmem:[#allocation6 + $0x838] sm:$0xff]
    %v901 = vld [vmem:[#allocation6 + $0x840] sm:$0xff]
    %v902 = vld [vmem:[#allocation6 + $0x848] sm:$0xff]
    %v903 = vld [vmem:[#allocation6 + $0x850] sm:$0xff]
    %v904 = vld [vmem:[#allocation6 + $0x858] sm:$0xff]
    %v905 = vld [vmem:[#allocation6 + $0x860] sm:$0xff]
    %v906 = vld [vmem:[#allocation6 + $0x868] sm:$0xff]
    %v907 = vld [vmem:[#allocation6 + $0x870] sm:$0xff]
    %v908 = vld [vmem:[#allocation6 + $0x878] sm:$0xff]
    %v909 = vld [vmem:[#allocation6 + $0x880] sm:$0xff]
    %v910 = vld [vmem:[#allocation6 + $0x888] sm:$0xff]
    %v911 = vld [vmem:[#allocation6 + $0x890] sm:$0xff]
    %v912 = vld [vmem:[#allocation6 + $0x898] sm:$0xff]
    %v913 = vld [vmem:[#allocation6 + $0x8a0] sm:$0xff]
    %v914 = vld [vmem:[#allocation6 + $0x8a8] sm:$0xff]
    %v915 = vld [vmem:[#allocation6 + $0x8b0] sm:$0xff]
    %v916 = vld [vmem:[#allocation6 + $0x8b8] sm:$0xff]
    %v917 = vld [vmem:[#allocation6 + $0x8c0] sm:$0xff]
    %v918 = vld [vmem:[#allocation6 + $0x8c8] sm:$0xff]
    %v919 = vld [vmem:[#allocation6 + $0x8d0] sm:$0xff]
    %v920 = vld [vmem:[#allocation6 + $0x8d8] sm:$0xff]
    %v921 = vld [vmem:[#allocation6 + $0x8e0] sm:$0xff]
    %v922 = vld [vmem:[#allocation6 + $0x8e8] sm:$0xff]
    %v923 = vld [vmem:[#allocation6 + $0x8f0] sm:$0xff]
    %v924 = vld [vmem:[#allocation6 + $0x8f8] sm:$0xff]
    %v925 = vld [vmem:[#allocation6 + $0x900] sm:$0xff]
    %v926 = vld [vmem:[#allocation6 + $0x908] sm:$0xff]
    %v927 = vld [vmem:[#allocation6 + $0x910] sm:$0xff]
    %v928 = vld [vmem:[#allocation6 + $0x918] sm:$0xff]
    %v929 = vld [vmem:[#allocation6 + $0x920] sm:$0xff]
    %v930 = vld [vmem:[#allocation6 + $0x928] sm:$0xff]
    %v931 = vld [vmem:[#allocation6 + $0x930] sm:$0xff]
    %v932 = vld [vmem:[#allocation6 + $0x938] sm:$0xff]
    %v933 = vld [vmem:[#allocation6 + $0x940] sm:$0xff]
    %v934 = vld [vmem:[#allocation6 + $0x948] sm:$0xff]
    %v935 = vld [vmem:[#allocation6 + $0x950] sm:$0xff]
    %v936 = vld [vmem:[#allocation6 + $0x958] sm:$0xff]
    %v937 = vld [vmem:[#allocation6 + $0x960] sm:$0xff]
    %v938 = vld [vmem:[#allocation6 + $0x968] sm:$0xff]
    %v939 = vld [vmem:[#allocation6 + $0x970] sm:$0xff]
    %v940 = vld [vmem:[#allocation6 + $0x978] sm:$0xff]
    %v941 = vld [vmem:[#allocation6 + $0x980] sm:$0xff]
    %v942 = vld [vmem:[#allocation6 + $0x988] sm:$0xff]
    %v943 = vld [vmem:[#allocation6 + $0x990] sm:$0xff]
    %v944 = vld [vmem:[#allocation6 + $0x998] sm:$0xff]
    %v945 = vld [vmem:[#allocation6 + $0x9a0] sm:$0xff]
    %v946 = vld [vmem:[#allocation6 + $0x9a8] sm:$0xff]
    %v947 = vld [vmem:[#allocation6 + $0x9b0] sm:$0xff]
    %v948 = vld [vmem:[#allocation6 + $0x9b8] sm:$0xff]
    %v949 = vld [vmem:[#allocation6 + $0x9c0] sm:$0xff]
    %v950 = vld [vmem:[#allocation6 + $0x9c8] sm:$0xff]
    %v951 = vld [vmem:[#allocation6 + $0x9d0] sm:$0xff]
    %v952 = vld [vmem:[#allocation6 + $0x9d8] sm:$0xff]
    %v953 = vld [vmem:[#allocation6 + $0x9e0] sm:$0xff]
    %v954 = vld [vmem:[#allocation6 + $0x9e8] sm:$0xff]
    %v955 = vld [vmem:[#allocation6 + $0x9f0] sm:$0xff]
    %v956 = vld [vmem:[#allocation6 + $0x9f8] sm:$0xff]
    %v957 = vld [vmem:[#allocation6 + $0xa00] sm:$0xff]
    %v958 = vld [vmem:[#allocation6 + $0xa08] sm:$0xff]
    %v959 = vld [vmem:[#allocation6 + $0xa10] sm:$0xff]
    %v960 = vld [vmem:[#allocation6 + $0xa18] sm:$0xff]
    %v961 = vld [vmem:[#allocation6 + $0xa20] sm:$0xff]
    %v962 = vld [vmem:[#allocation6 + $0xa28] sm:$0xff]
    %v963 = vld [vmem:[#allocation6 + $0xa30] sm:$0xff]
    %v964 = vld [vmem:[#allocation6 + $0xa38] sm:$0xff]
    %v965 = vld [vmem:[#allocation6 + $0xa40] sm:$0xff]
    %v966 = vld [vmem:[#allocation6 + $0xa48] sm:$0xff]
    %v967 = vld [vmem:[#allocation6 + $0xa50] sm:$0xff]
    %v968 = vld [vmem:[#allocation6 + $0xa58] sm:$0xff]
    %v969 = vld [vmem:[#allocation6 + $0xa60] sm:$0xff]
    %v970 = vld [vmem:[#allocation6 + $0xa68] sm:$0xff]
    %v971 = vld [vmem:[#allocation6 + $0xa70] sm:$0xff]
    %v972 = vld [vmem:[#allocation6 + $0xa78] sm:$0xff]
    %v973 = vld [vmem:[#allocation6 + $0xa80] sm:$0xff]
    %v974 = vld [vmem:[#allocation6 + $0xa88] sm:$0xff]
    %v975 = vld [vmem:[#allocation6 + $0xa90] sm:$0xff]
    %v976 = vld [vmem:[#allocation6 + $0xa98] sm:$0xff]
    %v977 = vld [vmem:[#allocation6 + $0xaa0] sm:$0xff]
    %v978 = vld [vmem:[#allocation6 + $0xaa8] sm:$0xff]
    %v979 = vld [vmem:[#allocation6 + $0xab0] sm:$0xff]
    %v980 = vld [vmem:[#allocation6 + $0xab8] sm:$0xff]
    %v981 = vld [vmem:[#allocation6 + $0xac0] sm:$0xff]
    %v982 = vld [vmem:[#allocation6 + $0xac8] sm:$0xff]
    %v983 = vld [vmem:[#allocation6 + $0xad0] sm:$0xff]
    %v984 = vld [vmem:[#allocation6 + $0xad8] sm:$0xff]
    %v985 = vld [vmem:[#allocation6 + $0xae0] sm:$0xff]
    %v986 = vld [vmem:[#allocation6 + $0xae8] sm:$0xff]
    %v987 = vld [vmem:[#allocation6 + $0xaf0] sm:$0xff]
    %v988 = vld [vmem:[#allocation6 + $0xaf8] sm:$0xff]
    %v989 = vld [vmem:[#allocation6 + $0xb00] sm:$0xff]
    %v990 = vld [vmem:[#allocation6 + $0xb08] sm:$0xff]
    %v991 = vld [vmem:[#allocation6 + $0xb10] sm:$0xff]
    %v992 = vld [vmem:[#allocation6 + $0xb18] sm:$0xff]
    %v993 = vld [vmem:[#allocation6 + $0xb20] sm:$0xff]
    %v994 = vld [vmem:[#allocation6 + $0xb28] sm:$0xff]
    %v995 = vld [vmem:[#allocation6 + $0xb30] sm:$0xff]
    %v996 = vld [vmem:[#allocation6 + $0xb38] sm:$0xff]
    %v997 = vld [vmem:[#allocation6 + $0xb40] sm:$0xff]
    %v998 = vld [vmem:[#allocation6 + $0xb48] sm:$0xff]
    %v999 = vld [vmem:[#allocation6 + $0xb50] sm:$0xff]
    %v1000 = vld [vmem:[#allocation6 + $0xb58] sm:$0xff]
    %v1001 = vld [vmem:[#allocation6 + $0xb60] sm:$0xff]
    %v1002 = vld [vmem:[#allocation6 + $0xb68] sm:$0xff]
    %v1003 = vld [vmem:[#allocation6 + $0xb70] sm:$0xff]
    %v1004 = vld [vmem:[#allocation6 + $0xb78] sm:$0xff]
    %v1005 = vld [vmem:[#allocation6 + $0xb80] sm:$0xff]
    %v1006 = vld [vmem:[#allocation6 + $0xb88] sm:$0xff]
    %v1007 = vld [vmem:[#allocation6 + $0xb90] sm:$0xff]
    %v1008 = vld [vmem:[#allocation6 + $0xb98] sm:$0xff]
    %v1009 = vld [vmem:[#allocation6 + $0xba0] sm:$0xff]
    %v1010 = vld [vmem:[#allocation6 + $0xba8] sm:$0xff]
    %v1011 = vld [vmem:[#allocation6 + $0xbb0] sm:$0xff]
    %v1012 = vld [vmem:[#allocation6 + $0xbb8] sm:$0xff]
    %v1013 = vld [vmem:[#allocation6 + $0xbc0] sm:$0xff]
    %v1014 = vld [vmem:[#allocation6 + $0xbc8] sm:$0xff]
    %v1015 = vld [vmem:[#allocation6 + $0xbd0] sm:$0xff]
    %v1016 = vld [vmem:[#allocation6 + $0xbd8] sm:$0xff]
    %v1017 = vld [vmem:[#allocation6 + $0xbe0] sm:$0xff]
    %v1018 = vld [vmem:[#allocation6 + $0xbe8] sm:$0xff]
    %v1019 = vld [vmem:[#allocation6 + $0xbf0] sm:$0xff]
    %v1020 = vld [vmem:[#allocation6 + $0xbf8] sm:$0xff]
    %v1021 = vld [vmem:[#allocation6 + $0xc00] sm:$0xff]
    %v1022 = vld [vmem:[#allocation6 + $0xc08] sm:$0xff]
    %v1023 = vld [vmem:[#allocation6 + $0xc10] sm:$0xff]
    %v1024 = vld [vmem:[#allocation6 + $0xc18] sm:$0xff]
    %v1025 = vld [vmem:[#allocation6 + $0xc20] sm:$0xff]
    %v1026 = vld [vmem:[#allocation6 + $0xc28] sm:$0xff]
    %v1027 = vld [vmem:[#allocation6 + $0xc30] sm:$0xff]
    %v1028 = vld [vmem:[#allocation6 + $0xc38] sm:$0xff]
    %v1029 = vld [vmem:[#allocation6 + $0xc40] sm:$0xff]
    %v1030 = vld [vmem:[#allocation6 + $0xc48] sm:$0xff]
    %v1031 = vld [vmem:[#allocation6 + $0xc50] sm:$0xff]
    %v1032 = vld [vmem:[#allocation6 + $0xc58] sm:$0xff]
    %v1033 = vld [vmem:[#allocation6 + $0xc60] sm:$0xff]
    %v1034 = vld [vmem:[#allocation6 + $0xc68] sm:$0xff]
    %v1035 = vld [vmem:[#allocation6 + $0xc70] sm:$0xff]
    %v1036 = vld [vmem:[#allocation6 + $0xc78] sm:$0xff]
    %v1037 = vld [vmem:[#allocation6 + $0xc80] sm:$0xff]
    %v1038 = vld [vmem:[#allocation6 + $0xc88] sm:$0xff]
    %v1039 = vld [vmem:[#allocation6 + $0xc90] sm:$0xff]
    %v1040 = vld [vmem:[#allocation6 + $0xc98] sm:$0xff]
    %v1041 = vld [vmem:[#allocation6 + $0xca0] sm:$0xff]
    %v1042 = vld [vmem:[#allocation6 + $0xca8] sm:$0xff]
    %v1043 = vld [vmem:[#allocation6 + $0xcb0] sm:$0xff]
    %v1044 = vld [vmem:[#allocation6 + $0xcb8] sm:$0xff]
    %v1045 = vld [vmem:[#allocation6 + $0xcc0] sm:$0xff]
    %v1046 = vld [vmem:[#allocation6 + $0xcc8] sm:$0xff]
    %v1047 = vld [vmem:[#allocation6 + $0xcd0] sm:$0xff]
    %v1048 = vld [vmem:[#allocation6 + $0xcd8] sm:$0xff]
    %v1049 = vld [vmem:[#allocation6 + $0xce0] sm:$0xff]
    %v1050 = vld [vmem:[#allocation6 + $0xce8] sm:$0xff]
    %v1051 = vld [vmem:[#allocation6 + $0xcf0] sm:$0xff]
    %v1052 = vld [vmem:[#allocation6 + $0xcf8] sm:$0xff]
    %v1053 = vld [vmem:[#allocation6 + $0xd00] sm:$0xff]
    %v1054 = vld [vmem:[#allocation6 + $0xd08] sm:$0xff]
    %v1055 = vld [vmem:[#allocation6 + $0xd10] sm:$0xff]
    %v1056 = vld [vmem:[#allocation6 + $0xd18] sm:$0xff]
    %v1057 = vld [vmem:[#allocation6 + $0xd20] sm:$0xff]
    %v1058 = vld [vmem:[#allocation6 + $0xd28] sm:$0xff]
    %v1059 = vld [vmem:[#allocation6 + $0xd30] sm:$0xff]
    %v1060 = vld [vmem:[#allocation6 + $0xd38] sm:$0xff]
    %v1061 = vld [vmem:[#allocation6 + $0xd40] sm:$0xff]
    %v1062 = vld [vmem:[#allocation6 + $0xd48] sm:$0xff]
    %v1063 = vld [vmem:[#allocation6 + $0xd50] sm:$0xff]
    %v1064 = vld [vmem:[#allocation6 + $0xd58] sm:$0xff]
    %v1065 = vld [vmem:[#allocation6 + $0xd60] sm:$0xff]
    %v1066 = vld [vmem:[#allocation6 + $0xd68] sm:$0xff]
    %v1067 = vld [vmem:[#allocation6 + $0xd70] sm:$0xff]
    %v1068 = vld [vmem:[#allocation6 + $0xd78] sm:$0xff]
    %v1069 = vld [vmem:[#allocation6 + $0xd80] sm:$0xff]
    %v1070 = vld [vmem:[#allocation6 + $0xd88] sm:$0xff]
    %v1071 = vld [vmem:[#allocation6 + $0xd90] sm:$0xff]
    %v1072 = vld [vmem:[#allocation6 + $0xd98] sm:$0xff]
    %v1073 = vld [vmem:[#allocation6 + $0xda0] sm:$0xff]
    %v1074 = vld [vmem:[#allocation6 + $0xda8] sm:$0xff]
    %v1075 = vld [vmem:[#allocation6 + $0xdb0] sm:$0xff]
    %v1076 = vld [vmem:[#allocation6 + $0xdb8] sm:$0xff]
    %v1077 = vld [vmem:[#allocation6 + $0xdc0] sm:$0xff]
    %v1078 = vld [vmem:[#allocation6 + $0xdc8] sm:$0xff]
    %v1079 = vld [vmem:[#allocation6 + $0xdd0] sm:$0xff]
    %v1080 = vld [vmem:[#allocation6 + $0xdd8] sm:$0xff]
    %v1081 = vld [vmem:[#allocation6 + $0xde0] sm:$0xff]
    %v1082 = vld [vmem:[#allocation6 + $0xde8] sm:$0xff]
    %v1083 = vld [vmem:[#allocation6 + $0xdf0] sm:$0xff]
    %v1084 = vld [vmem:[#allocation6 + $0xdf8] sm:$0xff]
    %v1085 = vld [vmem:[#allocation6 + $0xe00] sm:$0xff]
    %v1086 = vld [vmem:[#allocation6 + $0xe08] sm:$0xff]
    %v1087 = vld [vmem:[#allocation6 + $0xe10] sm:$0xff]
    %v1088 = vld [vmem:[#allocation6 + $0xe18] sm:$0xff]
    %v1089 = vld [vmem:[#allocation6 + $0xe20] sm:$0xff]
    %v1090 = vld [vmem:[#allocation6 + $0xe28] sm:$0xff]
    %v1091 = vld [vmem:[#allocation6 + $0xe30] sm:$0xff]
    %v1092 = vld [vmem:[#allocation6 + $0xe38] sm:$0xff]
    %v1093 = vld [vmem:[#allocation6 + $0xe40] sm:$0xff]
    %v1094 = vld [vmem:[#allocation6 + $0xe48] sm:$0xff]
    %v1095 = vld [vmem:[#allocation6 + $0xe50] sm:$0xff]
    %v1096 = vld [vmem:[#allocation6 + $0xe58] sm:$0xff]
    %v1097 = vld [vmem:[#allocation6 + $0xe60] sm:$0xff]
    %v1098 = vld [vmem:[#allocation6 + $0xe68] sm:$0xff]
    %v1099 = vld [vmem:[#allocation6 + $0xe70] sm:$0xff]
    %v1100 = vld [vmem:[#allocation6 + $0xe78] sm:$0xff]
    %v1101 = vld [vmem:[#allocation6 + $0xe80] sm:$0xff]
    %v1102 = vld [vmem:[#allocation6 + $0xe88] sm:$0xff]
    %v1103 = vld [vmem:[#allocation6 + $0xe90] sm:$0xff]
    %v1104 = vld [vmem:[#allocation6 + $0xe98] sm:$0xff]
    %v1105 = vld [vmem:[#allocation6 + $0xea0] sm:$0xff]
    %v1106 = vld [vmem:[#allocation6 + $0xea8] sm:$0xff]
    %v1107 = vld [vmem:[#allocation6 + $0xeb0] sm:$0xff]
    %v1108 = vld [vmem:[#allocation6 + $0xeb8] sm:$0xff]
    %v1109 = vld [vmem:[#allocation6 + $0xec0] sm:$0xff]
    %v1110 = vld [vmem:[#allocation6 + $0xec8] sm:$0xff]
    %v1111 = vld [vmem:[#allocation6 + $0xed0] sm:$0xff]
    %v1112 = vld [vmem:[#allocation6 + $0xed8] sm:$0xff]
    %v1113 = vld [vmem:[#allocation6 + $0xee0] sm:$0xff]
    %v1114 = vld [vmem:[#allocation6 + $0xee8] sm:$0xff]
    %v1115 = vld [vmem:[#allocation6 + $0xef0] sm:$0xff]
    %v1116 = vld [vmem:[#allocation6 + $0xef8] sm:$0xff]
    %v1117 = vld [vmem:[#allocation6 + $0xf00] sm:$0xff]
    %v1118 = vld [vmem:[#allocation6 + $0xf08] sm:$0xff]
    %v1119 = vld [vmem:[#allocation6 + $0xf10] sm:$0xff]
    %v1120 = vld [vmem:[#allocation6 + $0xf18] sm:$0xff]
    %v1121 = vld [vmem:[#allocation6 + $0xf20] sm:$0xff]
    %v1122 = vld [vmem:[#allocation6 + $0xf28] sm:$0xff]
    %v1123 = vld [vmem:[#allocation6 + $0xf30] sm:$0xff]
    %v1124 = vld [vmem:[#allocation6 + $0xf38] sm:$0xff]
    %v1125 = vld [vmem:[#allocation6 + $0xf40] sm:$0xff]
    %v1126 = vld [vmem:[#allocation6 + $0xf48] sm:$0xff]
    %v1127 = vld [vmem:[#allocation6 + $0xf50] sm:$0xff]
    %v1128 = vld [vmem:[#allocation6 + $0xf58] sm:$0xff]
    %v1129 = vld [vmem:[#allocation6 + $0xf60] sm:$0xff]
    %v1130 = vld [vmem:[#allocation6 + $0xf68] sm:$0xff]
    %v1131 = vld [vmem:[#allocation6 + $0xf70] sm:$0xff]
    %v1132 = vld [vmem:[#allocation6 + $0xf78] sm:$0xff]
    %v1133 = vld [vmem:[#allocation6 + $0xf80] sm:$0xff]
    %v1134 = vld [vmem:[#allocation6 + $0xf88] sm:$0xff]
    %v1135 = vld [vmem:[#allocation6 + $0xf90] sm:$0xff]
    %v1136 = vld [vmem:[#allocation6 + $0xf98] sm:$0xff]
    %v1137 = vld [vmem:[#allocation6 + $0xfa0] sm:$0xff]
    %v1138 = vld [vmem:[#allocation6 + $0xfa8] sm:$0xff]
    %v1139 = vld [vmem:[#allocation6 + $0xfb0] sm:$0xff]
    %v1140 = vld [vmem:[#allocation6 + $0xfb8] sm:$0xff]
    %v1141 = vld [vmem:[#allocation6 + $0xfc0] sm:$0xff]
    %v1142 = vld [vmem:[#allocation6 + $0xfc8] sm:$0xff]
    %v1143 = vld [vmem:[#allocation6 + $0xfd0] sm:$0xff]
    %v1144 = vld [vmem:[#allocation6 + $0xfd8] sm:$0xff]
    %v1145 = vld [vmem:[#allocation6 + $0xfe0] sm:$0xff]
    %v1146 = vld [vmem:[#allocation6 + $0xfe8] sm:$0xff]
    %v1147 = vld [vmem:[#allocation6 + $0xff0] sm:$0xff]
    %v1148 = vld [vmem:[#allocation6 + $0xff8] sm:$0xff]
    %v1149 = vld [vmem:[#allocation7] sm:$0xff]
    %v1151 = vperm.slane %v1149, 0
    %v1152 = vperm.slane %v1149, 1
    %v1153 = vperm.slane %v1149, 2
    %v1154 = vperm.slane %v1149, 3
    %v1155 = vperm.slane %v1149, 4
    %v1156 = vperm.slane %v1149, 5
    %v1157 = vperm.slane %v1149, 6
    %v1158 = vperm.slane %v1149, 7
    %v1679 = vunpack.c.l.b16 %v637
    %v1680 = vunpack.c.h.b16 %v637
    %v1681 = vunpack.c.l.b16 %v638
    %v1682 = vunpack.c.h.b16 %v638
    %v1683 = vunpack.c.l.b16 %v639
    %v1684 = vunpack.c.h.b16 %v639
    %v1685 = vunpack.c.l.b16 %v640
    %v1686 = vunpack.c.h.b16 %v640
    %v1687 = vunpack.c.l.b16 %v641
    %v1688 = vunpack.c.h.b16 %v641
    %v1689 = vunpack.c.l.b16 %v642
    %v1690 = vunpack.c.h.b16 %v642
    %v1691 = vunpack.c.l.b16 %v643
    %v1692 = vunpack.c.h.b16 %v643
    %v1693 = vunpack.c.l.b16 %v644
    %v1694 = vunpack.c.h.b16 %v644
    %v1695 = vunpack.c.l.b16 %v645
    %v1696 = vunpack.c.h.b16 %v645
    %v1697 = vunpack.c.l.b16 %v646
    %v1698 = vunpack.c.h.b16 %v646
    %v1699 = vunpack.c.l.b16 %v647
    %v1700 = vunpack.c.h.b16 %v647
    %v1701 = vunpack.c.l.b16 %v648
    %v1702 = vunpack.c.h.b16 %v648
    %v1703 = vunpack.c.l.b16 %v649
    %v1704 = vunpack.c.h.b16 %v649
    %v1705 = vunpack.c.l.b16 %v650
    %v1706 = vunpack.c.h.b16 %v650
    %v1707 = vunpack.c.l.b16 %v651
    %v1708 = vunpack.c.h.b16 %v651
    %v1709 = vunpack.c.l.b16 %v652
    %v1710 = vunpack.c.h.b16 %v652
    %v1711 = vunpack.c.l.b16 %v653
    %v1712 = vunpack.c.h.b16 %v653
    %v1713 = vunpack.c.l.b16 %v654
    %v1714 = vunpack.c.h.b16 %v654
    %v1715 = vunpack.c.l.b16 %v655
    %v1716 = vunpack.c.h.b16 %v655
    %v1717 = vunpack.c.l.b16 %v656
    %v1718 = vunpack.c.h.b16 %v656
    %v1719 = vunpack.c.l.b16 %v657
    %v1720 = vunpack.c.h.b16 %v657
    %v1721 = vunpack.c.l.b16 %v658
    %v1722 = vunpack.c.h.b16 %v658
    %v1723 = vunpack.c.l.b16 %v659
    %v1724 = vunpack.c.h.b16 %v659
    %v1725 = vunpack.c.l.b16 %v660
    %v1726 = vunpack.c.h.b16 %v660
    %v1727 = vunpack.c.l.b16 %v661
    %v1728 = vunpack.c.h.b16 %v661
    %v1729 = vunpack.c.l.b16 %v662
    %v1730 = vunpack.c.h.b16 %v662
    %v1731 = vunpack.c.l.b16 %v663
    %v1732 = vunpack.c.h.b16 %v663
    %v1733 = vunpack.c.l.b16 %v664
    %v1734 = vunpack.c.h.b16 %v664
    %v1735 = vunpack.c.l.b16 %v665
    %v1736 = vunpack.c.h.b16 %v665
    %v1737 = vunpack.c.l.b16 %v666
    %v1738 = vunpack.c.h.b16 %v666
    %v1739 = vunpack.c.l.b16 %v667
    %v1740 = vunpack.c.h.b16 %v667
    %v1741 = vunpack.c.l.b16 %v668
    %v1742 = vunpack.c.h.b16 %v668
    %v1743 = vunpack.c.l.b16 %v669
    %v1744 = vunpack.c.h.b16 %v669
    %v1745 = vunpack.c.l.b16 %v670
    %v1746 = vunpack.c.h.b16 %v670
    %v1747 = vunpack.c.l.b16 %v671
    %v1748 = vunpack.c.h.b16 %v671
    %v1749 = vunpack.c.l.b16 %v672
    %v1750 = vunpack.c.h.b16 %v672
    %v1751 = vunpack.c.l.b16 %v673
    %v1752 = vunpack.c.h.b16 %v673
    %v1753 = vunpack.c.l.b16 %v674
    %v1754 = vunpack.c.h.b16 %v674
    %v1755 = vunpack.c.l.b16 %v675
    %v1756 = vunpack.c.h.b16 %v675
    %v1757 = vunpack.c.l.b16 %v676
    %v1758 = vunpack.c.h.b16 %v676
    %v1759 = vunpack.c.l.b16 %v677
    %v1760 = vunpack.c.h.b16 %v677
    %v1761 = vunpack.c.l.b16 %v678
    %v1762 = vunpack.c.h.b16 %v678
    %v1763 = vunpack.c.l.b16 %v679
    %v1764 = vunpack.c.h.b16 %v679
    %v1765 = vunpack.c.l.b16 %v680
    %v1766 = vunpack.c.h.b16 %v680
    %v1767 = vunpack.c.l.b16 %v681
    %v1768 = vunpack.c.h.b16 %v681
    %v1769 = vunpack.c.l.b16 %v682
    %v1770 = vunpack.c.h.b16 %v682
    %v1771 = vunpack.c.l.b16 %v683
    %v1772 = vunpack.c.h.b16 %v683
    %v1773 = vunpack.c.l.b16 %v684
    %v1774 = vunpack.c.h.b16 %v684
    %v1775 = vunpack.c.l.b16 %v685
    %v1776 = vunpack.c.h.b16 %v685
    %v1777 = vunpack.c.l.b16 %v686
    %v1778 = vunpack.c.h.b16 %v686
    %v1779 = vunpack.c.l.b16 %v687
    %v1780 = vunpack.c.h.b16 %v687
    %v1781 = vunpack.c.l.b16 %v688
    %v1782 = vunpack.c.h.b16 %v688
    %v1783 = vunpack.c.l.b16 %v689
    %v1784 = vunpack.c.h.b16 %v689
    %v1785 = vunpack.c.l.b16 %v690
    %v1786 = vunpack.c.h.b16 %v690
    %v1787 = vunpack.c.l.b16 %v691
    %v1788 = vunpack.c.h.b16 %v691
    %v1789 = vunpack.c.l.b16 %v692
    %v1790 = vunpack.c.h.b16 %v692
    %v1791 = vunpack.c.l.b16 %v693
    %v1792 = vunpack.c.h.b16 %v693
    %v1793 = vunpack.c.l.b16 %v694
    %v1794 = vunpack.c.h.b16 %v694
    %v1795 = vunpack.c.l.b16 %v695
    %v1796 = vunpack.c.h.b16 %v695
    %v1797 = vunpack.c.l.b16 %v696
    %v1798 = vunpack.c.h.b16 %v696
    %v1799 = vunpack.c.l.b16 %v697
    %v1800 = vunpack.c.h.b16 %v697
    %v1801 = vunpack.c.l.b16 %v698
    %v1802 = vunpack.c.h.b16 %v698
    %v1803 = vunpack.c.l.b16 %v699
    %v1804 = vunpack.c.h.b16 %v699
    %v1805 = vunpack.c.l.b16 %v700
    %v1806 = vunpack.c.h.b16 %v700
    %v1807 = vunpack.c.l.b16 %v701
    %v1808 = vunpack.c.h.b16 %v701
    %v1809 = vunpack.c.l.b16 %v702
    %v1810 = vunpack.c.h.b16 %v702
    %v1811 = vunpack.c.l.b16 %v703
    %v1812 = vunpack.c.h.b16 %v703
    %v1813 = vunpack.c.l.b16 %v704
    %v1814 = vunpack.c.h.b16 %v704
    %v1815 = vunpack.c.l.b16 %v705
    %v1816 = vunpack.c.h.b16 %v705
    %v1817 = vunpack.c.l.b16 %v706
    %v1818 = vunpack.c.h.b16 %v706
    %v1819 = vunpack.c.l.b16 %v707
    %v1820 = vunpack.c.h.b16 %v707
    %v1821 = vunpack.c.l.b16 %v708
    %v1822 = vunpack.c.h.b16 %v708
    %v1823 = vunpack.c.l.b16 %v709
    %v1824 = vunpack.c.h.b16 %v709
    %v1825 = vunpack.c.l.b16 %v710
    %v1826 = vunpack.c.h.b16 %v710
    %v1827 = vunpack.c.l.b16 %v711
    %v1828 = vunpack.c.h.b16 %v711
    %v1829 = vunpack.c.l.b16 %v712
    %v1830 = vunpack.c.h.b16 %v712
    %v1831 = vunpack.c.l.b16 %v713
    %v1832 = vunpack.c.h.b16 %v713
    %v1833 = vunpack.c.l.b16 %v714
    %v1834 = vunpack.c.h.b16 %v714
    %v1835 = vunpack.c.l.b16 %v715
    %v1836 = vunpack.c.h.b16 %v715
    %v1837 = vunpack.c.l.b16 %v716
    %v1838 = vunpack.c.h.b16 %v716
    %v1839 = vunpack.c.l.b16 %v717
    %v1840 = vunpack.c.h.b16 %v717
    %v1841 = vunpack.c.l.b16 %v718
    %v1842 = vunpack.c.h.b16 %v718
    %v1843 = vunpack.c.l.b16 %v719
    %v1844 = vunpack.c.h.b16 %v719
    %v1845 = vunpack.c.l.b16 %v720
    %v1846 = vunpack.c.h.b16 %v720
    %v1847 = vunpack.c.l.b16 %v721
    %v1848 = vunpack.c.h.b16 %v721
    %v1849 = vunpack.c.l.b16 %v722
    %v1850 = vunpack.c.h.b16 %v722
    %v1851 = vunpack.c.l.b16 %v723
    %v1852 = vunpack.c.h.b16 %v723
    %v1853 = vunpack.c.l.b16 %v724
    %v1854 = vunpack.c.h.b16 %v724
    %v1855 = vunpack.c.l.b16 %v725
    %v1856 = vunpack.c.h.b16 %v725
    %v1857 = vunpack.c.l.b16 %v726
    %v1858 = vunpack.c.h.b16 %v726
    %v1859 = vunpack.c.l.b16 %v727
    %v1860 = vunpack.c.h.b16 %v727
    %v1861 = vunpack.c.l.b16 %v728
    %v1862 = vunpack.c.h.b16 %v728
    %v1863 = vunpack.c.l.b16 %v729
    %v1864 = vunpack.c.h.b16 %v729
    %v1865 = vunpack.c.l.b16 %v730
    %v1866 = vunpack.c.h.b16 %v730
    %v1867 = vunpack.c.l.b16 %v731
    %v1868 = vunpack.c.h.b16 %v731
    %v1869 = vunpack.c.l.b16 %v732
    %v1870 = vunpack.c.h.b16 %v732
    %v1871 = vunpack.c.l.b16 %v733
    %v1872 = vunpack.c.h.b16 %v733
    %v1873 = vunpack.c.l.b16 %v734
    %v1874 = vunpack.c.h.b16 %v734
    %v1875 = vunpack.c.l.b16 %v735
    %v1876 = vunpack.c.h.b16 %v735
    %v1877 = vunpack.c.l.b16 %v736
    %v1878 = vunpack.c.h.b16 %v736
    %v1879 = vunpack.c.l.b16 %v737
    %v1880 = vunpack.c.h.b16 %v737
    %v1881 = vunpack.c.l.b16 %v738
    %v1882 = vunpack.c.h.b16 %v738
    %v1883 = vunpack.c.l.b16 %v739
    %v1884 = vunpack.c.h.b16 %v739
    %v1885 = vunpack.c.l.b16 %v740
    %v1886 = vunpack.c.h.b16 %v740
    %v1887 = vunpack.c.l.b16 %v741
    %v1888 = vunpack.c.h.b16 %v741
    %v1889 = vunpack.c.l.b16 %v742
    %v1890 = vunpack.c.h.b16 %v742
    %v1891 = vunpack.c.l.b16 %v743
    %v1892 = vunpack.c.h.b16 %v743
    %v1893 = vunpack.c.l.b16 %v744
    %v1894 = vunpack.c.h.b16 %v744
    %v1895 = vunpack.c.l.b16 %v745
    %v1896 = vunpack.c.h.b16 %v745
    %v1897 = vunpack.c.l.b16 %v746
    %v1898 = vunpack.c.h.b16 %v746
    %v1899 = vunpack.c.l.b16 %v747
    %v1900 = vunpack.c.h.b16 %v747
    %v1901 = vunpack.c.l.b16 %v748
    %v1902 = vunpack.c.h.b16 %v748
    %v1903 = vunpack.c.l.b16 %v749
    %v1904 = vunpack.c.h.b16 %v749
    %v1905 = vunpack.c.l.b16 %v750
    %v1906 = vunpack.c.h.b16 %v750
    %v1907 = vunpack.c.l.b16 %v751
    %v1908 = vunpack.c.h.b16 %v751
    %v1909 = vunpack.c.l.b16 %v752
    %v1910 = vunpack.c.h.b16 %v752
    %v1911 = vunpack.c.l.b16 %v753
    %v1912 = vunpack.c.h.b16 %v753
    %v1913 = vunpack.c.l.b16 %v754
    %v1914 = vunpack.c.h.b16 %v754
    %v1915 = vunpack.c.l.b16 %v755
    %v1916 = vunpack.c.h.b16 %v755
    %v1917 = vunpack.c.l.b16 %v756
    %v1918 = vunpack.c.h.b16 %v756
    %v1919 = vunpack.c.l.b16 %v757
    %v1920 = vunpack.c.h.b16 %v757
    %v1921 = vunpack.c.l.b16 %v758
    %v1922 = vunpack.c.h.b16 %v758
    %v1923 = vunpack.c.l.b16 %v759
    %v1924 = vunpack.c.h.b16 %v759
    %v1925 = vunpack.c.l.b16 %v760
    %v1926 = vunpack.c.h.b16 %v760
    %v1927 = vunpack.c.l.b16 %v761
    %v1928 = vunpack.c.h.b16 %v761
    %v1929 = vunpack.c.l.b16 %v762
    %v1930 = vunpack.c.h.b16 %v762
    %v1931 = vunpack.c.l.b16 %v763
    %v1932 = vunpack.c.h.b16 %v763
    %v1933 = vunpack.c.l.b16 %v764
    %v1934 = vunpack.c.h.b16 %v764
    %v1935 = vunpack.c.l.b16 %v765
    %v1936 = vunpack.c.h.b16 %v765
    %v1937 = vunpack.c.l.b16 %v766
    %v1938 = vunpack.c.h.b16 %v766
    %v1939 = vunpack.c.l.b16 %v767
    %v1940 = vunpack.c.h.b16 %v767
    %v1941 = vunpack.c.l.b16 %v768
    %v1942 = vunpack.c.h.b16 %v768
    %v1943 = vunpack.c.l.b16 %v769
    %v1944 = vunpack.c.h.b16 %v769
    %v1945 = vunpack.c.l.b16 %v770
    %v1946 = vunpack.c.h.b16 %v770
    %v1947 = vunpack.c.l.b16 %v771
    %v1948 = vunpack.c.h.b16 %v771
    %v1949 = vunpack.c.l.b16 %v772
    %v1950 = vunpack.c.h.b16 %v772
    %v1951 = vunpack.c.l.b16 %v773
    %v1952 = vunpack.c.h.b16 %v773
    %v1953 = vunpack.c.l.b16 %v774
    %v1954 = vunpack.c.h.b16 %v774
    %v1955 = vunpack.c.l.b16 %v775
    %v1956 = vunpack.c.h.b16 %v775
    %v1957 = vunpack.c.l.b16 %v776
    %v1958 = vunpack.c.h.b16 %v776
    %v1959 = vunpack.c.l.b16 %v777
    %v1960 = vunpack.c.h.b16 %v777
    %v1961 = vunpack.c.l.b16 %v778
    %v1962 = vunpack.c.h.b16 %v778
    %v1963 = vunpack.c.l.b16 %v779
    %v1964 = vunpack.c.h.b16 %v779
    %v1965 = vunpack.c.l.b16 %v780
    %v1966 = vunpack.c.h.b16 %v780
    %v1967 = vunpack.c.l.b16 %v781
    %v1968 = vunpack.c.h.b16 %v781
    %v1969 = vunpack.c.l.b16 %v782
    %v1970 = vunpack.c.h.b16 %v782
    %v1971 = vunpack.c.l.b16 %v783
    %v1972 = vunpack.c.h.b16 %v783
    %v1973 = vunpack.c.l.b16 %v784
    %v1974 = vunpack.c.h.b16 %v784
    %v1975 = vunpack.c.l.b16 %v785
    %v1976 = vunpack.c.h.b16 %v785
    %v1977 = vunpack.c.l.b16 %v786
    %v1978 = vunpack.c.h.b16 %v786
    %v1979 = vunpack.c.l.b16 %v787
    %v1980 = vunpack.c.h.b16 %v787
    %v1981 = vunpack.c.l.b16 %v788
    %v1982 = vunpack.c.h.b16 %v788
    %v1983 = vunpack.c.l.b16 %v789
    %v1984 = vunpack.c.h.b16 %v789
    %v1985 = vunpack.c.l.b16 %v790
    %v1986 = vunpack.c.h.b16 %v790
    %v1987 = vunpack.c.l.b16 %v791
    %v1988 = vunpack.c.h.b16 %v791
    %v1989 = vunpack.c.l.b16 %v792
    %v1990 = vunpack.c.h.b16 %v792
    %v1991 = vunpack.c.l.b16 %v793
    %v1992 = vunpack.c.h.b16 %v793
    %v1993 = vunpack.c.l.b16 %v794
    %v1994 = vunpack.c.h.b16 %v794
    %v1995 = vunpack.c.l.b16 %v795
    %v1996 = vunpack.c.h.b16 %v795
    %v1997 = vunpack.c.l.b16 %v796
    %v1998 = vunpack.c.h.b16 %v796
    %v1999 = vunpack.c.l.b16 %v797
    %v2000 = vunpack.c.h.b16 %v797
    %v2001 = vunpack.c.l.b16 %v798
    %v2002 = vunpack.c.h.b16 %v798
    %v2003 = vunpack.c.l.b16 %v799
    %v2004 = vunpack.c.h.b16 %v799
    %v2005 = vunpack.c.l.b16 %v800
    %v2006 = vunpack.c.h.b16 %v800
    %v2007 = vunpack.c.l.b16 %v801
    %v2008 = vunpack.c.h.b16 %v801
    %v2009 = vunpack.c.l.b16 %v802
    %v2010 = vunpack.c.h.b16 %v802
    %v2011 = vunpack.c.l.b16 %v803
    %v2012 = vunpack.c.h.b16 %v803
    %v2013 = vunpack.c.l.b16 %v804
    %v2014 = vunpack.c.h.b16 %v804
    %v2015 = vunpack.c.l.b16 %v805
    %v2016 = vunpack.c.h.b16 %v805
    %v2017 = vunpack.c.l.b16 %v806
    %v2018 = vunpack.c.h.b16 %v806
    %v2019 = vunpack.c.l.b16 %v807
    %v2020 = vunpack.c.h.b16 %v807
    %v2021 = vunpack.c.l.b16 %v808
    %v2022 = vunpack.c.h.b16 %v808
    %v2023 = vunpack.c.l.b16 %v809
    %v2024 = vunpack.c.h.b16 %v809
    %v2025 = vunpack.c.l.b16 %v810
    %v2026 = vunpack.c.h.b16 %v810
    %v2027 = vunpack.c.l.b16 %v811
    %v2028 = vunpack.c.h.b16 %v811
    %v2029 = vunpack.c.l.b16 %v812
    %v2030 = vunpack.c.h.b16 %v812
    %v2031 = vunpack.c.l.b16 %v813
    %v2032 = vunpack.c.h.b16 %v813
    %v2033 = vunpack.c.l.b16 %v814
    %v2034 = vunpack.c.h.b16 %v814
    %v2035 = vunpack.c.l.b16 %v815
    %v2036 = vunpack.c.h.b16 %v815
    %v2037 = vunpack.c.l.b16 %v816
    %v2038 = vunpack.c.h.b16 %v816
    %v2039 = vunpack.c.l.b16 %v817
    %v2040 = vunpack.c.h.b16 %v817
    %v2041 = vunpack.c.l.b16 %v818
    %v2042 = vunpack.c.h.b16 %v818
    %v2043 = vunpack.c.l.b16 %v819
    %v2044 = vunpack.c.h.b16 %v819
    %v2045 = vunpack.c.l.b16 %v820
    %v2046 = vunpack.c.h.b16 %v820
    %v2047 = vunpack.c.l.b16 %v821
    %v2048 = vunpack.c.h.b16 %v821
    %v2049 = vunpack.c.l.b16 %v822
    %v2050 = vunpack.c.h.b16 %v822
    %v2051 = vunpack.c.l.b16 %v823
    %v2052 = vunpack.c.h.b16 %v823
    %v2053 = vunpack.c.l.b16 %v824
    %v2054 = vunpack.c.h.b16 %v824
    %v2055 = vunpack.c.l.b16 %v825
    %v2056 = vunpack.c.h.b16 %v825
    %v2057 = vunpack.c.l.b16 %v826
    %v2058 = vunpack.c.h.b16 %v826
    %v2059 = vunpack.c.l.b16 %v827
    %v2060 = vunpack.c.h.b16 %v827
    %v2061 = vunpack.c.l.b16 %v828
    %v2062 = vunpack.c.h.b16 %v828
    %v2063 = vunpack.c.l.b16 %v829
    %v2064 = vunpack.c.h.b16 %v829
    %v2065 = vunpack.c.l.b16 %v830
    %v2066 = vunpack.c.h.b16 %v830
    %v2067 = vunpack.c.l.b16 %v831
    %v2068 = vunpack.c.h.b16 %v831
    %v2069 = vunpack.c.l.b16 %v832
    %v2070 = vunpack.c.h.b16 %v832
    %v2071 = vunpack.c.l.b16 %v833
    %v2072 = vunpack.c.h.b16 %v833
    %v2073 = vunpack.c.l.b16 %v834
    %v2074 = vunpack.c.h.b16 %v834
    %v2075 = vunpack.c.l.b16 %v835
    %v2076 = vunpack.c.h.b16 %v835
    %v2077 = vunpack.c.l.b16 %v836
    %v2078 = vunpack.c.h.b16 %v836
    %v2079 = vunpack.c.l.b16 %v837
    %v2080 = vunpack.c.h.b16 %v837
    %v2081 = vunpack.c.l.b16 %v838
    %v2082 = vunpack.c.h.b16 %v838
    %v2083 = vunpack.c.l.b16 %v839
    %v2084 = vunpack.c.h.b16 %v839
    %v2085 = vunpack.c.l.b16 %v840
    %v2086 = vunpack.c.h.b16 %v840
    %v2087 = vunpack.c.l.b16 %v841
    %v2088 = vunpack.c.h.b16 %v841
    %v2089 = vunpack.c.l.b16 %v842
    %v2090 = vunpack.c.h.b16 %v842
    %v2091 = vunpack.c.l.b16 %v843
    %v2092 = vunpack.c.h.b16 %v843
    %v2093 = vunpack.c.l.b16 %v844
    %v2094 = vunpack.c.h.b16 %v844
    %v2095 = vunpack.c.l.b16 %v845
    %v2096 = vunpack.c.h.b16 %v845
    %v2097 = vunpack.c.l.b16 %v846
    %v2098 = vunpack.c.h.b16 %v846
    %v2099 = vunpack.c.l.b16 %v847
    %v2100 = vunpack.c.h.b16 %v847
    %v2101 = vunpack.c.l.b16 %v848
    %v2102 = vunpack.c.h.b16 %v848
    %v2103 = vunpack.c.l.b16 %v849
    %v2104 = vunpack.c.h.b16 %v849
    %v2105 = vunpack.c.l.b16 %v850
    %v2106 = vunpack.c.h.b16 %v850
    %v2107 = vunpack.c.l.b16 %v851
    %v2108 = vunpack.c.h.b16 %v851
    %v2109 = vunpack.c.l.b16 %v852
    %v2110 = vunpack.c.h.b16 %v852
    %v2111 = vunpack.c.l.b16 %v853
    %v2112 = vunpack.c.h.b16 %v853
    %v2113 = vunpack.c.l.b16 %v854
    %v2114 = vunpack.c.h.b16 %v854
    %v2115 = vunpack.c.l.b16 %v855
    %v2116 = vunpack.c.h.b16 %v855
    %v2117 = vunpack.c.l.b16 %v856
    %v2118 = vunpack.c.h.b16 %v856
    %v2119 = vunpack.c.l.b16 %v857
    %v2120 = vunpack.c.h.b16 %v857
    %v2121 = vunpack.c.l.b16 %v858
    %v2122 = vunpack.c.h.b16 %v858
    %v2123 = vunpack.c.l.b16 %v859
    %v2124 = vunpack.c.h.b16 %v859
    %v2125 = vunpack.c.l.b16 %v860
    %v2126 = vunpack.c.h.b16 %v860
    %v2127 = vunpack.c.l.b16 %v861
    %v2128 = vunpack.c.h.b16 %v861
    %v2129 = vunpack.c.l.b16 %v862
    %v2130 = vunpack.c.h.b16 %v862
    %v2131 = vunpack.c.l.b16 %v863
    %v2132 = vunpack.c.h.b16 %v863
    %v2133 = vunpack.c.l.b16 %v864
    %v2134 = vunpack.c.h.b16 %v864
    %v2135 = vunpack.c.l.b16 %v865
    %v2136 = vunpack.c.h.b16 %v865
    %v2137 = vunpack.c.l.b16 %v866
    %v2138 = vunpack.c.h.b16 %v866
    %v2139 = vunpack.c.l.b16 %v867
    %v2140 = vunpack.c.h.b16 %v867
    %v2141 = vunpack.c.l.b16 %v868
    %v2142 = vunpack.c.h.b16 %v868
    %v2143 = vunpack.c.l.b16 %v869
    %v2144 = vunpack.c.h.b16 %v869
    %v2145 = vunpack.c.l.b16 %v870
    %v2146 = vunpack.c.h.b16 %v870
    %v2147 = vunpack.c.l.b16 %v871
    %v2148 = vunpack.c.h.b16 %v871
    %v2149 = vunpack.c.l.b16 %v872
    %v2150 = vunpack.c.h.b16 %v872
    %v2151 = vunpack.c.l.b16 %v873
    %v2152 = vunpack.c.h.b16 %v873
    %v2153 = vunpack.c.l.b16 %v874
    %v2154 = vunpack.c.h.b16 %v874
    %v2155 = vunpack.c.l.b16 %v875
    %v2156 = vunpack.c.h.b16 %v875
    %v2157 = vunpack.c.l.b16 %v876
    %v2158 = vunpack.c.h.b16 %v876
    %v2159 = vunpack.c.l.b16 %v877
    %v2160 = vunpack.c.h.b16 %v877
    %v2161 = vunpack.c.l.b16 %v878
    %v2162 = vunpack.c.h.b16 %v878
    %v2163 = vunpack.c.l.b16 %v879
    %v2164 = vunpack.c.h.b16 %v879
    %v2165 = vunpack.c.l.b16 %v880
    %v2166 = vunpack.c.h.b16 %v880
    %v2167 = vunpack.c.l.b16 %v881
    %v2168 = vunpack.c.h.b16 %v881
    %v2169 = vunpack.c.l.b16 %v882
    %v2170 = vunpack.c.h.b16 %v882
    %v2171 = vunpack.c.l.b16 %v883
    %v2172 = vunpack.c.h.b16 %v883
    %v2173 = vunpack.c.l.b16 %v884
    %v2174 = vunpack.c.h.b16 %v884
    %v2175 = vunpack.c.l.b16 %v885
    %v2176 = vunpack.c.h.b16 %v885
    %v2177 = vunpack.c.l.b16 %v886
    %v2178 = vunpack.c.h.b16 %v886
    %v2179 = vunpack.c.l.b16 %v887
    %v2180 = vunpack.c.h.b16 %v887
    %v2181 = vunpack.c.l.b16 %v888
    %v2182 = vunpack.c.h.b16 %v888
    %v2183 = vunpack.c.l.b16 %v889
    %v2184 = vunpack.c.h.b16 %v889
    %v2185 = vunpack.c.l.b16 %v890
    %v2186 = vunpack.c.h.b16 %v890
    %v2187 = vunpack.c.l.b16 %v891
    %v2188 = vunpack.c.h.b16 %v891
    %v2189 = vunpack.c.l.b16 %v892
    %v2190 = vunpack.c.h.b16 %v892
    %v2191 = vunpack.c.l.b16 %v893
    %v2192 = vunpack.c.h.b16 %v893
    %v2193 = vunpack.c.l.b16 %v894
    %v2194 = vunpack.c.h.b16 %v894
    %v2195 = vunpack.c.l.b16 %v895
    %v2196 = vunpack.c.h.b16 %v895
    %v2197 = vunpack.c.l.b16 %v896
    %v2198 = vunpack.c.h.b16 %v896
    %v2199 = vunpack.c.l.b16 %v897
    %v2200 = vunpack.c.h.b16 %v897
    %v2201 = vunpack.c.l.b16 %v898
    %v2202 = vunpack.c.h.b16 %v898
    %v2203 = vunpack.c.l.b16 %v899
    %v2204 = vunpack.c.h.b16 %v899
    %v2205 = vunpack.c.l.b16 %v900
    %v2206 = vunpack.c.h.b16 %v900
    %v2207 = vunpack.c.l.b16 %v901
    %v2208 = vunpack.c.h.b16 %v901
    %v2209 = vunpack.c.l.b16 %v902
    %v2210 = vunpack.c.h.b16 %v902
    %v2211 = vunpack.c.l.b16 %v903
    %v2212 = vunpack.c.h.b16 %v903
    %v2213 = vunpack.c.l.b16 %v904
    %v2214 = vunpack.c.h.b16 %v904
    %v2215 = vunpack.c.l.b16 %v905
    %v2216 = vunpack.c.h.b16 %v905
    %v2217 = vunpack.c.l.b16 %v906
    %v2218 = vunpack.c.h.b16 %v906
    %v2219 = vunpack.c.l.b16 %v907
    %v2220 = vunpack.c.h.b16 %v907
    %v2221 = vunpack.c.l.b16 %v908
    %v2222 = vunpack.c.h.b16 %v908
    %v2223 = vunpack.c.l.b16 %v909
    %v2224 = vunpack.c.h.b16 %v909
    %v2225 = vunpack.c.l.b16 %v910
    %v2226 = vunpack.c.h.b16 %v910
    %v2227 = vunpack.c.l.b16 %v911
    %v2228 = vunpack.c.h.b16 %v911
    %v2229 = vunpack.c.l.b16 %v912
    %v2230 = vunpack.c.h.b16 %v912
    %v2231 = vunpack.c.l.b16 %v913
    %v2232 = vunpack.c.h.b16 %v913
    %v2233 = vunpack.c.l.b16 %v914
    %v2234 = vunpack.c.h.b16 %v914
    %v2235 = vunpack.c.l.b16 %v915
    %v2236 = vunpack.c.h.b16 %v915
    %v2237 = vunpack.c.l.b16 %v916
    %v2238 = vunpack.c.h.b16 %v916
    %v2239 = vunpack.c.l.b16 %v917
    %v2240 = vunpack.c.h.b16 %v917
    %v2241 = vunpack.c.l.b16 %v918
    %v2242 = vunpack.c.h.b16 %v918
    %v2243 = vunpack.c.l.b16 %v919
    %v2244 = vunpack.c.h.b16 %v919
    %v2245 = vunpack.c.l.b16 %v920
    %v2246 = vunpack.c.h.b16 %v920
    %v2247 = vunpack.c.l.b16 %v921
    %v2248 = vunpack.c.h.b16 %v921
    %v2249 = vunpack.c.l.b16 %v922
    %v2250 = vunpack.c.h.b16 %v922
    %v2251 = vunpack.c.l.b16 %v923
    %v2252 = vunpack.c.h.b16 %v923
    %v2253 = vunpack.c.l.b16 %v924
    %v2254 = vunpack.c.h.b16 %v924
    %v2255 = vunpack.c.l.b16 %v925
    %v2256 = vunpack.c.h.b16 %v925
    %v2257 = vunpack.c.l.b16 %v926
    %v2258 = vunpack.c.h.b16 %v926
    %v2259 = vunpack.c.l.b16 %v927
    %v2260 = vunpack.c.h.b16 %v927
    %v2261 = vunpack.c.l.b16 %v928
    %v2262 = vunpack.c.h.b16 %v928
    %v2263 = vunpack.c.l.b16 %v929
    %v2264 = vunpack.c.h.b16 %v929
    %v2265 = vunpack.c.l.b16 %v930
    %v2266 = vunpack.c.h.b16 %v930
    %v2267 = vunpack.c.l.b16 %v931
    %v2268 = vunpack.c.h.b16 %v931
    %v2269 = vunpack.c.l.b16 %v932
    %v2270 = vunpack.c.h.b16 %v932
    %v2271 = vunpack.c.l.b16 %v933
    %v2272 = vunpack.c.h.b16 %v933
    %v2273 = vunpack.c.l.b16 %v934
    %v2274 = vunpack.c.h.b16 %v934
    %v2275 = vunpack.c.l.b16 %v935
    %v2276 = vunpack.c.h.b16 %v935
    %v2277 = vunpack.c.l.b16 %v936
    %v2278 = vunpack.c.h.b16 %v936
    %v2279 = vunpack.c.l.b16 %v937
    %v2280 = vunpack.c.h.b16 %v937
    %v2281 = vunpack.c.l.b16 %v938
    %v2282 = vunpack.c.h.b16 %v938
    %v2283 = vunpack.c.l.b16 %v939
    %v2284 = vunpack.c.h.b16 %v939
    %v2285 = vunpack.c.l.b16 %v940
    %v2286 = vunpack.c.h.b16 %v940
    %v2287 = vunpack.c.l.b16 %v941
    %v2288 = vunpack.c.h.b16 %v941
    %v2289 = vunpack.c.l.b16 %v942
    %v2290 = vunpack.c.h.b16 %v942
    %v2291 = vunpack.c.l.b16 %v943
    %v2292 = vunpack.c.h.b16 %v943
    %v2293 = vunpack.c.l.b16 %v944
    %v2294 = vunpack.c.h.b16 %v944
    %v2295 = vunpack.c.l.b16 %v945
    %v2296 = vunpack.c.h.b16 %v945
    %v2297 = vunpack.c.l.b16 %v946
    %v2298 = vunpack.c.h.b16 %v946
    %v2299 = vunpack.c.l.b16 %v947
    %v2300 = vunpack.c.h.b16 %v947
    %v2301 = vunpack.c.l.b16 %v948
    %v2302 = vunpack.c.h.b16 %v948
    %v2303 = vunpack.c.l.b16 %v949
    %v2304 = vunpack.c.h.b16 %v949
    %v2305 = vunpack.c.l.b16 %v950
    %v2306 = vunpack.c.h.b16 %v950
    %v2307 = vunpack.c.l.b16 %v951
    %v2308 = vunpack.c.h.b16 %v951
    %v2309 = vunpack.c.l.b16 %v952
    %v2310 = vunpack.c.h.b16 %v952
    %v2311 = vunpack.c.l.b16 %v953
    %v2312 = vunpack.c.h.b16 %v953
    %v2313 = vunpack.c.l.b16 %v954
    %v2314 = vunpack.c.h.b16 %v954
    %v2315 = vunpack.c.l.b16 %v955
    %v2316 = vunpack.c.h.b16 %v955
    %v2317 = vunpack.c.l.b16 %v956
    %v2318 = vunpack.c.h.b16 %v956
    %v2319 = vunpack.c.l.b16 %v957
    %v2320 = vunpack.c.h.b16 %v957
    %v2321 = vunpack.c.l.b16 %v958
    %v2322 = vunpack.c.h.b16 %v958
    %v2323 = vunpack.c.l.b16 %v959
    %v2324 = vunpack.c.h.b16 %v959
    %v2325 = vunpack.c.l.b16 %v960
    %v2326 = vunpack.c.h.b16 %v960
    %v2327 = vunpack.c.l.b16 %v961
    %v2328 = vunpack.c.h.b16 %v961
    %v2329 = vunpack.c.l.b16 %v962
    %v2330 = vunpack.c.h.b16 %v962
    %v2331 = vunpack.c.l.b16 %v963
    %v2332 = vunpack.c.h.b16 %v963
    %v2333 = vunpack.c.l.b16 %v964
    %v2334 = vunpack.c.h.b16 %v964
    %v2335 = vunpack.c.l.b16 %v965
    %v2336 = vunpack.c.h.b16 %v965
    %v2337 = vunpack.c.l.b16 %v966
    %v2338 = vunpack.c.h.b16 %v966
    %v2339 = vunpack.c.l.b16 %v967
    %v2340 = vunpack.c.h.b16 %v967
    %v2341 = vunpack.c.l.b16 %v968
    %v2342 = vunpack.c.h.b16 %v968
    %v2343 = vunpack.c.l.b16 %v969
    %v2344 = vunpack.c.h.b16 %v969
    %v2345 = vunpack.c.l.b16 %v970
    %v2346 = vunpack.c.h.b16 %v970
    %v2347 = vunpack.c.l.b16 %v971
    %v2348 = vunpack.c.h.b16 %v971
    %v2349 = vunpack.c.l.b16 %v972
    %v2350 = vunpack.c.h.b16 %v972
    %v2351 = vunpack.c.l.b16 %v973
    %v2352 = vunpack.c.h.b16 %v973
    %v2353 = vunpack.c.l.b16 %v974
    %v2354 = vunpack.c.h.b16 %v974
    %v2355 = vunpack.c.l.b16 %v975
    %v2356 = vunpack.c.h.b16 %v975
    %v2357 = vunpack.c.l.b16 %v976
    %v2358 = vunpack.c.h.b16 %v976
    %v2359 = vunpack.c.l.b16 %v977
    %v2360 = vunpack.c.h.b16 %v977
    %v2361 = vunpack.c.l.b16 %v978
    %v2362 = vunpack.c.h.b16 %v978
    %v2363 = vunpack.c.l.b16 %v979
    %v2364 = vunpack.c.h.b16 %v979
    %v2365 = vunpack.c.l.b16 %v980
    %v2366 = vunpack.c.h.b16 %v980
    %v2367 = vunpack.c.l.b16 %v981
    %v2368 = vunpack.c.h.b16 %v981
    %v2369 = vunpack.c.l.b16 %v982
    %v2370 = vunpack.c.h.b16 %v982
    %v2371 = vunpack.c.l.b16 %v983
    %v2372 = vunpack.c.h.b16 %v983
    %v2373 = vunpack.c.l.b16 %v984
    %v2374 = vunpack.c.h.b16 %v984
    %v2375 = vunpack.c.l.b16 %v985
    %v2376 = vunpack.c.h.b16 %v985
    %v2377 = vunpack.c.l.b16 %v986
    %v2378 = vunpack.c.h.b16 %v986
    %v2379 = vunpack.c.l.b16 %v987
    %v2380 = vunpack.c.h.b16 %v987
    %v2381 = vunpack.c.l.b16 %v988
    %v2382 = vunpack.c.h.b16 %v988
    %v2383 = vunpack.c.l.b16 %v989
    %v2384 = vunpack.c.h.b16 %v989
    %v2385 = vunpack.c.l.b16 %v990
    %v2386 = vunpack.c.h.b16 %v990
    %v2387 = vunpack.c.l.b16 %v991
    %v2388 = vunpack.c.h.b16 %v991
    %v2389 = vunpack.c.l.b16 %v992
    %v2390 = vunpack.c.h.b16 %v992
    %v2391 = vunpack.c.l.b16 %v993
    %v2392 = vunpack.c.h.b16 %v993
    %v2393 = vunpack.c.l.b16 %v994
    %v2394 = vunpack.c.h.b16 %v994
    %v2395 = vunpack.c.l.b16 %v995
    %v2396 = vunpack.c.h.b16 %v995
    %v2397 = vunpack.c.l.b16 %v996
    %v2398 = vunpack.c.h.b16 %v996
    %v2399 = vunpack.c.l.b16 %v997
    %v2400 = vunpack.c.h.b16 %v997
    %v2401 = vunpack.c.l.b16 %v998
    %v2402 = vunpack.c.h.b16 %v998
    %v2403 = vunpack.c.l.b16 %v999
    %v2404 = vunpack.c.h.b16 %v999
    %v2405 = vunpack.c.l.b16 %v1000
    %v2406 = vunpack.c.h.b16 %v1000
    %v2407 = vunpack.c.l.b16 %v1001
    %v2408 = vunpack.c.h.b16 %v1001
    %v2409 = vunpack.c.l.b16 %v1002
    %v2410 = vunpack.c.h.b16 %v1002
    %v2411 = vunpack.c.l.b16 %v1003
    %v2412 = vunpack.c.h.b16 %v1003
    %v2413 = vunpack.c.l.b16 %v1004
    %v2414 = vunpack.c.h.b16 %v1004
    %v2415 = vunpack.c.l.b16 %v1005
    %v2416 = vunpack.c.h.b16 %v1005
    %v2417 = vunpack.c.l.b16 %v1006
    %v2418 = vunpack.c.h.b16 %v1006
    %v2419 = vunpack.c.l.b16 %v1007
    %v2420 = vunpack.c.h.b16 %v1007
    %v2421 = vunpack.c.l.b16 %v1008
    %v2422 = vunpack.c.h.b16 %v1008
    %v2423 = vunpack.c.l.b16 %v1009
    %v2424 = vunpack.c.h.b16 %v1009
    %v2425 = vunpack.c.l.b16 %v1010
    %v2426 = vunpack.c.h.b16 %v1010
    %v2427 = vunpack.c.l.b16 %v1011
    %v2428 = vunpack.c.h.b16 %v1011
    %v2429 = vunpack.c.l.b16 %v1012
    %v2430 = vunpack.c.h.b16 %v1012
    %v2431 = vunpack.c.l.b16 %v1013
    %v2432 = vunpack.c.h.b16 %v1013
    %v2433 = vunpack.c.l.b16 %v1014
    %v2434 = vunpack.c.h.b16 %v1014
    %v2435 = vunpack.c.l.b16 %v1015
    %v2436 = vunpack.c.h.b16 %v1015
    %v2437 = vunpack.c.l.b16 %v1016
    %v2438 = vunpack.c.h.b16 %v1016
    %v2439 = vunpack.c.l.b16 %v1017
    %v2440 = vunpack.c.h.b16 %v1017
    %v2441 = vunpack.c.l.b16 %v1018
    %v2442 = vunpack.c.h.b16 %v1018
    %v2443 = vunpack.c.l.b16 %v1019
    %v2444 = vunpack.c.h.b16 %v1019
    %v2445 = vunpack.c.l.b16 %v1020
    %v2446 = vunpack.c.h.b16 %v1020
    %v2447 = vunpack.c.l.b16 %v1021
    %v2448 = vunpack.c.h.b16 %v1021
    %v2449 = vunpack.c.l.b16 %v1022
    %v2450 = vunpack.c.h.b16 %v1022
    %v2451 = vunpack.c.l.b16 %v1023
    %v2452 = vunpack.c.h.b16 %v1023
    %v2453 = vunpack.c.l.b16 %v1024
    %v2454 = vunpack.c.h.b16 %v1024
    %v2455 = vunpack.c.l.b16 %v1025
    %v2456 = vunpack.c.h.b16 %v1025
    %v2457 = vunpack.c.l.b16 %v1026
    %v2458 = vunpack.c.h.b16 %v1026
    %v2459 = vunpack.c.l.b16 %v1027
    %v2460 = vunpack.c.h.b16 %v1027
    %v2461 = vunpack.c.l.b16 %v1028
    %v2462 = vunpack.c.h.b16 %v1028
    %v2463 = vunpack.c.l.b16 %v1029
    %v2464 = vunpack.c.h.b16 %v1029
    %v2465 = vunpack.c.l.b16 %v1030
    %v2466 = vunpack.c.h.b16 %v1030
    %v2467 = vunpack.c.l.b16 %v1031
    %v2468 = vunpack.c.h.b16 %v1031
    %v2469 = vunpack.c.l.b16 %v1032
    %v2470 = vunpack.c.h.b16 %v1032
    %v2471 = vunpack.c.l.b16 %v1033
    %v2472 = vunpack.c.h.b16 %v1033
    %v2473 = vunpack.c.l.b16 %v1034
    %v2474 = vunpack.c.h.b16 %v1034
    %v2475 = vunpack.c.l.b16 %v1035
    %v2476 = vunpack.c.h.b16 %v1035
    %v2477 = vunpack.c.l.b16 %v1036
    %v2478 = vunpack.c.h.b16 %v1036
    %v2479 = vunpack.c.l.b16 %v1037
    %v2480 = vunpack.c.h.b16 %v1037
    %v2481 = vunpack.c.l.b16 %v1038
    %v2482 = vunpack.c.h.b16 %v1038
    %v2483 = vunpack.c.l.b16 %v1039
    %v2484 = vunpack.c.h.b16 %v1039
    %v2485 = vunpack.c.l.b16 %v1040
    %v2486 = vunpack.c.h.b16 %v1040
    %v2487 = vunpack.c.l.b16 %v1041
    %v2488 = vunpack.c.h.b16 %v1041
    %v2489 = vunpack.c.l.b16 %v1042
    %v2490 = vunpack.c.h.b16 %v1042
    %v2491 = vunpack.c.l.b16 %v1043
    %v2492 = vunpack.c.h.b16 %v1043
    %v2493 = vunpack.c.l.b16 %v1044
    %v2494 = vunpack.c.h.b16 %v1044
    %v2495 = vunpack.c.l.b16 %v1045
    %v2496 = vunpack.c.h.b16 %v1045
    %v2497 = vunpack.c.l.b16 %v1046
    %v2498 = vunpack.c.h.b16 %v1046
    %v2499 = vunpack.c.l.b16 %v1047
    %v2500 = vunpack.c.h.b16 %v1047
    %v2501 = vunpack.c.l.b16 %v1048
    %v2502 = vunpack.c.h.b16 %v1048
    %v2503 = vunpack.c.l.b16 %v1049
    %v2504 = vunpack.c.h.b16 %v1049
    %v2505 = vunpack.c.l.b16 %v1050
    %v2506 = vunpack.c.h.b16 %v1050
    %v2507 = vunpack.c.l.b16 %v1051
    %v2508 = vunpack.c.h.b16 %v1051
    %v2509 = vunpack.c.l.b16 %v1052
    %v2510 = vunpack.c.h.b16 %v1052
    %v2511 = vunpack.c.l.b16 %v1053
    %v2512 = vunpack.c.h.b16 %v1053
    %v2513 = vunpack.c.l.b16 %v1054
    %v2514 = vunpack.c.h.b16 %v1054
    %v2515 = vunpack.c.l.b16 %v1055
    %v2516 = vunpack.c.h.b16 %v1055
    %v2517 = vunpack.c.l.b16 %v1056
    %v2518 = vunpack.c.h.b16 %v1056
    %v2519 = vunpack.c.l.b16 %v1057
    %v2520 = vunpack.c.h.b16 %v1057
    %v2521 = vunpack.c.l.b16 %v1058
    %v2522 = vunpack.c.h.b16 %v1058
    %v2523 = vunpack.c.l.b16 %v1059
    %v2524 = vunpack.c.h.b16 %v1059
    %v2525 = vunpack.c.l.b16 %v1060
    %v2526 = vunpack.c.h.b16 %v1060
    %v2527 = vunpack.c.l.b16 %v1061
    %v2528 = vunpack.c.h.b16 %v1061
    %v2529 = vunpack.c.l.b16 %v1062
    %v2530 = vunpack.c.h.b16 %v1062
    %v2531 = vunpack.c.l.b16 %v1063
    %v2532 = vunpack.c.h.b16 %v1063
    %v2533 = vunpack.c.l.b16 %v1064
    %v2534 = vunpack.c.h.b16 %v1064
    %v2535 = vunpack.c.l.b16 %v1065
    %v2536 = vunpack.c.h.b16 %v1065
    %v2537 = vunpack.c.l.b16 %v1066
    %v2538 = vunpack.c.h.b16 %v1066
    %v2539 = vunpack.c.l.b16 %v1067
    %v2540 = vunpack.c.h.b16 %v1067
    %v2541 = vunpack.c.l.b16 %v1068
    %v2542 = vunpack.c.h.b16 %v1068
    %v2543 = vunpack.c.l.b16 %v1069
    %v2544 = vunpack.c.h.b16 %v1069
    %v2545 = vunpack.c.l.b16 %v1070
    %v2546 = vunpack.c.h.b16 %v1070
    %v2547 = vunpack.c.l.b16 %v1071
    %v2548 = vunpack.c.h.b16 %v1071
    %v2549 = vunpack.c.l.b16 %v1072
    %v2550 = vunpack.c.h.b16 %v1072
    %v2551 = vunpack.c.l.b16 %v1073
    %v2552 = vunpack.c.h.b16 %v1073
    %v2553 = vunpack.c.l.b16 %v1074
    %v2554 = vunpack.c.h.b16 %v1074
    %v2555 = vunpack.c.l.b16 %v1075
    %v2556 = vunpack.c.h.b16 %v1075
    %v2557 = vunpack.c.l.b16 %v1076
    %v2558 = vunpack.c.h.b16 %v1076
    %v2559 = vunpack.c.l.b16 %v1077
    %v2560 = vunpack.c.h.b16 %v1077
    %v2561 = vunpack.c.l.b16 %v1078
    %v2562 = vunpack.c.h.b16 %v1078
    %v2563 = vunpack.c.l.b16 %v1079
    %v2564 = vunpack.c.h.b16 %v1079
    %v2565 = vunpack.c.l.b16 %v1080
    %v2566 = vunpack.c.h.b16 %v1080
    %v2567 = vunpack.c.l.b16 %v1081
    %v2568 = vunpack.c.h.b16 %v1081
    %v2569 = vunpack.c.l.b16 %v1082
    %v2570 = vunpack.c.h.b16 %v1082
    %v2571 = vunpack.c.l.b16 %v1083
    %v2572 = vunpack.c.h.b16 %v1083
    %v2573 = vunpack.c.l.b16 %v1084
    %v2574 = vunpack.c.h.b16 %v1084
    %v2575 = vunpack.c.l.b16 %v1085
    %v2576 = vunpack.c.h.b16 %v1085
    %v2577 = vunpack.c.l.b16 %v1086
    %v2578 = vunpack.c.h.b16 %v1086
    %v2579 = vunpack.c.l.b16 %v1087
    %v2580 = vunpack.c.h.b16 %v1087
    %v2581 = vunpack.c.l.b16 %v1088
    %v2582 = vunpack.c.h.b16 %v1088
    %v2583 = vunpack.c.l.b16 %v1089
    %v2584 = vunpack.c.h.b16 %v1089
    %v2585 = vunpack.c.l.b16 %v1090
    %v2586 = vunpack.c.h.b16 %v1090
    %v2587 = vunpack.c.l.b16 %v1091
    %v2588 = vunpack.c.h.b16 %v1091
    %v2589 = vunpack.c.l.b16 %v1092
    %v2590 = vunpack.c.h.b16 %v1092
    %v2591 = vunpack.c.l.b16 %v1093
    %v2592 = vunpack.c.h.b16 %v1093
    %v2593 = vunpack.c.l.b16 %v1094
    %v2594 = vunpack.c.h.b16 %v1094
    %v2595 = vunpack.c.l.b16 %v1095
    %v2596 = vunpack.c.h.b16 %v1095
    %v2597 = vunpack.c.l.b16 %v1096
    %v2598 = vunpack.c.h.b16 %v1096
    %v2599 = vunpack.c.l.b16 %v1097
    %v2600 = vunpack.c.h.b16 %v1097
    %v2601 = vunpack.c.l.b16 %v1098
    %v2602 = vunpack.c.h.b16 %v1098
    %v2603 = vunpack.c.l.b16 %v1099
    %v2604 = vunpack.c.h.b16 %v1099
    %v2605 = vunpack.c.l.b16 %v1100
    %v2606 = vunpack.c.h.b16 %v1100
    %v2607 = vunpack.c.l.b16 %v1101
    %v2608 = vunpack.c.h.b16 %v1101
    %v2609 = vunpack.c.l.b16 %v1102
    %v2610 = vunpack.c.h.b16 %v1102
    %v2611 = vunpack.c.l.b16 %v1103
    %v2612 = vunpack.c.h.b16 %v1103
    %v2613 = vunpack.c.l.b16 %v1104
    %v2614 = vunpack.c.h.b16 %v1104
    %v2615 = vunpack.c.l.b16 %v1105
    %v2616 = vunpack.c.h.b16 %v1105
    %v2617 = vunpack.c.l.b16 %v1106
    %v2618 = vunpack.c.h.b16 %v1106
    %v2619 = vunpack.c.l.b16 %v1107
    %v2620 = vunpack.c.h.b16 %v1107
    %v2621 = vunpack.c.l.b16 %v1108
    %v2622 = vunpack.c.h.b16 %v1108
    %v2623 = vunpack.c.l.b16 %v1109
    %v2624 = vunpack.c.h.b16 %v1109
    %v2625 = vunpack.c.l.b16 %v1110
    %v2626 = vunpack.c.h.b16 %v1110
    %v2627 = vunpack.c.l.b16 %v1111
    %v2628 = vunpack.c.h.b16 %v1111
    %v2629 = vunpack.c.l.b16 %v1112
    %v2630 = vunpack.c.h.b16 %v1112
    %v2631 = vunpack.c.l.b16 %v1113
    %v2632 = vunpack.c.h.b16 %v1113
    %v2633 = vunpack.c.l.b16 %v1114
    %v2634 = vunpack.c.h.b16 %v1114
    %v2635 = vunpack.c.l.b16 %v1115
    %v2636 = vunpack.c.h.b16 %v1115
    %v2637 = vunpack.c.l.b16 %v1116
    %v2638 = vunpack.c.h.b16 %v1116
    %v2639 = vunpack.c.l.b16 %v1117
    %v2640 = vunpack.c.h.b16 %v1117
    %v2641 = vunpack.c.l.b16 %v1118
    %v2642 = vunpack.c.h.b16 %v1118
    %v2643 = vunpack.c.l.b16 %v1119
    %v2644 = vunpack.c.h.b16 %v1119
    %v2645 = vunpack.c.l.b16 %v1120
    %v2646 = vunpack.c.h.b16 %v1120
    %v2647 = vunpack.c.l.b16 %v1121
    %v2648 = vunpack.c.h.b16 %v1121
    %v2649 = vunpack.c.l.b16 %v1122
    %v2650 = vunpack.c.h.b16 %v1122
    %v2651 = vunpack.c.l.b16 %v1123
    %v2652 = vunpack.c.h.b16 %v1123
    %v2653 = vunpack.c.l.b16 %v1124
    %v2654 = vunpack.c.h.b16 %v1124
    %v2655 = vunpack.c.l.b16 %v1125
    %v2656 = vunpack.c.h.b16 %v1125
    %v2657 = vunpack.c.l.b16 %v1126
    %v2658 = vunpack.c.h.b16 %v1126
    %v2659 = vunpack.c.l.b16 %v1127
    %v2660 = vunpack.c.h.b16 %v1127
    %v2661 = vunpack.c.l.b16 %v1128
    %v2662 = vunpack.c.h.b16 %v1128
    %v2663 = vunpack.c.l.b16 %v1129
    %v2664 = vunpack.c.h.b16 %v1129
    %v2665 = vunpack.c.l.b16 %v1130
    %v2666 = vunpack.c.h.b16 %v1130
    %v2667 = vunpack.c.l.b16 %v1131
    %v2668 = vunpack.c.h.b16 %v1131
    %v2669 = vunpack.c.l.b16 %v1132
    %v2670 = vunpack.c.h.b16 %v1132
    %v2671 = vunpack.c.l.b16 %v1133
    %v2672 = vunpack.c.h.b16 %v1133
    %v2673 = vunpack.c.l.b16 %v1134
    %v2674 = vunpack.c.h.b16 %v1134
    %v2675 = vunpack.c.l.b16 %v1135
    %v2676 = vunpack.c.h.b16 %v1135
    %v2677 = vunpack.c.l.b16 %v1136
    %v2678 = vunpack.c.h.b16 %v1136
    %v2679 = vunpack.c.l.b16 %v1137
    %v2680 = vunpack.c.h.b16 %v1137
    %v2681 = vunpack.c.l.b16 %v1138
    %v2682 = vunpack.c.h.b16 %v1138
    %v2683 = vunpack.c.l.b16 %v1139
    %v2684 = vunpack.c.h.b16 %v1139
    %v2685 = vunpack.c.l.b16 %v1140
    %v2686 = vunpack.c.h.b16 %v1140
    %v2687 = vunpack.c.l.b16 %v1141
    %v2688 = vunpack.c.h.b16 %v1141
    %v2689 = vunpack.c.l.b16 %v1142
    %v2690 = vunpack.c.h.b16 %v1142
    %v2691 = vunpack.c.l.b16 %v1143
    %v2692 = vunpack.c.h.b16 %v1143
    %v2693 = vunpack.c.l.b16 %v1144
    %v2694 = vunpack.c.h.b16 %v1144
    %v2695 = vunpack.c.l.b16 %v1145
    %v2696 = vunpack.c.h.b16 %v1145
    %v2697 = vunpack.c.l.b16 %v1146
    %v2698 = vunpack.c.h.b16 %v1146
    %v2699 = vunpack.c.l.b16 %v1147
    %v2700 = vunpack.c.h.b16 %v1147
    %v2701 = vunpack.c.l.b16 %v1148
    %v2702 = vunpack.c.h.b16 %v1148
    %v2703 = vpack.c.b16 %v1687, %v1679
    %v2704 = vpack.c.b16 %v1688, %v1680
    %v2705 = vpack.c.b16 %v1689, %v1681
    %v2706 = vpack.c.b16 %v1690, %v1682
    %v2707 = vpack.c.b16 %v1691, %v1683
    %v2708 = vpack.c.b16 %v1692, %v1684
    %v2709 = vpack.c.b16 %v1693, %v1685
    %v2710 = vpack.c.b16 %v1694, %v1686
    %v2711 = vpack.c.b16 %v1703, %v1695
    %v2712 = vpack.c.b16 %v1704, %v1696
    %v2713 = vpack.c.b16 %v1705, %v1697
    %v2714 = vpack.c.b16 %v1706, %v1698
    %v2715 = vpack.c.b16 %v1707, %v1699
    %v2716 = vpack.c.b16 %v1708, %v1700
    %v2717 = vpack.c.b16 %v1709, %v1701
    %v2718 = vpack.c.b16 %v1710, %v1702
    %v2719 = vpack.c.b16 %v1719, %v1711
    %v2720 = vpack.c.b16 %v1720, %v1712
    %v2721 = vpack.c.b16 %v1721, %v1713
    %v2722 = vpack.c.b16 %v1722, %v1714
    %v2723 = vpack.c.b16 %v1723, %v1715
    %v2724 = vpack.c.b16 %v1724, %v1716
    %v2725 = vpack.c.b16 %v1725, %v1717
    %v2726 = vpack.c.b16 %v1726, %v1718
    %v2727 = vpack.c.b16 %v1735, %v1727
    %v2728 = vpack.c.b16 %v1736, %v1728
    %v2729 = vpack.c.b16 %v1737, %v1729
    %v2730 = vpack.c.b16 %v1738, %v1730
    %v2731 = vpack.c.b16 %v1739, %v1731
    %v2732 = vpack.c.b16 %v1740, %v1732
    %v2733 = vpack.c.b16 %v1741, %v1733
    %v2734 = vpack.c.b16 %v1742, %v1734
    %v2735 = vpack.c.b16 %v1751, %v1743
    %v2736 = vpack.c.b16 %v1752, %v1744
    %v2737 = vpack.c.b16 %v1753, %v1745
    %v2738 = vpack.c.b16 %v1754, %v1746
    %v2739 = vpack.c.b16 %v1755, %v1747
    %v2740 = vpack.c.b16 %v1756, %v1748
    %v2741 = vpack.c.b16 %v1757, %v1749
    %v2742 = vpack.c.b16 %v1758, %v1750
    %v2743 = vpack.c.b16 %v1767, %v1759
    %v2744 = vpack.c.b16 %v1768, %v1760
    %v2745 = vpack.c.b16 %v1769, %v1761
    %v2746 = vpack.c.b16 %v1770, %v1762
    %v2747 = vpack.c.b16 %v1771, %v1763
    %v2748 = vpack.c.b16 %v1772, %v1764
    %v2749 = vpack.c.b16 %v1773, %v1765
    %v2750 = vpack.c.b16 %v1774, %v1766
    %v2751 = vpack.c.b16 %v1783, %v1775
    %v2752 = vpack.c.b16 %v1784, %v1776
    %v2753 = vpack.c.b16 %v1785, %v1777
    %v2754 = vpack.c.b16 %v1786, %v1778
    %v2755 = vpack.c.b16 %v1787, %v1779
    %v2756 = vpack.c.b16 %v1788, %v1780
    %v2757 = vpack.c.b16 %v1789, %v1781
    %v2758 = vpack.c.b16 %v1790, %v1782
    %v2759 = vpack.c.b16 %v1799, %v1791
    %v2760 = vpack.c.b16 %v1800, %v1792
    %v2761 = vpack.c.b16 %v1801, %v1793
    %v2762 = vpack.c.b16 %v1802, %v1794
    %v2763 = vpack.c.b16 %v1803, %v1795
    %v2764 = vpack.c.b16 %v1804, %v1796
    %v2765 = vpack.c.b16 %v1805, %v1797
    %v2766 = vpack.c.b16 %v1806, %v1798
    %v2767 = vpack.c.b16 %v1815, %v1807
    %v2768 = vpack.c.b16 %v1816, %v1808
    %v2769 = vpack.c.b16 %v1817, %v1809
    %v2770 = vpack.c.b16 %v1818, %v1810
    %v2771 = vpack.c.b16 %v1819, %v1811
    %v2772 = vpack.c.b16 %v1820, %v1812
    %v2773 = vpack.c.b16 %v1821, %v1813
    %v2774 = vpack.c.b16 %v1822, %v1814
    %v2775 = vpack.c.b16 %v1831, %v1823
    %v2776 = vpack.c.b16 %v1832, %v1824
    %v2777 = vpack.c.b16 %v1833, %v1825
    %v2778 = vpack.c.b16 %v1834, %v1826
    %v2779 = vpack.c.b16 %v1835, %v1827
    %v2780 = vpack.c.b16 %v1836, %v1828
    %v2781 = vpack.c.b16 %v1837, %v1829
    %v2782 = vpack.c.b16 %v1838, %v1830
    %v2783 = vpack.c.b16 %v1847, %v1839
    %v2784 = vpack.c.b16 %v1848, %v1840
    %v2785 = vpack.c.b16 %v1849, %v1841
    %v2786 = vpack.c.b16 %v1850, %v1842
    %v2787 = vpack.c.b16 %v1851, %v1843
    %v2788 = vpack.c.b16 %v1852, %v1844
    %v2789 = vpack.c.b16 %v1853, %v1845
    %v2790 = vpack.c.b16 %v1854, %v1846
    %v2791 = vpack.c.b16 %v1863, %v1855
    %v2792 = vpack.c.b16 %v1864, %v1856
    %v2793 = vpack.c.b16 %v1865, %v1857
    %v2794 = vpack.c.b16 %v1866, %v1858
    %v2795 = vpack.c.b16 %v1867, %v1859
    %v2796 = vpack.c.b16 %v1868, %v1860
    %v2797 = vpack.c.b16 %v1869, %v1861
    %v2798 = vpack.c.b16 %v1870, %v1862
    %v2799 = vpack.c.b16 %v1879, %v1871
    %v2800 = vpack.c.b16 %v1880, %v1872
    %v2801 = vpack.c.b16 %v1881, %v1873
    %v2802 = vpack.c.b16 %v1882, %v1874
    %v2803 = vpack.c.b16 %v1883, %v1875
    %v2804 = vpack.c.b16 %v1884, %v1876
    %v2805 = vpack.c.b16 %v1885, %v1877
    %v2806 = vpack.c.b16 %v1886, %v1878
    %v2807 = vpack.c.b16 %v1895, %v1887
    %v2808 = vpack.c.b16 %v1896, %v1888
    %v2809 = vpack.c.b16 %v1897, %v1889
    %v2810 = vpack.c.b16 %v1898, %v1890
    %v2811 = vpack.c.b16 %v1899, %v1891
    %v2812 = vpack.c.b16 %v1900, %v1892
    %v2813 = vpack.c.b16 %v1901, %v1893
    %v2814 = vpack.c.b16 %v1902, %v1894
    %v2815 = vpack.c.b16 %v1911, %v1903
    %v2816 = vpack.c.b16 %v1912, %v1904
    %v2817 = vpack.c.b16 %v1913, %v1905
    %v2818 = vpack.c.b16 %v1914, %v1906
    %v2819 = vpack.c.b16 %v1915, %v1907
    %v2820 = vpack.c.b16 %v1916, %v1908
    %v2821 = vpack.c.b16 %v1917, %v1909
    %v2822 = vpack.c.b16 %v1918, %v1910
    %v2823 = vpack.c.b16 %v1927, %v1919
    %v2824 = vpack.c.b16 %v1928, %v1920
    %v2825 = vpack.c.b16 %v1929, %v1921
    %v2826 = vpack.c.b16 %v1930, %v1922
    %v2827 = vpack.c.b16 %v1931, %v1923
    %v2828 = vpack.c.b16 %v1932, %v1924
    %v2829 = vpack.c.b16 %v1933, %v1925
    %v2830 = vpack.c.b16 %v1934, %v1926
    %v2831 = vpack.c.b16 %v1943, %v1935
    %v2832 = vpack.c.b16 %v1944, %v1936
    %v2833 = vpack.c.b16 %v1945, %v1937
    %v2834 = vpack.c.b16 %v1946, %v1938
    %v2835 = vpack.c.b16 %v1947, %v1939
    %v2836 = vpack.c.b16 %v1948, %v1940
    %v2837 = vpack.c.b16 %v1949, %v1941
    %v2838 = vpack.c.b16 %v1950, %v1942
    %v2839 = vpack.c.b16 %v1959, %v1951
    %v2840 = vpack.c.b16 %v1960, %v1952
    %v2841 = vpack.c.b16 %v1961, %v1953
    %v2842 = vpack.c.b16 %v1962, %v1954
    %v2843 = vpack.c.b16 %v1963, %v1955
    %v2844 = vpack.c.b16 %v1964, %v1956
    %v2845 = vpack.c.b16 %v1965, %v1957
    %v2846 = vpack.c.b16 %v1966, %v1958
    %v2847 = vpack.c.b16 %v1975, %v1967
    %v2848 = vpack.c.b16 %v1976, %v1968
    %v2849 = vpack.c.b16 %v1977, %v1969
    %v2850 = vpack.c.b16 %v1978, %v1970
    %v2851 = vpack.c.b16 %v1979, %v1971
    %v2852 = vpack.c.b16 %v1980, %v1972
    %v2853 = vpack.c.b16 %v1981, %v1973
    %v2854 = vpack.c.b16 %v1982, %v1974
    %v2855 = vpack.c.b16 %v1991, %v1983
    %v2856 = vpack.c.b16 %v1992, %v1984
    %v2857 = vpack.c.b16 %v1993, %v1985
    %v2858 = vpack.c.b16 %v1994, %v1986
    %v2859 = vpack.c.b16 %v1995, %v1987
    %v2860 = vpack.c.b16 %v1996, %v1988
    %v2861 = vpack.c.b16 %v1997, %v1989
    %v2862 = vpack.c.b16 %v1998, %v1990
    %v2863 = vpack.c.b16 %v2007, %v1999
    %v2864 = vpack.c.b16 %v2008, %v2000
    %v2865 = vpack.c.b16 %v2009, %v2001
    %v2866 = vpack.c.b16 %v2010, %v2002
    %v2867 = vpack.c.b16 %v2011, %v2003
    %v2868 = vpack.c.b16 %v2012, %v2004
    %v2869 = vpack.c.b16 %v2013, %v2005
    %v2870 = vpack.c.b16 %v2014, %v2006
    %v2871 = vpack.c.b16 %v2023, %v2015
    %v2872 = vpack.c.b16 %v2024, %v2016
    %v2873 = vpack.c.b16 %v2025, %v2017
    %v2874 = vpack.c.b16 %v2026, %v2018
    %v2875 = vpack.c.b16 %v2027, %v2019
    %v2876 = vpack.c.b16 %v2028, %v2020
    %v2877 = vpack.c.b16 %v2029, %v2021
    %v2878 = vpack.c.b16 %v2030, %v2022
    %v2879 = vpack.c.b16 %v2039, %v2031
    %v2880 = vpack.c.b16 %v2040, %v2032
    %v2881 = vpack.c.b16 %v2041, %v2033
    %v2882 = vpack.c.b16 %v2042, %v2034
    %v2883 = vpack.c.b16 %v2043, %v2035
    %v2884 = vpack.c.b16 %v2044, %v2036
    %v2885 = vpack.c.b16 %v2045, %v2037
    %v2886 = vpack.c.b16 %v2046, %v2038
    %v2887 = vpack.c.b16 %v2055, %v2047
    %v2888 = vpack.c.b16 %v2056, %v2048
    %v2889 = vpack.c.b16 %v2057, %v2049
    %v2890 = vpack.c.b16 %v2058, %v2050
    %v2891 = vpack.c.b16 %v2059, %v2051
    %v2892 = vpack.c.b16 %v2060, %v2052
    %v2893 = vpack.c.b16 %v2061, %v2053
    %v2894 = vpack.c.b16 %v2062, %v2054
    %v2895 = vpack.c.b16 %v2071, %v2063
    %v2896 = vpack.c.b16 %v2072, %v2064
    %v2897 = vpack.c.b16 %v2073, %v2065
    %v2898 = vpack.c.b16 %v2074, %v2066
    %v2899 = vpack.c.b16 %v2075, %v2067
    %v2900 = vpack.c.b16 %v2076, %v2068
    %v2901 = vpack.c.b16 %v2077, %v2069
    %v2902 = vpack.c.b16 %v2078, %v2070
    %v2903 = vpack.c.b16 %v2087, %v2079
    %v2904 = vpack.c.b16 %v2088, %v2080
    %v2905 = vpack.c.b16 %v2089, %v2081
    %v2906 = vpack.c.b16 %v2090, %v2082
    %v2907 = vpack.c.b16 %v2091, %v2083
    %v2908 = vpack.c.b16 %v2092, %v2084
    %v2909 = vpack.c.b16 %v2093, %v2085
    %v2910 = vpack.c.b16 %v2094, %v2086
    %v2911 = vpack.c.b16 %v2103, %v2095
    %v2912 = vpack.c.b16 %v2104, %v2096
    %v2913 = vpack.c.b16 %v2105, %v2097
    %v2914 = vpack.c.b16 %v2106, %v2098
    %v2915 = vpack.c.b16 %v2107, %v2099
    %v2916 = vpack.c.b16 %v2108, %v2100
    %v2917 = vpack.c.b16 %v2109, %v2101
    %v2918 = vpack.c.b16 %v2110, %v2102
    %v2919 = vpack.c.b16 %v2119, %v2111
    %v2920 = vpack.c.b16 %v2120, %v2112
    %v2921 = vpack.c.b16 %v2121, %v2113
    %v2922 = vpack.c.b16 %v2122, %v2114
    %v2923 = vpack.c.b16 %v2123, %v2115
    %v2924 = vpack.c.b16 %v2124, %v2116
    %v2925 = vpack.c.b16 %v2125, %v2117
    %v2926 = vpack.c.b16 %v2126, %v2118
    %v2927 = vpack.c.b16 %v2135, %v2127
    %v2928 = vpack.c.b16 %v2136, %v2128
    %v2929 = vpack.c.b16 %v2137, %v2129
    %v2930 = vpack.c.b16 %v2138, %v2130
    %v2931 = vpack.c.b16 %v2139, %v2131
    %v2932 = vpack.c.b16 %v2140, %v2132
    %v2933 = vpack.c.b16 %v2141, %v2133
    %v2934 = vpack.c.b16 %v2142, %v2134
    %v2935 = vpack.c.b16 %v2151, %v2143
    %v2936 = vpack.c.b16 %v2152, %v2144
    %v2937 = vpack.c.b16 %v2153, %v2145
    %v2938 = vpack.c.b16 %v2154, %v2146
    %v2939 = vpack.c.b16 %v2155, %v2147
    %v2940 = vpack.c.b16 %v2156, %v2148
    %v2941 = vpack.c.b16 %v2157, %v2149
    %v2942 = vpack.c.b16 %v2158, %v2150
    %v2943 = vpack.c.b16 %v2167, %v2159
    %v2944 = vpack.c.b16 %v2168, %v2160
    %v2945 = vpack.c.b16 %v2169, %v2161
    %v2946 = vpack.c.b16 %v2170, %v2162
    %v2947 = vpack.c.b16 %v2171, %v2163
    %v2948 = vpack.c.b16 %v2172, %v2164
    %v2949 = vpack.c.b16 %v2173, %v2165
    %v2950 = vpack.c.b16 %v2174, %v2166
    %v2951 = vpack.c.b16 %v2183, %v2175
    %v2952 = vpack.c.b16 %v2184, %v2176
    %v2953 = vpack.c.b16 %v2185, %v2177
    %v2954 = vpack.c.b16 %v2186, %v2178
    %v2955 = vpack.c.b16 %v2187, %v2179
    %v2956 = vpack.c.b16 %v2188, %v2180
    %v2957 = vpack.c.b16 %v2189, %v2181
    %v2958 = vpack.c.b16 %v2190, %v2182
    %v2959 = vpack.c.b16 %v2199, %v2191
    %v2960 = vpack.c.b16 %v2200, %v2192
    %v2961 = vpack.c.b16 %v2201, %v2193
    %v2962 = vpack.c.b16 %v2202, %v2194
    %v2963 = vpack.c.b16 %v2203, %v2195
    %v2964 = vpack.c.b16 %v2204, %v2196
    %v2965 = vpack.c.b16 %v2205, %v2197
    %v2966 = vpack.c.b16 %v2206, %v2198
    %v2967 = vpack.c.b16 %v2215, %v2207
    %v2968 = vpack.c.b16 %v2216, %v2208
    %v2969 = vpack.c.b16 %v2217, %v2209
    %v2970 = vpack.c.b16 %v2218, %v2210
    %v2971 = vpack.c.b16 %v2219, %v2211
    %v2972 = vpack.c.b16 %v2220, %v2212
    %v2973 = vpack.c.b16 %v2221, %v2213
    %v2974 = vpack.c.b16 %v2222, %v2214
    %v2975 = vpack.c.b16 %v2231, %v2223
    %v2976 = vpack.c.b16 %v2232, %v2224
    %v2977 = vpack.c.b16 %v2233, %v2225
    %v2978 = vpack.c.b16 %v2234, %v2226
    %v2979 = vpack.c.b16 %v2235, %v2227
    %v2980 = vpack.c.b16 %v2236, %v2228
    %v2981 = vpack.c.b16 %v2237, %v2229
    %v2982 = vpack.c.b16 %v2238, %v2230
    %v2983 = vpack.c.b16 %v2247, %v2239
    %v2984 = vpack.c.b16 %v2248, %v2240
    %v2985 = vpack.c.b16 %v2249, %v2241
    %v2986 = vpack.c.b16 %v2250, %v2242
    %v2987 = vpack.c.b16 %v2251, %v2243
    %v2988 = vpack.c.b16 %v2252, %v2244
    %v2989 = vpack.c.b16 %v2253, %v2245
    %v2990 = vpack.c.b16 %v2254, %v2246
    %v2991 = vpack.c.b16 %v2263, %v2255
    %v2992 = vpack.c.b16 %v2264, %v2256
    %v2993 = vpack.c.b16 %v2265, %v2257
    %v2994 = vpack.c.b16 %v2266, %v2258
    %v2995 = vpack.c.b16 %v2267, %v2259
    %v2996 = vpack.c.b16 %v2268, %v2260
    %v2997 = vpack.c.b16 %v2269, %v2261
    %v2998 = vpack.c.b16 %v2270, %v2262
    %v2999 = vpack.c.b16 %v2279, %v2271
    %v3000 = vpack.c.b16 %v2280, %v2272
    %v3001 = vpack.c.b16 %v2281, %v2273
    %v3002 = vpack.c.b16 %v2282, %v2274
    %v3003 = vpack.c.b16 %v2283, %v2275
    %v3004 = vpack.c.b16 %v2284, %v2276
    %v3005 = vpack.c.b16 %v2285, %v2277
    %v3006 = vpack.c.b16 %v2286, %v2278
    %v3007 = vpack.c.b16 %v2295, %v2287
    %v3008 = vpack.c.b16 %v2296, %v2288
    %v3009 = vpack.c.b16 %v2297, %v2289
    %v3010 = vpack.c.b16 %v2298, %v2290
    %v3011 = vpack.c.b16 %v2299, %v2291
    %v3012 = vpack.c.b16 %v2300, %v2292
    %v3013 = vpack.c.b16 %v2301, %v2293
    %v3014 = vpack.c.b16 %v2302, %v2294
    %v3015 = vpack.c.b16 %v2311, %v2303
    %v3016 = vpack.c.b16 %v2312, %v2304
    %v3017 = vpack.c.b16 %v2313, %v2305
    %v3018 = vpack.c.b16 %v2314, %v2306
    %v3019 = vpack.c.b16 %v2315, %v2307
    %v3020 = vpack.c.b16 %v2316, %v2308
    %v3021 = vpack.c.b16 %v2317, %v2309
    %v3022 = vpack.c.b16 %v2318, %v2310
    %v3023 = vpack.c.b16 %v2327, %v2319
    %v3024 = vpack.c.b16 %v2328, %v2320
    %v3025 = vpack.c.b16 %v2329, %v2321
    %v3026 = vpack.c.b16 %v2330, %v2322
    %v3027 = vpack.c.b16 %v2331, %v2323
    %v3028 = vpack.c.b16 %v2332, %v2324
    %v3029 = vpack.c.b16 %v2333, %v2325
    %v3030 = vpack.c.b16 %v2334, %v2326
    %v3031 = vpack.c.b16 %v2343, %v2335
    %v3032 = vpack.c.b16 %v2344, %v2336
    %v3033 = vpack.c.b16 %v2345, %v2337
    %v3034 = vpack.c.b16 %v2346, %v2338
    %v3035 = vpack.c.b16 %v2347, %v2339
    %v3036 = vpack.c.b16 %v2348, %v2340
    %v3037 = vpack.c.b16 %v2349, %v2341
    %v3038 = vpack.c.b16 %v2350, %v2342
    %v3039 = vpack.c.b16 %v2359, %v2351
    %v3040 = vpack.c.b16 %v2360, %v2352
    %v3041 = vpack.c.b16 %v2361, %v2353
    %v3042 = vpack.c.b16 %v2362, %v2354
    %v3043 = vpack.c.b16 %v2363, %v2355
    %v3044 = vpack.c.b16 %v2364, %v2356
    %v3045 = vpack.c.b16 %v2365, %v2357
    %v3046 = vpack.c.b16 %v2366, %v2358
    %v3047 = vpack.c.b16 %v2375, %v2367
    %v3048 = vpack.c.b16 %v2376, %v2368
    %v3049 = vpack.c.b16 %v2377, %v2369
    %v3050 = vpack.c.b16 %v2378, %v2370
    %v3051 = vpack.c.b16 %v2379, %v2371
    %v3052 = vpack.c.b16 %v2380, %v2372
    %v3053 = vpack.c.b16 %v2381, %v2373
    %v3054 = vpack.c.b16 %v2382, %v2374
    %v3055 = vpack.c.b16 %v2391, %v2383
    %v3056 = vpack.c.b16 %v2392, %v2384
    %v3057 = vpack.c.b16 %v2393, %v2385
    %v3058 = vpack.c.b16 %v2394, %v2386
    %v3059 = vpack.c.b16 %v2395, %v2387
    %v3060 = vpack.c.b16 %v2396, %v2388
    %v3061 = vpack.c.b16 %v2397, %v2389
    %v3062 = vpack.c.b16 %v2398, %v2390
    %v3063 = vpack.c.b16 %v2407, %v2399
    %v3064 = vpack.c.b16 %v2408, %v2400
    %v3065 = vpack.c.b16 %v2409, %v2401
    %v3066 = vpack.c.b16 %v2410, %v2402
    %v3067 = vpack.c.b16 %v2411, %v2403
    %v3068 = vpack.c.b16 %v2412, %v2404
    %v3069 = vpack.c.b16 %v2413, %v2405
    %v3070 = vpack.c.b16 %v2414, %v2406
    %v3071 = vpack.c.b16 %v2423, %v2415
    %v3072 = vpack.c.b16 %v2424, %v2416
    %v3073 = vpack.c.b16 %v2425, %v2417
    %v3074 = vpack.c.b16 %v2426, %v2418
    %v3075 = vpack.c.b16 %v2427, %v2419
    %v3076 = vpack.c.b16 %v2428, %v2420
    %v3077 = vpack.c.b16 %v2429, %v2421
    %v3078 = vpack.c.b16 %v2430, %v2422
    %v3079 = vpack.c.b16 %v2439, %v2431
    %v3080 = vpack.c.b16 %v2440, %v2432
    %v3081 = vpack.c.b16 %v2441, %v2433
    %v3082 = vpack.c.b16 %v2442, %v2434
    %v3083 = vpack.c.b16 %v2443, %v2435
    %v3084 = vpack.c.b16 %v2444, %v2436
    %v3085 = vpack.c.b16 %v2445, %v2437
    %v3086 = vpack.c.b16 %v2446, %v2438
    %v3087 = vpack.c.b16 %v2455, %v2447
    %v3088 = vpack.c.b16 %v2456, %v2448
    %v3089 = vpack.c.b16 %v2457, %v2449
    %v3090 = vpack.c.b16 %v2458, %v2450
    %v3091 = vpack.c.b16 %v2459, %v2451
    %v3092 = vpack.c.b16 %v2460, %v2452
    %v3093 = vpack.c.b16 %v2461, %v2453
    %v3094 = vpack.c.b16 %v2462, %v2454
    %v3095 = vpack.c.b16 %v2471, %v2463
    %v3096 = vpack.c.b16 %v2472, %v2464
    %v3097 = vpack.c.b16 %v2473, %v2465
    %v3098 = vpack.c.b16 %v2474, %v2466
    %v3099 = vpack.c.b16 %v2475, %v2467
    %v3100 = vpack.c.b16 %v2476, %v2468
    %v3101 = vpack.c.b16 %v2477, %v2469
    %v3102 = vpack.c.b16 %v2478, %v2470
    %v3103 = vpack.c.b16 %v2487, %v2479
    %v3104 = vpack.c.b16 %v2488, %v2480
    %v3105 = vpack.c.b16 %v2489, %v2481
    %v3106 = vpack.c.b16 %v2490, %v2482
    %v3107 = vpack.c.b16 %v2491, %v2483
    %v3108 = vpack.c.b16 %v2492, %v2484
    %v3109 = vpack.c.b16 %v2493, %v2485
    %v3110 = vpack.c.b16 %v2494, %v2486
    %v3111 = vpack.c.b16 %v2503, %v2495
    %v3112 = vpack.c.b16 %v2504, %v2496
    %v3113 = vpack.c.b16 %v2505, %v2497
    %v3114 = vpack.c.b16 %v2506, %v2498
    %v3115 = vpack.c.b16 %v2507, %v2499
    %v3116 = vpack.c.b16 %v2508, %v2500
    %v3117 = vpack.c.b16 %v2509, %v2501
    %v3118 = vpack.c.b16 %v2510, %v2502
    %v3119 = vpack.c.b16 %v2519, %v2511
    %v3120 = vpack.c.b16 %v2520, %v2512
    %v3121 = vpack.c.b16 %v2521, %v2513
    %v3122 = vpack.c.b16 %v2522, %v2514
    %v3123 = vpack.c.b16 %v2523, %v2515
    %v3124 = vpack.c.b16 %v2524, %v2516
    %v3125 = vpack.c.b16 %v2525, %v2517
    %v3126 = vpack.c.b16 %v2526, %v2518
    %v3127 = vpack.c.b16 %v2535, %v2527
    %v3128 = vpack.c.b16 %v2536, %v2528
    %v3129 = vpack.c.b16 %v2537, %v2529
    %v3130 = vpack.c.b16 %v2538, %v2530
    %v3131 = vpack.c.b16 %v2539, %v2531
    %v3132 = vpack.c.b16 %v2540, %v2532
    %v3133 = vpack.c.b16 %v2541, %v2533
    %v3134 = vpack.c.b16 %v2542, %v2534
    %v3135 = vpack.c.b16 %v2551, %v2543
    %v3136 = vpack.c.b16 %v2552, %v2544
    %v3137 = vpack.c.b16 %v2553, %v2545
    %v3138 = vpack.c.b16 %v2554, %v2546
    %v3139 = vpack.c.b16 %v2555, %v2547
    %v3140 = vpack.c.b16 %v2556, %v2548
    %v3141 = vpack.c.b16 %v2557, %v2549
    %v3142 = vpack.c.b16 %v2558, %v2550
    %v3143 = vpack.c.b16 %v2567, %v2559
    %v3144 = vpack.c.b16 %v2568, %v2560
    %v3145 = vpack.c.b16 %v2569, %v2561
    %v3146 = vpack.c.b16 %v2570, %v2562
    %v3147 = vpack.c.b16 %v2571, %v2563
    %v3148 = vpack.c.b16 %v2572, %v2564
    %v3149 = vpack.c.b16 %v2573, %v2565
    %v3150 = vpack.c.b16 %v2574, %v2566
    %v3151 = vpack.c.b16 %v2583, %v2575
    %v3152 = vpack.c.b16 %v2584, %v2576
    %v3153 = vpack.c.b16 %v2585, %v2577
    %v3154 = vpack.c.b16 %v2586, %v2578
    %v3155 = vpack.c.b16 %v2587, %v2579
    %v3156 = vpack.c.b16 %v2588, %v2580
    %v3157 = vpack.c.b16 %v2589, %v2581
    %v3158 = vpack.c.b16 %v2590, %v2582
    %v3159 = vpack.c.b16 %v2599, %v2591
    %v3160 = vpack.c.b16 %v2600, %v2592
    %v3161 = vpack.c.b16 %v2601, %v2593
    %v3162 = vpack.c.b16 %v2602, %v2594
    %v3163 = vpack.c.b16 %v2603, %v2595
    %v3164 = vpack.c.b16 %v2604, %v2596
    %v3165 = vpack.c.b16 %v2605, %v2597
    %v3166 = vpack.c.b16 %v2606, %v2598
    %v3167 = vpack.c.b16 %v2615, %v2607
    %v3168 = vpack.c.b16 %v2616, %v2608
    %v3169 = vpack.c.b16 %v2617, %v2609
    %v3170 = vpack.c.b16 %v2618, %v2610
    %v3171 = vpack.c.b16 %v2619, %v2611
    %v3172 = vpack.c.b16 %v2620, %v2612
    %v3173 = vpack.c.b16 %v2621, %v2613
    %v3174 = vpack.c.b16 %v2622, %v2614
    %v3175 = vpack.c.b16 %v2631, %v2623
    %v3176 = vpack.c.b16 %v2632, %v2624
    %v3177 = vpack.c.b16 %v2633, %v2625
    %v3178 = vpack.c.b16 %v2634, %v2626
    %v3179 = vpack.c.b16 %v2635, %v2627
    %v3180 = vpack.c.b16 %v2636, %v2628
    %v3181 = vpack.c.b16 %v2637, %v2629
    %v3182 = vpack.c.b16 %v2638, %v2630
    %v3183 = vpack.c.b16 %v2647, %v2639
    %v3184 = vpack.c.b16 %v2648, %v2640
    %v3185 = vpack.c.b16 %v2649, %v2641
    %v3186 = vpack.c.b16 %v2650, %v2642
    %v3187 = vpack.c.b16 %v2651, %v2643
    %v3188 = vpack.c.b16 %v2652, %v2644
    %v3189 = vpack.c.b16 %v2653, %v2645
    %v3190 = vpack.c.b16 %v2654, %v2646
    %v3191 = vpack.c.b16 %v2663, %v2655
    %v3192 = vpack.c.b16 %v2664, %v2656
    %v3193 = vpack.c.b16 %v2665, %v2657
    %v3194 = vpack.c.b16 %v2666, %v2658
    %v3195 = vpack.c.b16 %v2667, %v2659
    %v3196 = vpack.c.b16 %v2668, %v2660
    %v3197 = vpack.c.b16 %v2669, %v2661
    %v3198 = vpack.c.b16 %v2670, %v2662
    %v3199 = vpack.c.b16 %v2679, %v2671
    %v3200 = vpack.c.b16 %v2680, %v2672
    %v3201 = vpack.c.b16 %v2681, %v2673
    %v3202 = vpack.c.b16 %v2682, %v2674
    %v3203 = vpack.c.b16 %v2683, %v2675
    %v3204 = vpack.c.b16 %v2684, %v2676
    %v3205 = vpack.c.b16 %v2685, %v2677
    %v3206 = vpack.c.b16 %v2686, %v2678
    %v3207 = vpack.c.b16 %v2695, %v2687
    %v3208 = vpack.c.b16 %v2696, %v2688
    %v3209 = vpack.c.b16 %v2697, %v2689
    %v3210 = vpack.c.b16 %v2698, %v2690
    %v3211 = vpack.c.b16 %v2699, %v2691
    %v3212 = vpack.c.b16 %v2700, %v2692
    %v3213 = vpack.c.b16 %v2701, %v2693
    %v3214 = vpack.c.b16 %v2702, %v2694
    %3727 = vmatpush.bf16.msra.mxu0 %v2759
    %3728 = vmatpush.bf16.msra.mxu0 %v2751
    %3729 = vmatpush.bf16.msra.mxu0 %v2743
    %3730 = vmatpush.bf16.msra.mxu0 %v2735
    %3731 = vmatpush.bf16.msra.mxu0 %v2727
    %3732 = vmatpush.bf16.msra.mxu0 %v2719
    %3733 = vmatpush.bf16.msra.mxu0 %v2711
    %3734 = vmatpush.bf16.msra.mxu0 %v2703
    %3735 = vmatmul.bf16.gmra.mxu0 %v629
    %v3736 = vpop.f32.mrf.mxu0
    %v3737 = vadd.f32 %v1151, %v3736
    %v3738 = vpop.f32.mrf.mxu0
    %3739 = vdwg.mxu0
    %3740 = vmatpush.bf16.msra.mxu0 %v2823
    %3741 = vmatpush.bf16.msra.mxu0 %v2815
    %3742 = vmatpush.bf16.msra.mxu0 %v2807
    %3743 = vmatpush.bf16.msra.mxu0 %v2799
    %3744 = vmatpush.bf16.msra.mxu0 %v2791
    %3745 = vmatpush.bf16.msra.mxu0 %v2783
    %3746 = vmatpush.bf16.msra.mxu0 %v2775
    %3747 = vmatpush.bf16.msra.mxu0 %v2767
    %3748 = vmatmul.bf16.gmra.mxu0 %v630
    %v3749 = vpop.f32.mrf.mxu0
    %v3750 = vadd.f32 %v3737, %v3749
    %v3751 = vpop.f32.mrf.mxu0
    %3752 = vdwg.mxu0
    %3753 = vmatpush.bf16.msra.mxu0 %v2887
    %3754 = vmatpush.bf16.msra.mxu0 %v2879
    %3755 = vmatpush.bf16.msra.mxu0 %v2871
    %3756 = vmatpush.bf16.msra.mxu0 %v2863
    %3757 = vmatpush.bf16.msra.mxu0 %v2855
    %3758 = vmatpush.bf16.msra.mxu0 %v2847
    %3759 = vmatpush.bf16.msra.mxu0 %v2839
    %3760 = vmatpush.bf16.msra.mxu0 %v2831
    %3761 = vmatmul.bf16.gmra.mxu0 %v631
    %v3762 = vpop.f32.mrf.mxu0
    %v3763 = vadd.f32 %v3750, %v3762
    %v3764 = vpop.f32.mrf.mxu0
    %3765 = vdwg.mxu0
    %3766 = vmatpush.bf16.msra.mxu0 %v2951
    %3767 = vmatpush.bf16.msra.mxu0 %v2943
    %3768 = vmatpush.bf16.msra.mxu0 %v2935
    %3769 = vmatpush.bf16.msra.mxu0 %v2927
    %3770 = vmatpush.bf16.msra.mxu0 %v2919
    %3771 = vmatpush.bf16.msra.mxu0 %v2911
    %3772 = vmatpush.bf16.msra.mxu0 %v2903
    %3773 = vmatpush.bf16.msra.mxu0 %v2895
    %3774 = vmatmul.bf16.gmra.mxu0 %v632
    %v3775 = vpop.f32.mrf.mxu0
    %v3776 = vadd.f32 %v3763, %v3775
    %v3777 = vpop.f32.mrf.mxu0
    %3778 = vdwg.mxu0
    %3779 = vmatpush.bf16.msra.mxu0 %v3015
    %3780 = vmatpush.bf16.msra.mxu0 %v3007
    %3781 = vmatpush.bf16.msra.mxu0 %v2999
    %3782 = vmatpush.bf16.msra.mxu0 %v2991
    %3783 = vmatpush.bf16.msra.mxu0 %v2983
    %3784 = vmatpush.bf16.msra.mxu0 %v2975
    %3785 = vmatpush.bf16.msra.mxu0 %v2967
    %3786 = vmatpush.bf16.msra.mxu0 %v2959
    %3787 = vmatmul.bf16.gmra.mxu0 %v633
    %v3788 = vpop.f32.mrf.mxu0
    %v3789 = vadd.f32 %v3776, %v3788
    %v3790 = vpop.f32.mrf.mxu0
    %3791 = vdwg.mxu0
    %3792 = vmatpush.bf16.msra.mxu0 %v3079
    %3793 = vmatpush.bf16.msra.mxu0 %v3071
    %3794 = vmatpush.bf16.msra.mxu0 %v3063
    %3795 = vmatpush.bf16.msra.mxu0 %v3055
    %3796 = vmatpush.bf16.msra.mxu0 %v3047
    %3797 = vmatpush.bf16.msra.mxu0 %v3039
    %3798 = vmatpush.bf16.msra.mxu0 %v3031
    %3799 = vmatpush.bf16.msra.mxu0 %v3023
    %3800 = vmatmul.bf16.gmra.mxu0 %v634
    %v3801 = vpop.f32.mrf.mxu0
    %v3802 = vadd.f32 %v3789, %v3801
    %v3803 = vpop.f32.mrf.mxu0
    %3804 = vdwg.mxu0
    %3805 = vmatpush.bf16.msra.mxu0 %v3143
    %3806 = vmatpush.bf16.msra.mxu0 %v3135
    %3807 = vmatpush.bf16.msra.mxu0 %v3127
    %3808 = vmatpush.bf16.msra.mxu0 %v3119
    %3809 = vmatpush.bf16.msra.mxu0 %v3111
    %3810 = vmatpush.bf16.msra.mxu0 %v3103
    %3811 = vmatpush.bf16.msra.mxu0 %v3095
    %3812 = vmatpush.bf16.msra.mxu0 %v3087
    %3813 = vmatmul.bf16.gmra.mxu0 %v635
    %v3814 = vpop.f32.mrf.mxu0
    %v3815 = vadd.f32 %v3802, %v3814
    %v3816 = vpop.f32.mrf.mxu0
    %3817 = vdwg.mxu0
    %3818 = vmatpush.bf16.msra.mxu0 %v3207
    %3819 = vmatpush.bf16.msra.mxu0 %v3199
    %3820 = vmatpush.bf16.msra.mxu0 %v3191
    %3821 = vmatpush.bf16.msra.mxu0 %v3183
    %3822 = vmatpush.bf16.msra.mxu0 %v3175
    %3823 = vmatpush.bf16.msra.mxu0 %v3167
    %3824 = vmatpush.bf16.msra.mxu0 %v3159
    %3825 = vmatpush.bf16.msra.mxu0 %v3151
    %3826 = vmatmul.bf16.gmra.mxu0 %v636
    %v3827 = vpop.f32.mrf.mxu0
    %v3828 = vadd.f32 %v3815, %v3827
    %v3829 = vpop.f32.mrf.mxu0
    %3830 = vdwg.mxu0
    %3831 = vmatpush.bf16.msra.mxu0 %v2760
    %3832 = vmatpush.bf16.msra.mxu0 %v2752
    %3833 = vmatpush.bf16.msra.mxu0 %v2744
    %3834 = vmatpush.bf16.msra.mxu0 %v2736
    %3835 = vmatpush.bf16.msra.mxu0 %v2728
    %3836 = vmatpush.bf16.msra.mxu0 %v2720
    %3837 = vmatpush.bf16.msra.mxu0 %v2712
    %3838 = vmatpush.bf16.msra.mxu0 %v2704
    %3839 = vmatmul.bf16.gmra.mxu0 %v629
    %v3840 = vpop.f32.mrf.mxu0
    %v3841 = vadd.f32 %v1152, %v3840
    %v3842 = vpop.f32.mrf.mxu0
    %3843 = vdwg.mxu0
    %3844 = vmatpush.bf16.msra.mxu0 %v2824
    %3845 = vmatpush.bf16.msra.mxu0 %v2816
    %3846 = vmatpush.bf16.msra.mxu0 %v2808
    %3847 = vmatpush.bf16.msra.mxu0 %v2800
    %3848 = vmatpush.bf16.msra.mxu0 %v2792
    %3849 = vmatpush.bf16.msra.mxu0 %v2784
    %3850 = vmatpush.bf16.msra.mxu0 %v2776
    %3851 = vmatpush.bf16.msra.mxu0 %v2768
    %3852 = vmatmul.bf16.gmra.mxu0 %v630
    %v3853 = vpop.f32.mrf.mxu0
    %v3854 = vadd.f32 %v3841, %v3853
    %v3855 = vpop.f32.mrf.mxu0
    %3856 = vdwg.mxu0
    %3857 = vmatpush.bf16.msra.mxu0 %v2888
    %3858 = vmatpush.bf16.msra.mxu0 %v2880
    %3859 = vmatpush.bf16.msra.mxu0 %v2872
    %3860 = vmatpush.bf16.msra.mxu0 %v2864
    %3861 = vmatpush.bf16.msra.mxu0 %v2856
    %3862 = vmatpush.bf16.msra.mxu0 %v2848
    %3863 = vmatpush.bf16.msra.mxu0 %v2840
    %3864 = vmatpush.bf16.msra.mxu0 %v2832
    %3865 = vmatmul.bf16.gmra.mxu0 %v631
    %v3866 = vpop.f32.mrf.mxu0
    %v3867 = vadd.f32 %v3854, %v3866
    %v3868 = vpop.f32.mrf.mxu0
    %3869 = vdwg.mxu0
    %3870 = vmatpush.bf16.msra.mxu0 %v2952
    %3871 = vmatpush.bf16.msra.mxu0 %v2944
    %3872 = vmatpush.bf16.msra.mxu0 %v2936
    %3873 = vmatpush.bf16.msra.mxu0 %v2928
    %3874 = vmatpush.bf16.msra.mxu0 %v2920
    %3875 = vmatpush.bf16.msra.mxu0 %v2912
    %3876 = vmatpush.bf16.msra.mxu0 %v2904
    %3877 = vmatpush.bf16.msra.mxu0 %v2896
    %3878 = vmatmul.bf16.gmra.mxu0 %v632
    %v3879 = vpop.f32.mrf.mxu0
    %v3880 = vadd.f32 %v3867, %v3879
    %v3881 = vpop.f32.mrf.mxu0
    %3882 = vdwg.mxu0
    %3883 = vmatpush.bf16.msra.mxu0 %v3016
    %3884 = vmatpush.bf16.msra.mxu0 %v3008
    %3885 = vmatpush.bf16.msra.mxu0 %v3000
    %3886 = vmatpush.bf16.msra.mxu0 %v2992
    %3887 = vmatpush.bf16.msra.mxu0 %v2984
    %3888 = vmatpush.bf16.msra.mxu0 %v2976
    %3889 = vmatpush.bf16.msra.mxu0 %v2968
    %3890 = vmatpush.bf16.msra.mxu0 %v2960
    %3891 = vmatmul.bf16.gmra.mxu0 %v633
    %v3892 = vpop.f32.mrf.mxu0
    %v3893 = vadd.f32 %v3880, %v3892
    %v3894 = vpop.f32.mrf.mxu0
    %3895 = vdwg.mxu0
    %3896 = vmatpush.bf16.msra.mxu0 %v3080
    %3897 = vmatpush.bf16.msra.mxu0 %v3072
    %3898 = vmatpush.bf16.msra.mxu0 %v3064
    %3899 = vmatpush.bf16.msra.mxu0 %v3056
    %3900 = vmatpush.bf16.msra.mxu0 %v3048
    %3901 = vmatpush.bf16.msra.mxu0 %v3040
    %3902 = vmatpush.bf16.msra.mxu0 %v3032
    %3903 = vmatpush.bf16.msra.mxu0 %v3024
    %3904 = vmatmul.bf16.gmra.mxu0 %v634
    %v3905 = vpop.f32.mrf.mxu0
    %v3906 = vadd.f32 %v3893, %v3905
    %v3907 = vpop.f32.mrf.mxu0
    %3908 = vdwg.mxu0
    %3909 = vmatpush.bf16.msra.mxu0 %v3144
    %3910 = vmatpush.bf16.msra.mxu0 %v3136
    %3911 = vmatpush.bf16.msra.mxu0 %v3128
    %3912 = vmatpush.bf16.msra.mxu0 %v3120
    %3913 = vmatpush.bf16.msra.mxu0 %v3112
    %3914 = vmatpush.bf16.msra.mxu0 %v3104
    %3915 = vmatpush.bf16.msra.mxu0 %v3096
    %3916 = vmatpush.bf16.msra.mxu0 %v3088
    %3917 = vmatmul.bf16.gmra.mxu0 %v635
    %v3918 = vpop.f32.mrf.mxu0
    %v3919 = vadd.f32 %v3906, %v3918
    %v3920 = vpop.f32.mrf.mxu0
    %3921 = vdwg.mxu0
    %3922 = vmatpush.bf16.msra.mxu0 %v3208
    %3923 = vmatpush.bf16.msra.mxu0 %v3200
    %3924 = vmatpush.bf16.msra.mxu0 %v3192
    %3925 = vmatpush.bf16.msra.mxu0 %v3184
    %3926 = vmatpush.bf16.msra.mxu0 %v3176
    %3927 = vmatpush.bf16.msra.mxu0 %v3168
    %3928 = vmatpush.bf16.msra.mxu0 %v3160
    %3929 = vmatpush.bf16.msra.mxu0 %v3152
    %3930 = vmatmul.bf16.gmra.mxu0 %v636
    %v3931 = vpop.f32.mrf.mxu0
    %v3932 = vadd.f32 %v3919, %v3931
    %v3933 = vpop.f32.mrf.mxu0
    %3934 = vdwg.mxu0
    %3935 = vmatpush.bf16.msra.mxu0 %v2761
    %3936 = vmatpush.bf16.msra.mxu0 %v2753
    %3937 = vmatpush.bf16.msra.mxu0 %v2745
    %3938 = vmatpush.bf16.msra.mxu0 %v2737
    %3939 = vmatpush.bf16.msra.mxu0 %v2729
    %3940 = vmatpush.bf16.msra.mxu0 %v2721
    %3941 = vmatpush.bf16.msra.mxu0 %v2713
    %3942 = vmatpush.bf16.msra.mxu0 %v2705
    %3943 = vmatmul.bf16.gmra.mxu0 %v629
    %v3944 = vpop.f32.mrf.mxu0
    %v3945 = vadd.f32 %v1153, %v3944
    %v3946 = vpop.f32.mrf.mxu0
    %3947 = vdwg.mxu0
    %3948 = vmatpush.bf16.msra.mxu0 %v2825
    %3949 = vmatpush.bf16.msra.mxu0 %v2817
    %3950 = vmatpush.bf16.msra.mxu0 %v2809
    %3951 = vmatpush.bf16.msra.mxu0 %v2801
    %3952 = vmatpush.bf16.msra.mxu0 %v2793
    %3953 = vmatpush.bf16.msra.mxu0 %v2785
    %3954 = vmatpush.bf16.msra.mxu0 %v2777
    %3955 = vmatpush.bf16.msra.mxu0 %v2769
    %3956 = vmatmul.bf16.gmra.mxu0 %v630
    %v3957 = vpop.f32.mrf.mxu0
    %v3958 = vadd.f32 %v3945, %v3957
    %v3959 = vpop.f32.mrf.mxu0
    %3960 = vdwg.mxu0
    %3961 = vmatpush.bf16.msra.mxu0 %v2889
    %3962 = vmatpush.bf16.msra.mxu0 %v2881
    %3963 = vmatpush.bf16.msra.mxu0 %v2873
    %3964 = vmatpush.bf16.msra.mxu0 %v2865
    %3965 = vmatpush.bf16.msra.mxu0 %v2857
    %3966 = vmatpush.bf16.msra.mxu0 %v2849
    %3967 = vmatpush.bf16.msra.mxu0 %v2841
    %3968 = vmatpush.bf16.msra.mxu0 %v2833
    %3969 = vmatmul.bf16.gmra.mxu0 %v631
    %v3970 = vpop.f32.mrf.mxu0
    %v3971 = vadd.f32 %v3958, %v3970
    %v3972 = vpop.f32.mrf.mxu0
    %3973 = vdwg.mxu0
    %3974 = vmatpush.bf16.msra.mxu0 %v2953
    %3975 = vmatpush.bf16.msra.mxu0 %v2945
    %3976 = vmatpush.bf16.msra.mxu0 %v2937
    %3977 = vmatpush.bf16.msra.mxu0 %v2929
    %3978 = vmatpush.bf16.msra.mxu0 %v2921
    %3979 = vmatpush.bf16.msra.mxu0 %v2913
    %3980 = vmatpush.bf16.msra.mxu0 %v2905
    %3981 = vmatpush.bf16.msra.mxu0 %v2897
    %3982 = vmatmul.bf16.gmra.mxu0 %v632
    %v3983 = vpop.f32.mrf.mxu0
    %v3984 = vadd.f32 %v3971, %v3983
    %v3985 = vpop.f32.mrf.mxu0
    %3986 = vdwg.mxu0
    %3987 = vmatpush.bf16.msra.mxu0 %v3017
    %3988 = vmatpush.bf16.msra.mxu0 %v3009
    %3989 = vmatpush.bf16.msra.mxu0 %v3001
    %3990 = vmatpush.bf16.msra.mxu0 %v2993
    %3991 = vmatpush.bf16.msra.mxu0 %v2985
    %3992 = vmatpush.bf16.msra.mxu0 %v2977
    %3993 = vmatpush.bf16.msra.mxu0 %v2969
    %3994 = vmatpush.bf16.msra.mxu0 %v2961
    %3995 = vmatmul.bf16.gmra.mxu0 %v633
    %v3996 = vpop.f32.mrf.mxu0
    %v3997 = vadd.f32 %v3984, %v3996
    %v3998 = vpop.f32.mrf.mxu0
    %3999 = vdwg.mxu0
    %4000 = vmatpush.bf16.msra.mxu0 %v3081
    %4001 = vmatpush.bf16.msra.mxu0 %v3073
    %4002 = vmatpush.bf16.msra.mxu0 %v3065
    %4003 = vmatpush.bf16.msra.mxu0 %v3057
    %4004 = vmatpush.bf16.msra.mxu0 %v3049
    %4005 = vmatpush.bf16.msra.mxu0 %v3041
    %4006 = vmatpush.bf16.msra.mxu0 %v3033
    %4007 = vmatpush.bf16.msra.mxu0 %v3025
    %4008 = vmatmul.bf16.gmra.mxu0 %v634
    %v4009 = vpop.f32.mrf.mxu0
    %v4010 = vadd.f32 %v3997, %v4009
    %v4011 = vpop.f32.mrf.mxu0
    %4012 = vdwg.mxu0
    %4013 = vmatpush.bf16.msra.mxu0 %v3145
    %4014 = vmatpush.bf16.msra.mxu0 %v3137
    %4015 = vmatpush.bf16.msra.mxu0 %v3129
    %4016 = vmatpush.bf16.msra.mxu0 %v3121
    %4017 = vmatpush.bf16.msra.mxu0 %v3113
    %4018 = vmatpush.bf16.msra.mxu0 %v3105
    %4019 = vmatpush.bf16.msra.mxu0 %v3097
    %4020 = vmatpush.bf16.msra.mxu0 %v3089
    %4021 = vmatmul.bf16.gmra.mxu0 %v635
    %v4022 = vpop.f32.mrf.mxu0
    %v4023 = vadd.f32 %v4010, %v4022
    %v4024 = vpop.f32.mrf.mxu0
    %4025 = vdwg.mxu0
    %4026 = vmatpush.bf16.msra.mxu0 %v3209
    %4027 = vmatpush.bf16.msra.mxu0 %v3201
    %4028 = vmatpush.bf16.msra.mxu0 %v3193
    %4029 = vmatpush.bf16.msra.mxu0 %v3185
    %4030 = vmatpush.bf16.msra.mxu0 %v3177
    %4031 = vmatpush.bf16.msra.mxu0 %v3169
    %4032 = vmatpush.bf16.msra.mxu0 %v3161
    %4033 = vmatpush.bf16.msra.mxu0 %v3153
    %4034 = vmatmul.bf16.gmra.mxu0 %v636
    %v4035 = vpop.f32.mrf.mxu0
    %v4036 = vadd.f32 %v4023, %v4035
    %v4037 = vpop.f32.mrf.mxu0
    %4038 = vdwg.mxu0
    %4039 = vmatpush.bf16.msra.mxu0 %v2762
    %4040 = vmatpush.bf16.msra.mxu0 %v2754
    %4041 = vmatpush.bf16.msra.mxu0 %v2746
    %4042 = vmatpush.bf16.msra.mxu0 %v2738
    %4043 = vmatpush.bf16.msra.mxu0 %v2730
    %4044 = vmatpush.bf16.msra.mxu0 %v2722
    %4045 = vmatpush.bf16.msra.mxu0 %v2714
    %4046 = vmatpush.bf16.msra.mxu0 %v2706
    %4047 = vmatmul.bf16.gmra.mxu0 %v629
    %v4048 = vpop.f32.mrf.mxu0
    %v4049 = vadd.f32 %v1154, %v4048
    %v4050 = vpop.f32.mrf.mxu0
    %4051 = vdwg.mxu0
    %4052 = vmatpush.bf16.msra.mxu0 %v2826
    %4053 = vmatpush.bf16.msra.mxu0 %v2818
    %4054 = vmatpush.bf16.msra.mxu0 %v2810
    %4055 = vmatpush.bf16.msra.mxu0 %v2802
    %4056 = vmatpush.bf16.msra.mxu0 %v2794
    %4057 = vmatpush.bf16.msra.mxu0 %v2786
    %4058 = vmatpush.bf16.msra.mxu0 %v2778
    %4059 = vmatpush.bf16.msra.mxu0 %v2770
    %4060 = vmatmul.bf16.gmra.mxu0 %v630
    %v4061 = vpop.f32.mrf.mxu0
    %v4062 = vadd.f32 %v4049, %v4061
    %v4063 = vpop.f32.mrf.mxu0
    %4064 = vdwg.mxu0
    %4065 = vmatpush.bf16.msra.mxu0 %v2890
    %4066 = vmatpush.bf16.msra.mxu0 %v2882
    %4067 = vmatpush.bf16.msra.mxu0 %v2874
    %4068 = vmatpush.bf16.msra.mxu0 %v2866
    %4069 = vmatpush.bf16.msra.mxu0 %v2858
    %4070 = vmatpush.bf16.msra.mxu0 %v2850
    %4071 = vmatpush.bf16.msra.mxu0 %v2842
    %4072 = vmatpush.bf16.msra.mxu0 %v2834
    %4073 = vmatmul.bf16.gmra.mxu0 %v631
    %v4074 = vpop.f32.mrf.mxu0
    %v4075 = vadd.f32 %v4062, %v4074
    %v4076 = vpop.f32.mrf.mxu0
    %4077 = vdwg.mxu0
    %4078 = vmatpush.bf16.msra.mxu0 %v2954
    %4079 = vmatpush.bf16.msra.mxu0 %v2946
    %4080 = vmatpush.bf16.msra.mxu0 %v2938
    %4081 = vmatpush.bf16.msra.mxu0 %v2930
    %4082 = vmatpush.bf16.msra.mxu0 %v2922
    %4083 = vmatpush.bf16.msra.mxu0 %v2914
    %4084 = vmatpush.bf16.msra.mxu0 %v2906
    %4085 = vmatpush.bf16.msra.mxu0 %v2898
    %4086 = vmatmul.bf16.gmra.mxu0 %v632
    %v4087 = vpop.f32.mrf.mxu0
    %v4088 = vadd.f32 %v4075, %v4087
    %v4089 = vpop.f32.mrf.mxu0
    %4090 = vdwg.mxu0
    %4091 = vmatpush.bf16.msra.mxu0 %v3018
    %4092 = vmatpush.bf16.msra.mxu0 %v3010
    %4093 = vmatpush.bf16.msra.mxu0 %v3002
    %4094 = vmatpush.bf16.msra.mxu0 %v2994
    %4095 = vmatpush.bf16.msra.mxu0 %v2986
    %4096 = vmatpush.bf16.msra.mxu0 %v2978
    %4097 = vmatpush.bf16.msra.mxu0 %v2970
    %4098 = vmatpush.bf16.msra.mxu0 %v2962
    %4099 = vmatmul.bf16.gmra.mxu0 %v633
    %v4100 = vpop.f32.mrf.mxu0
    %v4101 = vadd.f32 %v4088, %v4100
    %v4102 = vpop.f32.mrf.mxu0
    %4103 = vdwg.mxu0
    %4104 = vmatpush.bf16.msra.mxu0 %v3082
    %4105 = vmatpush.bf16.msra.mxu0 %v3074
    %4106 = vmatpush.bf16.msra.mxu0 %v3066
    %4107 = vmatpush.bf16.msra.mxu0 %v3058
    %4108 = vmatpush.bf16.msra.mxu0 %v3050
    %4109 = vmatpush.bf16.msra.mxu0 %v3042
    %4110 = vmatpush.bf16.msra.mxu0 %v3034
    %4111 = vmatpush.bf16.msra.mxu0 %v3026
    %4112 = vmatmul.bf16.gmra.mxu0 %v634
    %v4113 = vpop.f32.mrf.mxu0
    %v4114 = vadd.f32 %v4101, %v4113
    %v4115 = vpop.f32.mrf.mxu0
    %4116 = vdwg.mxu0
    %4117 = vmatpush.bf16.msra.mxu0 %v3146
    %4118 = vmatpush.bf16.msra.mxu0 %v3138
    %4119 = vmatpush.bf16.msra.mxu0 %v3130
    %4120 = vmatpush.bf16.msra.mxu0 %v3122
    %4121 = vmatpush.bf16.msra.mxu0 %v3114
    %4122 = vmatpush.bf16.msra.mxu0 %v3106
    %4123 = vmatpush.bf16.msra.mxu0 %v3098
    %4124 = vmatpush.bf16.msra.mxu0 %v3090
    %4125 = vmatmul.bf16.gmra.mxu0 %v635
    %v4126 = vpop.f32.mrf.mxu0
    %v4127 = vadd.f32 %v4114, %v4126
    %v4128 = vpop.f32.mrf.mxu0
    %4129 = vdwg.mxu0
    %4130 = vmatpush.bf16.msra.mxu0 %v3210
    %4131 = vmatpush.bf16.msra.mxu0 %v3202
    %4132 = vmatpush.bf16.msra.mxu0 %v3194
    %4133 = vmatpush.bf16.msra.mxu0 %v3186
    %4134 = vmatpush.bf16.msra.mxu0 %v3178
    %4135 = vmatpush.bf16.msra.mxu0 %v3170
    %4136 = vmatpush.bf16.msra.mxu0 %v3162
    %4137 = vmatpush.bf16.msra.mxu0 %v3154
    %4138 = vmatmul.bf16.gmra.mxu0 %v636
    %v4139 = vpop.f32.mrf.mxu0
    %v4140 = vadd.f32 %v4127, %v4139
    %v4141 = vpop.f32.mrf.mxu0
    %4142 = vdwg.mxu0
    %4143 = vmatpush.bf16.msra.mxu0 %v2763
    %4144 = vmatpush.bf16.msra.mxu0 %v2755
    %4145 = vmatpush.bf16.msra.mxu0 %v2747
    %4146 = vmatpush.bf16.msra.mxu0 %v2739
    %4147 = vmatpush.bf16.msra.mxu0 %v2731
    %4148 = vmatpush.bf16.msra.mxu0 %v2723
    %4149 = vmatpush.bf16.msra.mxu0 %v2715
    %4150 = vmatpush.bf16.msra.mxu0 %v2707
    %4151 = vmatmul.bf16.gmra.mxu0 %v629
    %v4152 = vpop.f32.mrf.mxu0
    %v4153 = vadd.f32 %v1155, %v4152
    %v4154 = vpop.f32.mrf.mxu0
    %4155 = vdwg.mxu0
    %4156 = vmatpush.bf16.msra.mxu0 %v2827
    %4157 = vmatpush.bf16.msra.mxu0 %v2819
    %4158 = vmatpush.bf16.msra.mxu0 %v2811
    %4159 = vmatpush.bf16.msra.mxu0 %v2803
    %4160 = vmatpush.bf16.msra.mxu0 %v2795
    %4161 = vmatpush.bf16.msra.mxu0 %v2787
    %4162 = vmatpush.bf16.msra.mxu0 %v2779
    %4163 = vmatpush.bf16.msra.mxu0 %v2771
    %4164 = vmatmul.bf16.gmra.mxu0 %v630
    %v4165 = vpop.f32.mrf.mxu0
    %v4166 = vadd.f32 %v4153, %v4165
    %v4167 = vpop.f32.mrf.mxu0
    %4168 = vdwg.mxu0
    %4169 = vmatpush.bf16.msra.mxu0 %v2891
    %4170 = vmatpush.bf16.msra.mxu0 %v2883
    %4171 = vmatpush.bf16.msra.mxu0 %v2875
    %4172 = vmatpush.bf16.msra.mxu0 %v2867
    %4173 = vmatpush.bf16.msra.mxu0 %v2859
    %4174 = vmatpush.bf16.msra.mxu0 %v2851
    %4175 = vmatpush.bf16.msra.mxu0 %v2843
    %4176 = vmatpush.bf16.msra.mxu0 %v2835
    %4177 = vmatmul.bf16.gmra.mxu0 %v631
    %v4178 = vpop.f32.mrf.mxu0
    %v4179 = vadd.f32 %v4166, %v4178
    %v4180 = vpop.f32.mrf.mxu0
    %4181 = vdwg.mxu0
    %4182 = vmatpush.bf16.msra.mxu0 %v2955
    %4183 = vmatpush.bf16.msra.mxu0 %v2947
    %4184 = vmatpush.bf16.msra.mxu0 %v2939
    %4185 = vmatpush.bf16.msra.mxu0 %v2931
    %4186 = vmatpush.bf16.msra.mxu0 %v2923
    %4187 = vmatpush.bf16.msra.mxu0 %v2915
    %4188 = vmatpush.bf16.msra.mxu0 %v2907
    %4189 = vmatpush.bf16.msra.mxu0 %v2899
    %4190 = vmatmul.bf16.gmra.mxu0 %v632
    %v4191 = vpop.f32.mrf.mxu0
    %v4192 = vadd.f32 %v4179, %v4191
    %v4193 = vpop.f32.mrf.mxu0
    %4194 = vdwg.mxu0
    %4195 = vmatpush.bf16.msra.mxu0 %v3019
    %4196 = vmatpush.bf16.msra.mxu0 %v3011
    %4197 = vmatpush.bf16.msra.mxu0 %v3003
    %4198 = vmatpush.bf16.msra.mxu0 %v2995
    %4199 = vmatpush.bf16.msra.mxu0 %v2987
    %4200 = vmatpush.bf16.msra.mxu0 %v2979
    %4201 = vmatpush.bf16.msra.mxu0 %v2971
    %4202 = vmatpush.bf16.msra.mxu0 %v2963
    %4203 = vmatmul.bf16.gmra.mxu0 %v633
    %v4204 = vpop.f32.mrf.mxu0
    %v4205 = vadd.f32 %v4192, %v4204
    %v4206 = vpop.f32.mrf.mxu0
    %4207 = vdwg.mxu0
    %4208 = vmatpush.bf16.msra.mxu0 %v3083
    %4209 = vmatpush.bf16.msra.mxu0 %v3075
    %4210 = vmatpush.bf16.msra.mxu0 %v3067
    %4211 = vmatpush.bf16.msra.mxu0 %v3059
    %4212 = vmatpush.bf16.msra.mxu0 %v3051
    %4213 = vmatpush.bf16.msra.mxu0 %v3043
    %4214 = vmatpush.bf16.msra.mxu0 %v3035
    %4215 = vmatpush.bf16.msra.mxu0 %v3027
    %4216 = vmatmul.bf16.gmra.mxu0 %v634
    %v4217 = vpop.f32.mrf.mxu0
    %v4218 = vadd.f32 %v4205, %v4217
    %v4219 = vpop.f32.mrf.mxu0
    %4220 = vdwg.mxu0
    %4221 = vmatpush.bf16.msra.mxu0 %v3147
    %4222 = vmatpush.bf16.msra.mxu0 %v3139
    %4223 = vmatpush.bf16.msra.mxu0 %v3131
    %4224 = vmatpush.bf16.msra.mxu0 %v3123
    %4225 = vmatpush.bf16.msra.mxu0 %v3115
    %4226 = vmatpush.bf16.msra.mxu0 %v3107
    %4227 = vmatpush.bf16.msra.mxu0 %v3099
    %4228 = vmatpush.bf16.msra.mxu0 %v3091
    %4229 = vmatmul.bf16.gmra.mxu0 %v635
    %v4230 = vpop.f32.mrf.mxu0
    %v4231 = vadd.f32 %v4218, %v4230
    %v4232 = vpop.f32.mrf.mxu0
    %4233 = vdwg.mxu0
    %4234 = vmatpush.bf16.msra.mxu0 %v3211
    %4235 = vmatpush.bf16.msra.mxu0 %v3203
    %4236 = vmatpush.bf16.msra.mxu0 %v3195
    %4237 = vmatpush.bf16.msra.mxu0 %v3187
    %4238 = vmatpush.bf16.msra.mxu0 %v3179
    %4239 = vmatpush.bf16.msra.mxu0 %v3171
    %4240 = vmatpush.bf16.msra.mxu0 %v3163
    %4241 = vmatpush.bf16.msra.mxu0 %v3155
    %4242 = vmatmul.bf16.gmra.mxu0 %v636
    %v4243 = vpop.f32.mrf.mxu0
    %v4244 = vadd.f32 %v4231, %v4243
    %v4245 = vpop.f32.mrf.mxu0
    %4246 = vdwg.mxu0
    %4247 = vmatpush.bf16.msra.mxu0 %v2764
    %4248 = vmatpush.bf16.msra.mxu0 %v2756
    %4249 = vmatpush.bf16.msra.mxu0 %v2748
    %4250 = vmatpush.bf16.msra.mxu0 %v2740
    %4251 = vmatpush.bf16.msra.mxu0 %v2732
    %4252 = vmatpush.bf16.msra.mxu0 %v2724
    %4253 = vmatpush.bf16.msra.mxu0 %v2716
    %4254 = vmatpush.bf16.msra.mxu0 %v2708
    %4255 = vmatmul.bf16.gmra.mxu0 %v629
    %v4256 = vpop.f32.mrf.mxu0
    %v4257 = vadd.f32 %v1156, %v4256
    %v4258 = vpop.f32.mrf.mxu0
    %4259 = vdwg.mxu0
    %4260 = vmatpush.bf16.msra.mxu0 %v2828
    %4261 = vmatpush.bf16.msra.mxu0 %v2820
    %4262 = vmatpush.bf16.msra.mxu0 %v2812
    %4263 = vmatpush.bf16.msra.mxu0 %v2804
    %4264 = vmatpush.bf16.msra.mxu0 %v2796
    %4265 = vmatpush.bf16.msra.mxu0 %v2788
    %4266 = vmatpush.bf16.msra.mxu0 %v2780
    %4267 = vmatpush.bf16.msra.mxu0 %v2772
    %4268 = vmatmul.bf16.gmra.mxu0 %v630
    %v4269 = vpop.f32.mrf.mxu0
    %v4270 = vadd.f32 %v4257, %v4269
    %v4271 = vpop.f32.mrf.mxu0
    %4272 = vdwg.mxu0
    %4273 = vmatpush.bf16.msra.mxu0 %v2892
    %4274 = vmatpush.bf16.msra.mxu0 %v2884
    %4275 = vmatpush.bf16.msra.mxu0 %v2876
    %4276 = vmatpush.bf16.msra.mxu0 %v2868
    %4277 = vmatpush.bf16.msra.mxu0 %v2860
    %4278 = vmatpush.bf16.msra.mxu0 %v2852
    %4279 = vmatpush.bf16.msra.mxu0 %v2844
    %4280 = vmatpush.bf16.msra.mxu0 %v2836
    %4281 = vmatmul.bf16.gmra.mxu0 %v631
    %v4282 = vpop.f32.mrf.mxu0
    %v4283 = vadd.f32 %v4270, %v4282
    %v4284 = vpop.f32.mrf.mxu0
    %4285 = vdwg.mxu0
    %4286 = vmatpush.bf16.msra.mxu0 %v2956
    %4287 = vmatpush.bf16.msra.mxu0 %v2948
    %4288 = vmatpush.bf16.msra.mxu0 %v2940
    %4289 = vmatpush.bf16.msra.mxu0 %v2932
    %4290 = vmatpush.bf16.msra.mxu0 %v2924
    %4291 = vmatpush.bf16.msra.mxu0 %v2916
    %4292 = vmatpush.bf16.msra.mxu0 %v2908
    %4293 = vmatpush.bf16.msra.mxu0 %v2900
    %4294 = vmatmul.bf16.gmra.mxu0 %v632
    %v4295 = vpop.f32.mrf.mxu0
    %v4296 = vadd.f32 %v4283, %v4295
    %v4297 = vpop.f32.mrf.mxu0
    %4298 = vdwg.mxu0
    %4299 = vmatpush.bf16.msra.mxu0 %v3020
    %4300 = vmatpush.bf16.msra.mxu0 %v3012
    %4301 = vmatpush.bf16.msra.mxu0 %v3004
    %4302 = vmatpush.bf16.msra.mxu0 %v2996
    %4303 = vmatpush.bf16.msra.mxu0 %v2988
    %4304 = vmatpush.bf16.msra.mxu0 %v2980
    %4305 = vmatpush.bf16.msra.mxu0 %v2972
    %4306 = vmatpush.bf16.msra.mxu0 %v2964
    %4307 = vmatmul.bf16.gmra.mxu0 %v633
    %v4308 = vpop.f32.mrf.mxu0
    %v4309 = vadd.f32 %v4296, %v4308
    %v4310 = vpop.f32.mrf.mxu0
    %4311 = vdwg.mxu0
    %4312 = vmatpush.bf16.msra.mxu0 %v3084
    %4313 = vmatpush.bf16.msra.mxu0 %v3076
    %4314 = vmatpush.bf16.msra.mxu0 %v3068
    %4315 = vmatpush.bf16.msra.mxu0 %v3060
    %4316 = vmatpush.bf16.msra.mxu0 %v3052
    %4317 = vmatpush.bf16.msra.mxu0 %v3044
    %4318 = vmatpush.bf16.msra.mxu0 %v3036
    %4319 = vmatpush.bf16.msra.mxu0 %v3028
    %4320 = vmatmul.bf16.gmra.mxu0 %v634
    %v4321 = vpop.f32.mrf.mxu0
    %v4322 = vadd.f32 %v4309, %v4321
    %v4323 = vpop.f32.mrf.mxu0
    %4324 = vdwg.mxu0
    %4325 = vmatpush.bf16.msra.mxu0 %v3148
    %4326 = vmatpush.bf16.msra.mxu0 %v3140
    %4327 = vmatpush.bf16.msra.mxu0 %v3132
    %4328 = vmatpush.bf16.msra.mxu0 %v3124
    %4329 = vmatpush.bf16.msra.mxu0 %v3116
    %4330 = vmatpush.bf16.msra.mxu0 %v3108
    %4331 = vmatpush.bf16.msra.mxu0 %v3100
    %4332 = vmatpush.bf16.msra.mxu0 %v3092
    %4333 = vmatmul.bf16.gmra.mxu0 %v635
    %v4334 = vpop.f32.mrf.mxu0
    %v4335 = vadd.f32 %v4322, %v4334
    %v4336 = vpop.f32.mrf.mxu0
    %4337 = vdwg.mxu0
    %4338 = vmatpush.bf16.msra.mxu0 %v3212
    %4339 = vmatpush.bf16.msra.mxu0 %v3204
    %4340 = vmatpush.bf16.msra.mxu0 %v3196
    %4341 = vmatpush.bf16.msra.mxu0 %v3188
    %4342 = vmatpush.bf16.msra.mxu0 %v3180
    %4343 = vmatpush.bf16.msra.mxu0 %v3172
    %4344 = vmatpush.bf16.msra.mxu0 %v3164
    %4345 = vmatpush.bf16.msra.mxu0 %v3156
    %4346 = vmatmul.bf16.gmra.mxu0 %v636
    %v4347 = vpop.f32.mrf.mxu0
    %v4348 = vadd.f32 %v4335, %v4347
    %v4349 = vpop.f32.mrf.mxu0
    %4350 = vdwg.mxu0
    %4351 = vmatpush.bf16.msra.mxu0 %v2765
    %4352 = vmatpush.bf16.msra.mxu0 %v2757
    %4353 = vmatpush.bf16.msra.mxu0 %v2749
    %4354 = vmatpush.bf16.msra.mxu0 %v2741
    %4355 = vmatpush.bf16.msra.mxu0 %v2733
    %4356 = vmatpush.bf16.msra.mxu0 %v2725
    %4357 = vmatpush.bf16.msra.mxu0 %v2717
    %4358 = vmatpush.bf16.msra.mxu0 %v2709
    %4359 = vmatmul.bf16.gmra.mxu0 %v629
    %v4360 = vpop.f32.mrf.mxu0
    %v4361 = vadd.f32 %v1157, %v4360
    %v4362 = vpop.f32.mrf.mxu0
    %4363 = vdwg.mxu0
    %4364 = vmatpush.bf16.msra.mxu0 %v2829
    %4365 = vmatpush.bf16.msra.mxu0 %v2821
    %4366 = vmatpush.bf16.msra.mxu0 %v2813
    %4367 = vmatpush.bf16.msra.mxu0 %v2805
    %4368 = vmatpush.bf16.msra.mxu0 %v2797
    %4369 = vmatpush.bf16.msra.mxu0 %v2789
    %4370 = vmatpush.bf16.msra.mxu0 %v2781
    %4371 = vmatpush.bf16.msra.mxu0 %v2773
    %4372 = vmatmul.bf16.gmra.mxu0 %v630
    %v4373 = vpop.f32.mrf.mxu0
    %v4374 = vadd.f32 %v4361, %v4373
    %v4375 = vpop.f32.mrf.mxu0
    %4376 = vdwg.mxu0
    %4377 = vmatpush.bf16.msra.mxu0 %v2893
    %4378 = vmatpush.bf16.msra.mxu0 %v2885
    %4379 = vmatpush.bf16.msra.mxu0 %v2877
    %4380 = vmatpush.bf16.msra.mxu0 %v2869
    %4381 = vmatpush.bf16.msra.mxu0 %v2861
    %4382 = vmatpush.bf16.msra.mxu0 %v2853
    %4383 = vmatpush.bf16.msra.mxu0 %v2845
    %4384 = vmatpush.bf16.msra.mxu0 %v2837
    %4385 = vmatmul.bf16.gmra.mxu0 %v631
    %v4386 = vpop.f32.mrf.mxu0
    %v4387 = vadd.f32 %v4374, %v4386
    %v4388 = vpop.f32.mrf.mxu0
    %4389 = vdwg.mxu0
    %4390 = vmatpush.bf16.msra.mxu0 %v2957
    %4391 = vmatpush.bf16.msra.mxu0 %v2949
    %4392 = vmatpush.bf16.msra.mxu0 %v2941
    %4393 = vmatpush.bf16.msra.mxu0 %v2933
    %4394 = vmatpush.bf16.msra.mxu0 %v2925
    %4395 = vmatpush.bf16.msra.mxu0 %v2917
    %4396 = vmatpush.bf16.msra.mxu0 %v2909
    %4397 = vmatpush.bf16.msra.mxu0 %v2901
    %4398 = vmatmul.bf16.gmra.mxu0 %v632
    %v4399 = vpop.f32.mrf.mxu0
    %v4400 = vadd.f32 %v4387, %v4399
    %v4401 = vpop.f32.mrf.mxu0
    %4402 = vdwg.mxu0
    %4403 = vmatpush.bf16.msra.mxu0 %v3021
    %4404 = vmatpush.bf16.msra.mxu0 %v3013
    %4405 = vmatpush.bf16.msra.mxu0 %v3005
    %4406 = vmatpush.bf16.msra.mxu0 %v2997
    %4407 = vmatpush.bf16.msra.mxu0 %v2989
    %4408 = vmatpush.bf16.msra.mxu0 %v2981
    %4409 = vmatpush.bf16.msra.mxu0 %v2973
    %4410 = vmatpush.bf16.msra.mxu0 %v2965
    %4411 = vmatmul.bf16.gmra.mxu0 %v633
    %v4412 = vpop.f32.mrf.mxu0
    %v4413 = vadd.f32 %v4400, %v4412
    %v4414 = vpop.f32.mrf.mxu0
    %4415 = vdwg.mxu0
    %4416 = vmatpush.bf16.msra.mxu0 %v3085
    %4417 = vmatpush.bf16.msra.mxu0 %v3077
    %4418 = vmatpush.bf16.msra.mxu0 %v3069
    %4419 = vmatpush.bf16.msra.mxu0 %v3061
    %4420 = vmatpush.bf16.msra.mxu0 %v3053
    %4421 = vmatpush.bf16.msra.mxu0 %v3045
    %4422 = vmatpush.bf16.msra.mxu0 %v3037
    %4423 = vmatpush.bf16.msra.mxu0 %v3029
    %4424 = vmatmul.bf16.gmra.mxu0 %v634
    %v4425 = vpop.f32.mrf.mxu0
    %v4426 = vadd.f32 %v4413, %v4425
    %v4427 = vpop.f32.mrf.mxu0
    %4428 = vdwg.mxu0
    %4429 = vmatpush.bf16.msra.mxu0 %v3149
    %4430 = vmatpush.bf16.msra.mxu0 %v3141
    %4431 = vmatpush.bf16.msra.mxu0 %v3133
    %4432 = vmatpush.bf16.msra.mxu0 %v3125
    %4433 = vmatpush.bf16.msra.mxu0 %v3117
    %4434 = vmatpush.bf16.msra.mxu0 %v3109
    %4435 = vmatpush.bf16.msra.mxu0 %v3101
    %4436 = vmatpush.bf16.msra.mxu0 %v3093
    %4437 = vmatmul.bf16.gmra.mxu0 %v635
    %v4438 = vpop.f32.mrf.mxu0
    %v4439 = vadd.f32 %v4426, %v4438
    %v4440 = vpop.f32.mrf.mxu0
    %4441 = vdwg.mxu0
    %4442 = vmatpush.bf16.msra.mxu0 %v3213
    %4443 = vmatpush.bf16.msra.mxu0 %v3205
    %4444 = vmatpush.bf16.msra.mxu0 %v3197
    %4445 = vmatpush.bf16.msra.mxu0 %v3189
    %4446 = vmatpush.bf16.msra.mxu0 %v3181
    %4447 = vmatpush.bf16.msra.mxu0 %v3173
    %4448 = vmatpush.bf16.msra.mxu0 %v3165
    %4449 = vmatpush.bf16.msra.mxu0 %v3157
    %4450 = vmatmul.bf16.gmra.mxu0 %v636
    %v4451 = vpop.f32.mrf.mxu0
    %v4452 = vadd.f32 %v4439, %v4451
    %v4453 = vpop.f32.mrf.mxu0
    %4454 = vdwg.mxu0
    %4455 = vmatpush.bf16.msra.mxu0 %v2766
    %4456 = vmatpush.bf16.msra.mxu0 %v2758
    %4457 = vmatpush.bf16.msra.mxu0 %v2750
    %4458 = vmatpush.bf16.msra.mxu0 %v2742
    %4459 = vmatpush.bf16.msra.mxu0 %v2734
    %4460 = vmatpush.bf16.msra.mxu0 %v2726
    %4461 = vmatpush.bf16.msra.mxu0 %v2718
    %4462 = vmatpush.bf16.msra.mxu0 %v2710
    %4463 = vmatmul.bf16.gmra.mxu0 %v629
    %v4464 = vpop.f32.mrf.mxu0
    %v4465 = vadd.f32 %v1158, %v4464
    %v4466 = vpop.f32.mrf.mxu0
    %4467 = vdwg.mxu0
    %4468 = vmatpush.bf16.msra.mxu0 %v2830
    %4469 = vmatpush.bf16.msra.mxu0 %v2822
    %4470 = vmatpush.bf16.msra.mxu0 %v2814
    %4471 = vmatpush.bf16.msra.mxu0 %v2806
    %4472 = vmatpush.bf16.msra.mxu0 %v2798
    %4473 = vmatpush.bf16.msra.mxu0 %v2790
    %4474 = vmatpush.bf16.msra.mxu0 %v2782
    %4475 = vmatpush.bf16.msra.mxu0 %v2774
    %4476 = vmatmul.bf16.gmra.mxu0 %v630
    %v4477 = vpop.f32.mrf.mxu0
    %v4478 = vadd.f32 %v4465, %v4477
    %v4479 = vpop.f32.mrf.mxu0
    %4480 = vdwg.mxu0
    %4481 = vmatpush.bf16.msra.mxu0 %v2894
    %4482 = vmatpush.bf16.msra.mxu0 %v2886
    %4483 = vmatpush.bf16.msra.mxu0 %v2878
    %4484 = vmatpush.bf16.msra.mxu0 %v2870
    %4485 = vmatpush.bf16.msra.mxu0 %v2862
    %4486 = vmatpush.bf16.msra.mxu0 %v2854
    %4487 = vmatpush.bf16.msra.mxu0 %v2846
    %4488 = vmatpush.bf16.msra.mxu0 %v2838
    %4489 = vmatmul.bf16.gmra.mxu0 %v631
    %v4490 = vpop.f32.mrf.mxu0
    %v4491 = vadd.f32 %v4478, %v4490
    %v4492 = vpop.f32.mrf.mxu0
    %4493 = vdwg.mxu0
    %4494 = vmatpush.bf16.msra.mxu0 %v2958
    %4495 = vmatpush.bf16.msra.mxu0 %v2950
    %4496 = vmatpush.bf16.msra.mxu0 %v2942
    %4497 = vmatpush.bf16.msra.mxu0 %v2934
    %4498 = vmatpush.bf16.msra.mxu0 %v2926
    %4499 = vmatpush.bf16.msra.mxu0 %v2918
    %4500 = vmatpush.bf16.msra.mxu0 %v2910
    %4501 = vmatpush.bf16.msra.mxu0 %v2902
    %4502 = vmatmul.bf16.gmra.mxu0 %v632
    %v4503 = vpop.f32.mrf.mxu0
    %v4504 = vadd.f32 %v4491, %v4503
    %v4505 = vpop.f32.mrf.mxu0
    %4506 = vdwg.mxu0
    %4507 = vmatpush.bf16.msra.mxu0 %v3022
    %4508 = vmatpush.bf16.msra.mxu0 %v3014
    %4509 = vmatpush.bf16.msra.mxu0 %v3006
    %4510 = vmatpush.bf16.msra.mxu0 %v2998
    %4511 = vmatpush.bf16.msra.mxu0 %v2990
    %4512 = vmatpush.bf16.msra.mxu0 %v2982
    %4513 = vmatpush.bf16.msra.mxu0 %v2974
    %4514 = vmatpush.bf16.msra.mxu0 %v2966
    %4515 = vmatmul.bf16.gmra.mxu0 %v633
    %v4516 = vpop.f32.mrf.mxu0
    %v4517 = vadd.f32 %v4504, %v4516
    %v4518 = vpop.f32.mrf.mxu0
    %4519 = vdwg.mxu0
    %4520 = vmatpush.bf16.msra.mxu0 %v3086
    %4521 = vmatpush.bf16.msra.mxu0 %v3078
    %4522 = vmatpush.bf16.msra.mxu0 %v3070
    %4523 = vmatpush.bf16.msra.mxu0 %v3062
    %4524 = vmatpush.bf16.msra.mxu0 %v3054
    %4525 = vmatpush.bf16.msra.mxu0 %v3046
    %4526 = vmatpush.bf16.msra.mxu0 %v3038
    %4527 = vmatpush.bf16.msra.mxu0 %v3030
    %4528 = vmatmul.bf16.gmra.mxu0 %v634
    %v4529 = vpop.f32.mrf.mxu0
    %v4530 = vadd.f32 %v4517, %v4529
    %v4531 = vpop.f32.mrf.mxu0
    %4532 = vdwg.mxu0
    %4533 = vmatpush.bf16.msra.mxu0 %v3150
    %4534 = vmatpush.bf16.msra.mxu0 %v3142
    %4535 = vmatpush.bf16.msra.mxu0 %v3134
    %4536 = vmatpush.bf16.msra.mxu0 %v3126
    %4537 = vmatpush.bf16.msra.mxu0 %v3118
    %4538 = vmatpush.bf16.msra.mxu0 %v3110
    %4539 = vmatpush.bf16.msra.mxu0 %v3102
    %4540 = vmatpush.bf16.msra.mxu0 %v3094
    %4541 = vmatmul.bf16.gmra.mxu0 %v635
    %v4542 = vpop.f32.mrf.mxu0
    %v4543 = vadd.f32 %v4530, %v4542
    %v4544 = vpop.f32.mrf.mxu0
    %4545 = vdwg.mxu0
    %4546 = vmatpush.bf16.msra.mxu0 %v3214
    %4547 = vmatpush.bf16.msra.mxu0 %v3206
    %4548 = vmatpush.bf16.msra.mxu0 %v3198
    %4549 = vmatpush.bf16.msra.mxu0 %v3190
    %4550 = vmatpush.bf16.msra.mxu0 %v3182
    %4551 = vmatpush.bf16.msra.mxu0 %v3174
    %4552 = vmatpush.bf16.msra.mxu0 %v3166
    %4553 = vmatpush.bf16.msra.mxu0 %v3158
    %4554 = vmatmul.bf16.gmra.mxu0 %v636
    %v4555 = vpop.f32.mrf.mxu0
    %v4556 = vadd.f32 %v4543, %v4555
    %v4557 = vpop.f32.mrf.mxu0
    %4558 = vdwg.mxu0
    %v4559 = vmax.f32 %v3828, 0.0
    %v4560 = vmax.f32 %v3932, 0.0
    %v4561 = vmax.f32 %v4036, 0.0
    %v4562 = vmax.f32 %v4140, 0.0
    %v4563 = vmax.f32 %v4244, 0.0
    %v4564 = vmax.f32 %v4348, 0.0
    %v4565 = vmax.f32 %v4452, 0.0
    %v4566 = vmax.f32 %v4556, 0.0
    %v4567 = vpack.c.bf16 %v4559, %v4559
    %v4568 = vpack.c.bf16 %v4560, %v4560
    %v4569 = vpack.c.bf16 %v4561, %v4561
    %v4570 = vpack.c.bf16 %v4562, %v4562
    %v4571 = vpack.c.bf16 %v4563, %v4563
    %v4572 = vpack.c.bf16 %v4564, %v4564
    %v4573 = vpack.c.bf16 %v4565, %v4565
    %v4574 = vpack.c.bf16 %v4566, %v4566
    %v4575 = vld [vmem:[#allocation9] sm:$0xff]
    %v4576 = vld [vmem:[#allocation9 + $0x8] sm:$0xff]
    %v4577 = vld [vmem:[#allocation9 + $0x10] sm:$0xff]
    %v4578 = vld [vmem:[#allocation9 + $0x18] sm:$0xff]
    %v4579 = vld [vmem:[#allocation9 + $0x20] sm:$0xff]
    %v4580 = vld [vmem:[#allocation9 + $0x28] sm:$0xff]
    %v4581 = vld [vmem:[#allocation9 + $0x30] sm:$0xff]
    %v4582 = vld [vmem:[#allocation9 + $0x38] sm:$0xff]
    %v4583 = vld [vmem:[#allocation9 + $0x40] sm:$0xff]
    %v4584 = vld [vmem:[#allocation9 + $0x48] sm:$0xff]
    %v4585 = vld [vmem:[#allocation9 + $0x50] sm:$0xff]
    %v4586 = vld [vmem:[#allocation9 + $0x58] sm:$0xff]
    %v4587 = vld [vmem:[#allocation9 + $0x60] sm:$0xff]
    %v4588 = vld [vmem:[#allocation9 + $0x68] sm:$0xff]
    %v4589 = vld [vmem:[#allocation9 + $0x70] sm:$0xff]
    %v4590 = vld [vmem:[#allocation9 + $0x78] sm:$0xff]
    %v4591 = vld [vmem:[#allocation9 + $0x80] sm:$0xff]
    %v4592 = vld [vmem:[#allocation9 + $0x88] sm:$0xff]
    %v4593 = vld [vmem:[#allocation9 + $0x90] sm:$0xff]
    %v4594 = vld [vmem:[#allocation9 + $0x98] sm:$0xff]
    %v4595 = vld [vmem:[#allocation9 + $0xa0] sm:$0xff]
    %v4596 = vld [vmem:[#allocation9 + $0xa8] sm:$0xff]
    %v4597 = vld [vmem:[#allocation9 + $0xb0] sm:$0xff]
    %v4598 = vld [vmem:[#allocation9 + $0xb8] sm:$0xff]
    %v4599 = vld [vmem:[#allocation9 + $0xc0] sm:$0xff]
    %v4600 = vld [vmem:[#allocation9 + $0xc8] sm:$0xff]
    %v4601 = vld [vmem:[#allocation9 + $0xd0] sm:$0xff]
    %v4602 = vld [vmem:[#allocation9 + $0xd8] sm:$0xff]
    %v4603 = vld [vmem:[#allocation9 + $0xe0] sm:$0xff]
    %v4604 = vld [vmem:[#allocation9 + $0xe8] sm:$0xff]
    %v4605 = vld [vmem:[#allocation9 + $0xf0] sm:$0xff]
    %v4606 = vld [vmem:[#allocation9 + $0xf8] sm:$0xff]
    %v4607 = vld [vmem:[#allocation9 + $0x100] sm:$0xff]
    %v4608 = vld [vmem:[#allocation9 + $0x108] sm:$0xff]
    %v4609 = vld [vmem:[#allocation9 + $0x110] sm:$0xff]
    %v4610 = vld [vmem:[#allocation9 + $0x118] sm:$0xff]
    %v4611 = vld [vmem:[#allocation9 + $0x120] sm:$0xff]
    %v4612 = vld [vmem:[#allocation9 + $0x128] sm:$0xff]
    %v4613 = vld [vmem:[#allocation9 + $0x130] sm:$0xff]
    %v4614 = vld [vmem:[#allocation9 + $0x138] sm:$0xff]
    %v4615 = vld [vmem:[#allocation9 + $0x140] sm:$0xff]
    %v4616 = vld [vmem:[#allocation9 + $0x148] sm:$0xff]
    %v4617 = vld [vmem:[#allocation9 + $0x150] sm:$0xff]
    %v4618 = vld [vmem:[#allocation9 + $0x158] sm:$0xff]
    %v4619 = vld [vmem:[#allocation9 + $0x160] sm:$0xff]
    %v4620 = vld [vmem:[#allocation9 + $0x168] sm:$0xff]
    %v4621 = vld [vmem:[#allocation9 + $0x170] sm:$0xff]
    %v4622 = vld [vmem:[#allocation9 + $0x178] sm:$0xff]
    %v4623 = vld [vmem:[#allocation9 + $0x180] sm:$0xff]
    %v4624 = vld [vmem:[#allocation9 + $0x188] sm:$0xff]
    %v4625 = vld [vmem:[#allocation9 + $0x190] sm:$0xff]
    %v4626 = vld [vmem:[#allocation9 + $0x198] sm:$0xff]
    %v4627 = vld [vmem:[#allocation9 + $0x1a0] sm:$0xff]
    %v4628 = vld [vmem:[#allocation9 + $0x1a8] sm:$0xff]
    %v4629 = vld [vmem:[#allocation9 + $0x1b0] sm:$0xff]
    %v4630 = vld [vmem:[#allocation9 + $0x1b8] sm:$0xff]
    %v4631 = vld [vmem:[#allocation9 + $0x1c0] sm:$0xff]
    %v4632 = vld [vmem:[#allocation9 + $0x1c8] sm:$0xff]
    %v4633 = vld [vmem:[#allocation9 + $0x1d0] sm:$0xff]
    %v4634 = vld [vmem:[#allocation9 + $0x1d8] sm:$0xff]
    %v4635 = vld [vmem:[#allocation9 + $0x1e0] sm:$0xff]
    %v4636 = vld [vmem:[#allocation9 + $0x1e8] sm:$0xff]
    %v4637 = vld [vmem:[#allocation9 + $0x1f0] sm:$0xff]
    %v4638 = vld [vmem:[#allocation9 + $0x1f8] sm:$0xff]
    %v4639 = vld [vmem:[#allocation9 + $0x200] sm:$0xff]
    %v4640 = vld [vmem:[#allocation9 + $0x208] sm:$0xff]
    %v4641 = vld [vmem:[#allocation9 + $0x210] sm:$0xff]
    %v4642 = vld [vmem:[#allocation9 + $0x218] sm:$0xff]
    %v4643 = vld [vmem:[#allocation9 + $0x220] sm:$0xff]
    %v4644 = vld [vmem:[#allocation9 + $0x228] sm:$0xff]
    %v4645 = vld [vmem:[#allocation9 + $0x230] sm:$0xff]
    %v4646 = vld [vmem:[#allocation9 + $0x238] sm:$0xff]
    %v4647 = vld [vmem:[#allocation9 + $0x240] sm:$0xff]
    %v4648 = vld [vmem:[#allocation9 + $0x248] sm:$0xff]
    %v4649 = vld [vmem:[#allocation9 + $0x250] sm:$0xff]
    %v4650 = vld [vmem:[#allocation9 + $0x258] sm:$0xff]
    %v4651 = vld [vmem:[#allocation9 + $0x260] sm:$0xff]
    %v4652 = vld [vmem:[#allocation9 + $0x268] sm:$0xff]
    %v4653 = vld [vmem:[#allocation9 + $0x270] sm:$0xff]
    %v4654 = vld [vmem:[#allocation9 + $0x278] sm:$0xff]
    %v4655 = vld [vmem:[#allocation9 + $0x280] sm:$0xff]
    %v4656 = vld [vmem:[#allocation9 + $0x288] sm:$0xff]
    %v4657 = vld [vmem:[#allocation9 + $0x290] sm:$0xff]
    %v4658 = vld [vmem:[#allocation9 + $0x298] sm:$0xff]
    %v4659 = vld [vmem:[#allocation9 + $0x2a0] sm:$0xff]
    %v4660 = vld [vmem:[#allocation9 + $0x2a8] sm:$0xff]
    %v4661 = vld [vmem:[#allocation9 + $0x2b0] sm:$0xff]
    %v4662 = vld [vmem:[#allocation9 + $0x2b8] sm:$0xff]
    %v4663 = vld [vmem:[#allocation9 + $0x2c0] sm:$0xff]
    %v4664 = vld [vmem:[#allocation9 + $0x2c8] sm:$0xff]
    %v4665 = vld [vmem:[#allocation9 + $0x2d0] sm:$0xff]
    %v4666 = vld [vmem:[#allocation9 + $0x2d8] sm:$0xff]
    %v4667 = vld [vmem:[#allocation9 + $0x2e0] sm:$0xff]
    %v4668 = vld [vmem:[#allocation9 + $0x2e8] sm:$0xff]
    %v4669 = vld [vmem:[#allocation9 + $0x2f0] sm:$0xff]
    %v4670 = vld [vmem:[#allocation9 + $0x2f8] sm:$0xff]
    %v4671 = vld [vmem:[#allocation9 + $0x300] sm:$0xff]
    %v4672 = vld [vmem:[#allocation9 + $0x308] sm:$0xff]
    %v4673 = vld [vmem:[#allocation9 + $0x310] sm:$0xff]
    %v4674 = vld [vmem:[#allocation9 + $0x318] sm:$0xff]
    %v4675 = vld [vmem:[#allocation9 + $0x320] sm:$0xff]
    %v4676 = vld [vmem:[#allocation9 + $0x328] sm:$0xff]
    %v4677 = vld [vmem:[#allocation9 + $0x330] sm:$0xff]
    %v4678 = vld [vmem:[#allocation9 + $0x338] sm:$0xff]
    %v4679 = vld [vmem:[#allocation9 + $0x340] sm:$0xff]
    %v4680 = vld [vmem:[#allocation9 + $0x348] sm:$0xff]
    %v4681 = vld [vmem:[#allocation9 + $0x350] sm:$0xff]
    %v4682 = vld [vmem:[#allocation9 + $0x358] sm:$0xff]
    %v4683 = vld [vmem:[#allocation9 + $0x360] sm:$0xff]
    %v4684 = vld [vmem:[#allocation9 + $0x368] sm:$0xff]
    %v4685 = vld [vmem:[#allocation9 + $0x370] sm:$0xff]
    %v4686 = vld [vmem:[#allocation9 + $0x378] sm:$0xff]
    %v4687 = vld [vmem:[#allocation9 + $0x380] sm:$0xff]
    %v4688 = vld [vmem:[#allocation9 + $0x388] sm:$0xff]
    %v4689 = vld [vmem:[#allocation9 + $0x390] sm:$0xff]
    %v4690 = vld [vmem:[#allocation9 + $0x398] sm:$0xff]
    %v4691 = vld [vmem:[#allocation9 + $0x3a0] sm:$0xff]
    %v4692 = vld [vmem:[#allocation9 + $0x3a8] sm:$0xff]
    %v4693 = vld [vmem:[#allocation9 + $0x3b0] sm:$0xff]
    %v4694 = vld [vmem:[#allocation9 + $0x3b8] sm:$0xff]
    %v4695 = vld [vmem:[#allocation9 + $0x3c0] sm:$0xff]
    %v4696 = vld [vmem:[#allocation9 + $0x3c8] sm:$0xff]
    %v4697 = vld [vmem:[#allocation9 + $0x3d0] sm:$0xff]
    %v4698 = vld [vmem:[#allocation9 + $0x3d8] sm:$0xff]
    %v4699 = vld [vmem:[#allocation9 + $0x3e0] sm:$0xff]
    %v4700 = vld [vmem:[#allocation9 + $0x3e8] sm:$0xff]
    %v4701 = vld [vmem:[#allocation9 + $0x3f0] sm:$0xff]
    %v4702 = vld [vmem:[#allocation9 + $0x3f8] sm:$0xff]
    %v4703 = vld [vmem:[#allocation9 + $0x400] sm:$0xff]
    %v4704 = vld [vmem:[#allocation9 + $0x408] sm:$0xff]
    %v4705 = vld [vmem:[#allocation9 + $0x410] sm:$0xff]
    %v4706 = vld [vmem:[#allocation9 + $0x418] sm:$0xff]
    %v4707 = vld [vmem:[#allocation9 + $0x420] sm:$0xff]
    %v4708 = vld [vmem:[#allocation9 + $0x428] sm:$0xff]
    %v4709 = vld [vmem:[#allocation9 + $0x430] sm:$0xff]
    %v4710 = vld [vmem:[#allocation9 + $0x438] sm:$0xff]
    %v4711 = vld [vmem:[#allocation9 + $0x440] sm:$0xff]
    %v4712 = vld [vmem:[#allocation9 + $0x448] sm:$0xff]
    %v4713 = vld [vmem:[#allocation9 + $0x450] sm:$0xff]
    %v4714 = vld [vmem:[#allocation9 + $0x458] sm:$0xff]
    %v4715 = vld [vmem:[#allocation9 + $0x460] sm:$0xff]
    %v4716 = vld [vmem:[#allocation9 + $0x468] sm:$0xff]
    %v4717 = vld [vmem:[#allocation9 + $0x470] sm:$0xff]
    %v4718 = vld [vmem:[#allocation9 + $0x478] sm:$0xff]
    %v4719 = vld [vmem:[#allocation9 + $0x480] sm:$0xff]
    %v4720 = vld [vmem:[#allocation9 + $0x488] sm:$0xff]
    %v4721 = vld [vmem:[#allocation9 + $0x490] sm:$0xff]
    %v4722 = vld [vmem:[#allocation9 + $0x498] sm:$0xff]
    %v4723 = vld [vmem:[#allocation9 + $0x4a0] sm:$0xff]
    %v4724 = vld [vmem:[#allocation9 + $0x4a8] sm:$0xff]
    %v4725 = vld [vmem:[#allocation9 + $0x4b0] sm:$0xff]
    %v4726 = vld [vmem:[#allocation9 + $0x4b8] sm:$0xff]
    %v4727 = vld [vmem:[#allocation9 + $0x4c0] sm:$0xff]
    %v4728 = vld [vmem:[#allocation9 + $0x4c8] sm:$0xff]
    %v4729 = vld [vmem:[#allocation9 + $0x4d0] sm:$0xff]
    %v4730 = vld [vmem:[#allocation9 + $0x4d8] sm:$0xff]
    %v4731 = vld [vmem:[#allocation9 + $0x4e0] sm:$0xff]
    %v4732 = vld [vmem:[#allocation9 + $0x4e8] sm:$0xff]
    %v4733 = vld [vmem:[#allocation9 + $0x4f0] sm:$0xff]
    %v4734 = vld [vmem:[#allocation9 + $0x4f8] sm:$0xff]
    %v4735 = vld [vmem:[#allocation9 + $0x500] sm:$0xff]
    %v4736 = vld [vmem:[#allocation9 + $0x508] sm:$0xff]
    %v4737 = vld [vmem:[#allocation9 + $0x510] sm:$0xff]
    %v4738 = vld [vmem:[#allocation9 + $0x518] sm:$0xff]
    %v4739 = vld [vmem:[#allocation9 + $0x520] sm:$0xff]
    %v4740 = vld [vmem:[#allocation9 + $0x528] sm:$0xff]
    %v4741 = vld [vmem:[#allocation9 + $0x530] sm:$0xff]
    %v4742 = vld [vmem:[#allocation9 + $0x538] sm:$0xff]
    %v4743 = vld [vmem:[#allocation9 + $0x540] sm:$0xff]
    %v4744 = vld [vmem:[#allocation9 + $0x548] sm:$0xff]
    %v4745 = vld [vmem:[#allocation9 + $0x550] sm:$0xff]
    %v4746 = vld [vmem:[#allocation9 + $0x558] sm:$0xff]
    %v4747 = vld [vmem:[#allocation9 + $0x560] sm:$0xff]
    %v4748 = vld [vmem:[#allocation9 + $0x568] sm:$0xff]
    %v4749 = vld [vmem:[#allocation9 + $0x570] sm:$0xff]
    %v4750 = vld [vmem:[#allocation9 + $0x578] sm:$0xff]
    %v4751 = vld [vmem:[#allocation9 + $0x580] sm:$0xff]
    %v4752 = vld [vmem:[#allocation9 + $0x588] sm:$0xff]
    %v4753 = vld [vmem:[#allocation9 + $0x590] sm:$0xff]
    %v4754 = vld [vmem:[#allocation9 + $0x598] sm:$0xff]
    %v4755 = vld [vmem:[#allocation9 + $0x5a0] sm:$0xff]
    %v4756 = vld [vmem:[#allocation9 + $0x5a8] sm:$0xff]
    %v4757 = vld [vmem:[#allocation9 + $0x5b0] sm:$0xff]
    %v4758 = vld [vmem:[#allocation9 + $0x5b8] sm:$0xff]
    %v4759 = vld [vmem:[#allocation9 + $0x5c0] sm:$0xff]
    %v4760 = vld [vmem:[#allocation9 + $0x5c8] sm:$0xff]
    %v4761 = vld [vmem:[#allocation9 + $0x5d0] sm:$0xff]
    %v4762 = vld [vmem:[#allocation9 + $0x5d8] sm:$0xff]
    %v4763 = vld [vmem:[#allocation9 + $0x5e0] sm:$0xff]
    %v4764 = vld [vmem:[#allocation9 + $0x5e8] sm:$0xff]
    %v4765 = vld [vmem:[#allocation9 + $0x5f0] sm:$0xff]
    %v4766 = vld [vmem:[#allocation9 + $0x5f8] sm:$0xff]
    %v4767 = vld [vmem:[#allocation9 + $0x600] sm:$0xff]
    %v4768 = vld [vmem:[#allocation9 + $0x608] sm:$0xff]
    %v4769 = vld [vmem:[#allocation9 + $0x610] sm:$0xff]
    %v4770 = vld [vmem:[#allocation9 + $0x618] sm:$0xff]
    %v4771 = vld [vmem:[#allocation9 + $0x620] sm:$0xff]
    %v4772 = vld [vmem:[#allocation9 + $0x628] sm:$0xff]
    %v4773 = vld [vmem:[#allocation9 + $0x630] sm:$0xff]
    %v4774 = vld [vmem:[#allocation9 + $0x638] sm:$0xff]
    %v4775 = vld [vmem:[#allocation9 + $0x640] sm:$0xff]
    %v4776 = vld [vmem:[#allocation9 + $0x648] sm:$0xff]
    %v4777 = vld [vmem:[#allocation9 + $0x650] sm:$0xff]
    %v4778 = vld [vmem:[#allocation9 + $0x658] sm:$0xff]
    %v4779 = vld [vmem:[#allocation9 + $0x660] sm:$0xff]
    %v4780 = vld [vmem:[#allocation9 + $0x668] sm:$0xff]
    %v4781 = vld [vmem:[#allocation9 + $0x670] sm:$0xff]
    %v4782 = vld [vmem:[#allocation9 + $0x678] sm:$0xff]
    %v4783 = vld [vmem:[#allocation9 + $0x680] sm:$0xff]
    %v4784 = vld [vmem:[#allocation9 + $0x688] sm:$0xff]
    %v4785 = vld [vmem:[#allocation9 + $0x690] sm:$0xff]
    %v4786 = vld [vmem:[#allocation9 + $0x698] sm:$0xff]
    %v4787 = vld [vmem:[#allocation9 + $0x6a0] sm:$0xff]
    %v4788 = vld [vmem:[#allocation9 + $0x6a8] sm:$0xff]
    %v4789 = vld [vmem:[#allocation9 + $0x6b0] sm:$0xff]
    %v4790 = vld [vmem:[#allocation9 + $0x6b8] sm:$0xff]
    %v4791 = vld [vmem:[#allocation9 + $0x6c0] sm:$0xff]
    %v4792 = vld [vmem:[#allocation9 + $0x6c8] sm:$0xff]
    %v4793 = vld [vmem:[#allocation9 + $0x6d0] sm:$0xff]
    %v4794 = vld [vmem:[#allocation9 + $0x6d8] sm:$0xff]
    %v4795 = vld [vmem:[#allocation9 + $0x6e0] sm:$0xff]
    %v4796 = vld [vmem:[#allocation9 + $0x6e8] sm:$0xff]
    %v4797 = vld [vmem:[#allocation9 + $0x6f0] sm:$0xff]
    %v4798 = vld [vmem:[#allocation9 + $0x6f8] sm:$0xff]
    %v4799 = vld [vmem:[#allocation9 + $0x700] sm:$0xff]
    %v4800 = vld [vmem:[#allocation9 + $0x708] sm:$0xff]
    %v4801 = vld [vmem:[#allocation9 + $0x710] sm:$0xff]
    %v4802 = vld [vmem:[#allocation9 + $0x718] sm:$0xff]
    %v4803 = vld [vmem:[#allocation9 + $0x720] sm:$0xff]
    %v4804 = vld [vmem:[#allocation9 + $0x728] sm:$0xff]
    %v4805 = vld [vmem:[#allocation9 + $0x730] sm:$0xff]
    %v4806 = vld [vmem:[#allocation9 + $0x738] sm:$0xff]
    %v4807 = vld [vmem:[#allocation9 + $0x740] sm:$0xff]
    %v4808 = vld [vmem:[#allocation9 + $0x748] sm:$0xff]
    %v4809 = vld [vmem:[#allocation9 + $0x750] sm:$0xff]
    %v4810 = vld [vmem:[#allocation9 + $0x758] sm:$0xff]
    %v4811 = vld [vmem:[#allocation9 + $0x760] sm:$0xff]
    %v4812 = vld [vmem:[#allocation9 + $0x768] sm:$0xff]
    %v4813 = vld [vmem:[#allocation9 + $0x770] sm:$0xff]
    %v4814 = vld [vmem:[#allocation9 + $0x778] sm:$0xff]
    %v4815 = vld [vmem:[#allocation9 + $0x780] sm:$0xff]
    %v4816 = vld [vmem:[#allocation9 + $0x788] sm:$0xff]
    %v4817 = vld [vmem:[#allocation9 + $0x790] sm:$0xff]
    %v4818 = vld [vmem:[#allocation9 + $0x798] sm:$0xff]
    %v4819 = vld [vmem:[#allocation9 + $0x7a0] sm:$0xff]
    %v4820 = vld [vmem:[#allocation9 + $0x7a8] sm:$0xff]
    %v4821 = vld [vmem:[#allocation9 + $0x7b0] sm:$0xff]
    %v4822 = vld [vmem:[#allocation9 + $0x7b8] sm:$0xff]
    %v4823 = vld [vmem:[#allocation9 + $0x7c0] sm:$0xff]
    %v4824 = vld [vmem:[#allocation9 + $0x7c8] sm:$0xff]
    %v4825 = vld [vmem:[#allocation9 + $0x7d0] sm:$0xff]
    %v4826 = vld [vmem:[#allocation9 + $0x7d8] sm:$0xff]
    %v4827 = vld [vmem:[#allocation9 + $0x7e0] sm:$0xff]
    %v4828 = vld [vmem:[#allocation9 + $0x7e8] sm:$0xff]
    %v4829 = vld [vmem:[#allocation9 + $0x7f0] sm:$0xff]
    %v4830 = vld [vmem:[#allocation9 + $0x7f8] sm:$0xff]
    %v4831 = vld [vmem:[#allocation9 + $0x800] sm:$0xff]
    %v4832 = vld [vmem:[#allocation9 + $0x808] sm:$0xff]
    %v4833 = vld [vmem:[#allocation9 + $0x810] sm:$0xff]
    %v4834 = vld [vmem:[#allocation9 + $0x818] sm:$0xff]
    %v4835 = vld [vmem:[#allocation9 + $0x820] sm:$0xff]
    %v4836 = vld [vmem:[#allocation9 + $0x828] sm:$0xff]
    %v4837 = vld [vmem:[#allocation9 + $0x830] sm:$0xff]
    %v4838 = vld [vmem:[#allocation9 + $0x838] sm:$0xff]
    %v4839 = vld [vmem:[#allocation9 + $0x840] sm:$0xff]
    %v4840 = vld [vmem:[#allocation9 + $0x848] sm:$0xff]
    %v4841 = vld [vmem:[#allocation9 + $0x850] sm:$0xff]
    %v4842 = vld [vmem:[#allocation9 + $0x858] sm:$0xff]
    %v4843 = vld [vmem:[#allocation9 + $0x860] sm:$0xff]
    %v4844 = vld [vmem:[#allocation9 + $0x868] sm:$0xff]
    %v4845 = vld [vmem:[#allocation9 + $0x870] sm:$0xff]
    %v4846 = vld [vmem:[#allocation9 + $0x878] sm:$0xff]
    %v4847 = vld [vmem:[#allocation9 + $0x880] sm:$0xff]
    %v4848 = vld [vmem:[#allocation9 + $0x888] sm:$0xff]
    %v4849 = vld [vmem:[#allocation9 + $0x890] sm:$0xff]
    %v4850 = vld [vmem:[#allocation9 + $0x898] sm:$0xff]
    %v4851 = vld [vmem:[#allocation9 + $0x8a0] sm:$0xff]
    %v4852 = vld [vmem:[#allocation9 + $0x8a8] sm:$0xff]
    %v4853 = vld [vmem:[#allocation9 + $0x8b0] sm:$0xff]
    %v4854 = vld [vmem:[#allocation9 + $0x8b8] sm:$0xff]
    %v4855 = vld [vmem:[#allocation9 + $0x8c0] sm:$0xff]
    %v4856 = vld [vmem:[#allocation9 + $0x8c8] sm:$0xff]
    %v4857 = vld [vmem:[#allocation9 + $0x8d0] sm:$0xff]
    %v4858 = vld [vmem:[#allocation9 + $0x8d8] sm:$0xff]
    %v4859 = vld [vmem:[#allocation9 + $0x8e0] sm:$0xff]
    %v4860 = vld [vmem:[#allocation9 + $0x8e8] sm:$0xff]
    %v4861 = vld [vmem:[#allocation9 + $0x8f0] sm:$0xff]
    %v4862 = vld [vmem:[#allocation9 + $0x8f8] sm:$0xff]
    %v4863 = vld [vmem:[#allocation9 + $0x900] sm:$0xff]
    %v4864 = vld [vmem:[#allocation9 + $0x908] sm:$0xff]
    %v4865 = vld [vmem:[#allocation9 + $0x910] sm:$0xff]
    %v4866 = vld [vmem:[#allocation9 + $0x918] sm:$0xff]
    %v4867 = vld [vmem:[#allocation9 + $0x920] sm:$0xff]
    %v4868 = vld [vmem:[#allocation9 + $0x928] sm:$0xff]
    %v4869 = vld [vmem:[#allocation9 + $0x930] sm:$0xff]
    %v4870 = vld [vmem:[#allocation9 + $0x938] sm:$0xff]
    %v4871 = vld [vmem:[#allocation9 + $0x940] sm:$0xff]
    %v4872 = vld [vmem:[#allocation9 + $0x948] sm:$0xff]
    %v4873 = vld [vmem:[#allocation9 + $0x950] sm:$0xff]
    %v4874 = vld [vmem:[#allocation9 + $0x958] sm:$0xff]
    %v4875 = vld [vmem:[#allocation9 + $0x960] sm:$0xff]
    %v4876 = vld [vmem:[#allocation9 + $0x968] sm:$0xff]
    %v4877 = vld [vmem:[#allocation9 + $0x970] sm:$0xff]
    %v4878 = vld [vmem:[#allocation9 + $0x978] sm:$0xff]
    %v4879 = vld [vmem:[#allocation9 + $0x980] sm:$0xff]
    %v4880 = vld [vmem:[#allocation9 + $0x988] sm:$0xff]
    %v4881 = vld [vmem:[#allocation9 + $0x990] sm:$0xff]
    %v4882 = vld [vmem:[#allocation9 + $0x998] sm:$0xff]
    %v4883 = vld [vmem:[#allocation9 + $0x9a0] sm:$0xff]
    %v4884 = vld [vmem:[#allocation9 + $0x9a8] sm:$0xff]
    %v4885 = vld [vmem:[#allocation9 + $0x9b0] sm:$0xff]
    %v4886 = vld [vmem:[#allocation9 + $0x9b8] sm:$0xff]
    %v4887 = vld [vmem:[#allocation9 + $0x9c0] sm:$0xff]
    %v4888 = vld [vmem:[#allocation9 + $0x9c8] sm:$0xff]
    %v4889 = vld [vmem:[#allocation9 + $0x9d0] sm:$0xff]
    %v4890 = vld [vmem:[#allocation9 + $0x9d8] sm:$0xff]
    %v4891 = vld [vmem:[#allocation9 + $0x9e0] sm:$0xff]
    %v4892 = vld [vmem:[#allocation9 + $0x9e8] sm:$0xff]
    %v4893 = vld [vmem:[#allocation9 + $0x9f0] sm:$0xff]
    %v4894 = vld [vmem:[#allocation9 + $0x9f8] sm:$0xff]
    %v4895 = vld [vmem:[#allocation9 + $0xa00] sm:$0xff]
    %v4896 = vld [vmem:[#allocation9 + $0xa08] sm:$0xff]
    %v4897 = vld [vmem:[#allocation9 + $0xa10] sm:$0xff]
    %v4898 = vld [vmem:[#allocation9 + $0xa18] sm:$0xff]
    %v4899 = vld [vmem:[#allocation9 + $0xa20] sm:$0xff]
    %v4900 = vld [vmem:[#allocation9 + $0xa28] sm:$0xff]
    %v4901 = vld [vmem:[#allocation9 + $0xa30] sm:$0xff]
    %v4902 = vld [vmem:[#allocation9 + $0xa38] sm:$0xff]
    %v4903 = vld [vmem:[#allocation9 + $0xa40] sm:$0xff]
    %v4904 = vld [vmem:[#allocation9 + $0xa48] sm:$0xff]
    %v4905 = vld [vmem:[#allocation9 + $0xa50] sm:$0xff]
    %v4906 = vld [vmem:[#allocation9 + $0xa58] sm:$0xff]
    %v4907 = vld [vmem:[#allocation9 + $0xa60] sm:$0xff]
    %v4908 = vld [vmem:[#allocation9 + $0xa68] sm:$0xff]
    %v4909 = vld [vmem:[#allocation9 + $0xa70] sm:$0xff]
    %v4910 = vld [vmem:[#allocation9 + $0xa78] sm:$0xff]
    %v4911 = vld [vmem:[#allocation9 + $0xa80] sm:$0xff]
    %v4912 = vld [vmem:[#allocation9 + $0xa88] sm:$0xff]
    %v4913 = vld [vmem:[#allocation9 + $0xa90] sm:$0xff]
    %v4914 = vld [vmem:[#allocation9 + $0xa98] sm:$0xff]
    %v4915 = vld [vmem:[#allocation9 + $0xaa0] sm:$0xff]
    %v4916 = vld [vmem:[#allocation9 + $0xaa8] sm:$0xff]
    %v4917 = vld [vmem:[#allocation9 + $0xab0] sm:$0xff]
    %v4918 = vld [vmem:[#allocation9 + $0xab8] sm:$0xff]
    %v4919 = vld [vmem:[#allocation9 + $0xac0] sm:$0xff]
    %v4920 = vld [vmem:[#allocation9 + $0xac8] sm:$0xff]
    %v4921 = vld [vmem:[#allocation9 + $0xad0] sm:$0xff]
    %v4922 = vld [vmem:[#allocation9 + $0xad8] sm:$0xff]
    %v4923 = vld [vmem:[#allocation9 + $0xae0] sm:$0xff]
    %v4924 = vld [vmem:[#allocation9 + $0xae8] sm:$0xff]
    %v4925 = vld [vmem:[#allocation9 + $0xaf0] sm:$0xff]
    %v4926 = vld [vmem:[#allocation9 + $0xaf8] sm:$0xff]
    %v4927 = vld [vmem:[#allocation9 + $0xb00] sm:$0xff]
    %v4928 = vld [vmem:[#allocation9 + $0xb08] sm:$0xff]
    %v4929 = vld [vmem:[#allocation9 + $0xb10] sm:$0xff]
    %v4930 = vld [vmem:[#allocation9 + $0xb18] sm:$0xff]
    %v4931 = vld [vmem:[#allocation9 + $0xb20] sm:$0xff]
    %v4932 = vld [vmem:[#allocation9 + $0xb28] sm:$0xff]
    %v4933 = vld [vmem:[#allocation9 + $0xb30] sm:$0xff]
    %v4934 = vld [vmem:[#allocation9 + $0xb38] sm:$0xff]
    %v4935 = vld [vmem:[#allocation9 + $0xb40] sm:$0xff]
    %v4936 = vld [vmem:[#allocation9 + $0xb48] sm:$0xff]
    %v4937 = vld [vmem:[#allocation9 + $0xb50] sm:$0xff]
    %v4938 = vld [vmem:[#allocation9 + $0xb58] sm:$0xff]
    %v4939 = vld [vmem:[#allocation9 + $0xb60] sm:$0xff]
    %v4940 = vld [vmem:[#allocation9 + $0xb68] sm:$0xff]
    %v4941 = vld [vmem:[#allocation9 + $0xb70] sm:$0xff]
    %v4942 = vld [vmem:[#allocation9 + $0xb78] sm:$0xff]
    %v4943 = vld [vmem:[#allocation9 + $0xb80] sm:$0xff]
    %v4944 = vld [vmem:[#allocation9 + $0xb88] sm:$0xff]
    %v4945 = vld [vmem:[#allocation9 + $0xb90] sm:$0xff]
    %v4946 = vld [vmem:[#allocation9 + $0xb98] sm:$0xff]
    %v4947 = vld [vmem:[#allocation9 + $0xba0] sm:$0xff]
    %v4948 = vld [vmem:[#allocation9 + $0xba8] sm:$0xff]
    %v4949 = vld [vmem:[#allocation9 + $0xbb0] sm:$0xff]
    %v4950 = vld [vmem:[#allocation9 + $0xbb8] sm:$0xff]
    %v4951 = vld [vmem:[#allocation9 + $0xbc0] sm:$0xff]
    %v4952 = vld [vmem:[#allocation9 + $0xbc8] sm:$0xff]
    %v4953 = vld [vmem:[#allocation9 + $0xbd0] sm:$0xff]
    %v4954 = vld [vmem:[#allocation9 + $0xbd8] sm:$0xff]
    %v4955 = vld [vmem:[#allocation9 + $0xbe0] sm:$0xff]
    %v4956 = vld [vmem:[#allocation9 + $0xbe8] sm:$0xff]
    %v4957 = vld [vmem:[#allocation9 + $0xbf0] sm:$0xff]
    %v4958 = vld [vmem:[#allocation9 + $0xbf8] sm:$0xff]
    %s4959 = smul.u32 0, 6
    %s4960 = scalar_lea.vmem [#allocation10], %s4959
    %v4961 = vld [vmem:[%s4960] sm:$0x3f]
    %v4963 = vperm.slane %v4961, 0
    %v4964 = vperm.slane %v4961, 1
    %v4965 = vperm.slane %v4961, 2
    %v4966 = vperm.slane %v4961, 3
    %v4967 = vperm.slane %v4961, 4
    %v4968 = vperm.slane %v4961, 5
    %v5359 = vunpack.c.l.b16 %v4575
    %v5360 = vunpack.c.h.b16 %v4575
    %v5361 = vunpack.c.l.b16 %v4576
    %v5362 = vunpack.c.h.b16 %v4576
    %v5363 = vunpack.c.l.b16 %v4577
    %v5364 = vunpack.c.h.b16 %v4577
    %v5365 = vunpack.c.l.b16 %v4578
    %v5366 = vunpack.c.h.b16 %v4578
    %v5367 = vunpack.c.l.b16 %v4579
    %v5368 = vunpack.c.h.b16 %v4579
    %v5369 = vunpack.c.l.b16 %v4580
    %v5370 = vunpack.c.h.b16 %v4580
    %v5371 = vunpack.c.l.b16 %v4581
    %v5372 = vunpack.c.h.b16 %v4581
    %v5373 = vunpack.c.l.b16 %v4582
    %v5374 = vunpack.c.h.b16 %v4582
    %v5375 = vunpack.c.l.b16 %v4583
    %v5376 = vunpack.c.h.b16 %v4583
    %v5377 = vunpack.c.l.b16 %v4584
    %v5378 = vunpack.c.h.b16 %v4584
    %v5379 = vunpack.c.l.b16 %v4585
    %v5380 = vunpack.c.h.b16 %v4585
    %v5381 = vunpack.c.l.b16 %v4586
    %v5382 = vunpack.c.h.b16 %v4586
    %v5383 = vunpack.c.l.b16 %v4587
    %v5384 = vunpack.c.h.b16 %v4587
    %v5385 = vunpack.c.l.b16 %v4588
    %v5386 = vunpack.c.h.b16 %v4588
    %v5387 = vunpack.c.l.b16 %v4589
    %v5388 = vunpack.c.h.b16 %v4589
    %v5389 = vunpack.c.l.b16 %v4590
    %v5390 = vunpack.c.h.b16 %v4590
    %v5391 = vunpack.c.l.b16 %v4591
    %v5392 = vunpack.c.h.b16 %v4591
    %v5393 = vunpack.c.l.b16 %v4592
    %v5394 = vunpack.c.h.b16 %v4592
    %v5395 = vunpack.c.l.b16 %v4593
    %v5396 = vunpack.c.h.b16 %v4593
    %v5397 = vunpack.c.l.b16 %v4594
    %v5398 = vunpack.c.h.b16 %v4594
    %v5399 = vunpack.c.l.b16 %v4595
    %v5400 = vunpack.c.h.b16 %v4595
    %v5401 = vunpack.c.l.b16 %v4596
    %v5402 = vunpack.c.h.b16 %v4596
    %v5403 = vunpack.c.l.b16 %v4597
    %v5404 = vunpack.c.h.b16 %v4597
    %v5405 = vunpack.c.l.b16 %v4598
    %v5406 = vunpack.c.h.b16 %v4598
    %v5407 = vunpack.c.l.b16 %v4599
    %v5408 = vunpack.c.h.b16 %v4599
    %v5409 = vunpack.c.l.b16 %v4600
    %v5410 = vunpack.c.h.b16 %v4600
    %v5411 = vunpack.c.l.b16 %v4601
    %v5412 = vunpack.c.h.b16 %v4601
    %v5413 = vunpack.c.l.b16 %v4602
    %v5414 = vunpack.c.h.b16 %v4602
    %v5415 = vunpack.c.l.b16 %v4603
    %v5416 = vunpack.c.h.b16 %v4603
    %v5417 = vunpack.c.l.b16 %v4604
    %v5418 = vunpack.c.h.b16 %v4604
    %v5419 = vunpack.c.l.b16 %v4605
    %v5420 = vunpack.c.h.b16 %v4605
    %v5421 = vunpack.c.l.b16 %v4606
    %v5422 = vunpack.c.h.b16 %v4606
    %v5423 = vunpack.c.l.b16 %v4607
    %v5424 = vunpack.c.h.b16 %v4607
    %v5425 = vunpack.c.l.b16 %v4608
    %v5426 = vunpack.c.h.b16 %v4608
    %v5427 = vunpack.c.l.b16 %v4609
    %v5428 = vunpack.c.h.b16 %v4609
    %v5429 = vunpack.c.l.b16 %v4610
    %v5430 = vunpack.c.h.b16 %v4610
    %v5431 = vunpack.c.l.b16 %v4611
    %v5432 = vunpack.c.h.b16 %v4611
    %v5433 = vunpack.c.l.b16 %v4612
    %v5434 = vunpack.c.h.b16 %v4612
    %v5435 = vunpack.c.l.b16 %v4613
    %v5436 = vunpack.c.h.b16 %v4613
    %v5437 = vunpack.c.l.b16 %v4614
    %v5438 = vunpack.c.h.b16 %v4614
    %v5439 = vunpack.c.l.b16 %v4615
    %v5440 = vunpack.c.h.b16 %v4615
    %v5441 = vunpack.c.l.b16 %v4616
    %v5442 = vunpack.c.h.b16 %v4616
    %v5443 = vunpack.c.l.b16 %v4617
    %v5444 = vunpack.c.h.b16 %v4617
    %v5445 = vunpack.c.l.b16 %v4618
    %v5446 = vunpack.c.h.b16 %v4618
    %v5447 = vunpack.c.l.b16 %v4619
    %v5448 = vunpack.c.h.b16 %v4619
    %v5449 = vunpack.c.l.b16 %v4620
    %v5450 = vunpack.c.h.b16 %v4620
    %v5451 = vunpack.c.l.b16 %v4621
    %v5452 = vunpack.c.h.b16 %v4621
    %v5453 = vunpack.c.l.b16 %v4622
    %v5454 = vunpack.c.h.b16 %v4622
    %v5455 = vunpack.c.l.b16 %v4623
    %v5456 = vunpack.c.h.b16 %v4623
    %v5457 = vunpack.c.l.b16 %v4624
    %v5458 = vunpack.c.h.b16 %v4624
    %v5459 = vunpack.c.l.b16 %v4625
    %v5460 = vunpack.c.h.b16 %v4625
    %v5461 = vunpack.c.l.b16 %v4626
    %v5462 = vunpack.c.h.b16 %v4626
    %v5463 = vunpack.c.l.b16 %v4627
    %v5464 = vunpack.c.h.b16 %v4627
    %v5465 = vunpack.c.l.b16 %v4628
    %v5466 = vunpack.c.h.b16 %v4628
    %v5467 = vunpack.c.l.b16 %v4629
    %v5468 = vunpack.c.h.b16 %v4629
    %v5469 = vunpack.c.l.b16 %v4630
    %v5470 = vunpack.c.h.b16 %v4630
    %v5471 = vunpack.c.l.b16 %v4631
    %v5472 = vunpack.c.h.b16 %v4631
    %v5473 = vunpack.c.l.b16 %v4632
    %v5474 = vunpack.c.h.b16 %v4632
    %v5475 = vunpack.c.l.b16 %v4633
    %v5476 = vunpack.c.h.b16 %v4633
    %v5477 = vunpack.c.l.b16 %v4634
    %v5478 = vunpack.c.h.b16 %v4634
    %v5479 = vunpack.c.l.b16 %v4635
    %v5480 = vunpack.c.h.b16 %v4635
    %v5481 = vunpack.c.l.b16 %v4636
    %v5482 = vunpack.c.h.b16 %v4636
    %v5483 = vunpack.c.l.b16 %v4637
    %v5484 = vunpack.c.h.b16 %v4637
    %v5485 = vunpack.c.l.b16 %v4638
    %v5486 = vunpack.c.h.b16 %v4638
    %v5487 = vunpack.c.l.b16 %v4639
    %v5488 = vunpack.c.h.b16 %v4639
    %v5489 = vunpack.c.l.b16 %v4640
    %v5490 = vunpack.c.h.b16 %v4640
    %v5491 = vunpack.c.l.b16 %v4641
    %v5492 = vunpack.c.h.b16 %v4641
    %v5493 = vunpack.c.l.b16 %v4642
    %v5494 = vunpack.c.h.b16 %v4642
    %v5495 = vunpack.c.l.b16 %v4643
    %v5496 = vunpack.c.h.b16 %v4643
    %v5497 = vunpack.c.l.b16 %v4644
    %v5498 = vunpack.c.h.b16 %v4644
    %v5499 = vunpack.c.l.b16 %v4645
    %v5500 = vunpack.c.h.b16 %v4645
    %v5501 = vunpack.c.l.b16 %v4646
    %v5502 = vunpack.c.h.b16 %v4646
    %v5503 = vunpack.c.l.b16 %v4647
    %v5504 = vunpack.c.h.b16 %v4647
    %v5505 = vunpack.c.l.b16 %v4648
    %v5506 = vunpack.c.h.b16 %v4648
    %v5507 = vunpack.c.l.b16 %v4649
    %v5508 = vunpack.c.h.b16 %v4649
    %v5509 = vunpack.c.l.b16 %v4650
    %v5510 = vunpack.c.h.b16 %v4650
    %v5511 = vunpack.c.l.b16 %v4651
    %v5512 = vunpack.c.h.b16 %v4651
    %v5513 = vunpack.c.l.b16 %v4652
    %v5514 = vunpack.c.h.b16 %v4652
    %v5515 = vunpack.c.l.b16 %v4653
    %v5516 = vunpack.c.h.b16 %v4653
    %v5517 = vunpack.c.l.b16 %v4654
    %v5518 = vunpack.c.h.b16 %v4654
    %v5519 = vunpack.c.l.b16 %v4655
    %v5520 = vunpack.c.h.b16 %v4655
    %v5521 = vunpack.c.l.b16 %v4656
    %v5522 = vunpack.c.h.b16 %v4656
    %v5523 = vunpack.c.l.b16 %v4657
    %v5524 = vunpack.c.h.b16 %v4657
    %v5525 = vunpack.c.l.b16 %v4658
    %v5526 = vunpack.c.h.b16 %v4658
    %v5527 = vunpack.c.l.b16 %v4659
    %v5528 = vunpack.c.h.b16 %v4659
    %v5529 = vunpack.c.l.b16 %v4660
    %v5530 = vunpack.c.h.b16 %v4660
    %v5531 = vunpack.c.l.b16 %v4661
    %v5532 = vunpack.c.h.b16 %v4661
    %v5533 = vunpack.c.l.b16 %v4662
    %v5534 = vunpack.c.h.b16 %v4662
    %v5535 = vunpack.c.l.b16 %v4663
    %v5536 = vunpack.c.h.b16 %v4663
    %v5537 = vunpack.c.l.b16 %v4664
    %v5538 = vunpack.c.h.b16 %v4664
    %v5539 = vunpack.c.l.b16 %v4665
    %v5540 = vunpack.c.h.b16 %v4665
    %v5541 = vunpack.c.l.b16 %v4666
    %v5542 = vunpack.c.h.b16 %v4666
    %v5543 = vunpack.c.l.b16 %v4667
    %v5544 = vunpack.c.h.b16 %v4667
    %v5545 = vunpack.c.l.b16 %v4668
    %v5546 = vunpack.c.h.b16 %v4668
    %v5547 = vunpack.c.l.b16 %v4669
    %v5548 = vunpack.c.h.b16 %v4669
    %v5549 = vunpack.c.l.b16 %v4670
    %v5550 = vunpack.c.h.b16 %v4670
    %v5551 = vunpack.c.l.b16 %v4671
    %v5552 = vunpack.c.h.b16 %v4671
    %v5553 = vunpack.c.l.b16 %v4672
    %v5554 = vunpack.c.h.b16 %v4672
    %v5555 = vunpack.c.l.b16 %v4673
    %v5556 = vunpack.c.h.b16 %v4673
    %v5557 = vunpack.c.l.b16 %v4674
    %v5558 = vunpack.c.h.b16 %v4674
    %v5559 = vunpack.c.l.b16 %v4675
    %v5560 = vunpack.c.h.b16 %v4675
    %v5561 = vunpack.c.l.b16 %v4676
    %v5562 = vunpack.c.h.b16 %v4676
    %v5563 = vunpack.c.l.b16 %v4677
    %v5564 = vunpack.c.h.b16 %v4677
    %v5565 = vunpack.c.l.b16 %v4678
    %v5566 = vunpack.c.h.b16 %v4678
    %v5567 = vunpack.c.l.b16 %v4679
    %v5568 = vunpack.c.h.b16 %v4679
    %v5569 = vunpack.c.l.b16 %v4680
    %v5570 = vunpack.c.h.b16 %v4680
    %v5571 = vunpack.c.l.b16 %v4681
    %v5572 = vunpack.c.h.b16 %v4681
    %v5573 = vunpack.c.l.b16 %v4682
    %v5574 = vunpack.c.h.b16 %v4682
    %v5575 = vunpack.c.l.b16 %v4683
    %v5576 = vunpack.c.h.b16 %v4683
    %v5577 = vunpack.c.l.b16 %v4684
    %v5578 = vunpack.c.h.b16 %v4684
    %v5579 = vunpack.c.l.b16 %v4685
    %v5580 = vunpack.c.h.b16 %v4685
    %v5581 = vunpack.c.l.b16 %v4686
    %v5582 = vunpack.c.h.b16 %v4686
    %v5583 = vunpack.c.l.b16 %v4687
    %v5584 = vunpack.c.h.b16 %v4687
    %v5585 = vunpack.c.l.b16 %v4688
    %v5586 = vunpack.c.h.b16 %v4688
    %v5587 = vunpack.c.l.b16 %v4689
    %v5588 = vunpack.c.h.b16 %v4689
    %v5589 = vunpack.c.l.b16 %v4690
    %v5590 = vunpack.c.h.b16 %v4690
    %v5591 = vunpack.c.l.b16 %v4691
    %v5592 = vunpack.c.h.b16 %v4691
    %v5593 = vunpack.c.l.b16 %v4692
    %v5594 = vunpack.c.h.b16 %v4692
    %v5595 = vunpack.c.l.b16 %v4693
    %v5596 = vunpack.c.h.b16 %v4693
    %v5597 = vunpack.c.l.b16 %v4694
    %v5598 = vunpack.c.h.b16 %v4694
    %v5599 = vunpack.c.l.b16 %v4695
    %v5600 = vunpack.c.h.b16 %v4695
    %v5601 = vunpack.c.l.b16 %v4696
    %v5602 = vunpack.c.h.b16 %v4696
    %v5603 = vunpack.c.l.b16 %v4697
    %v5604 = vunpack.c.h.b16 %v4697
    %v5605 = vunpack.c.l.b16 %v4698
    %v5606 = vunpack.c.h.b16 %v4698
    %v5607 = vunpack.c.l.b16 %v4699
    %v5608 = vunpack.c.h.b16 %v4699
    %v5609 = vunpack.c.l.b16 %v4700
    %v5610 = vunpack.c.h.b16 %v4700
    %v5611 = vunpack.c.l.b16 %v4701
    %v5612 = vunpack.c.h.b16 %v4701
    %v5613 = vunpack.c.l.b16 %v4702
    %v5614 = vunpack.c.h.b16 %v4702
    %v5615 = vunpack.c.l.b16 %v4703
    %v5616 = vunpack.c.h.b16 %v4703
    %v5617 = vunpack.c.l.b16 %v4704
    %v5618 = vunpack.c.h.b16 %v4704
    %v5619 = vunpack.c.l.b16 %v4705
    %v5620 = vunpack.c.h.b16 %v4705
    %v5621 = vunpack.c.l.b16 %v4706
    %v5622 = vunpack.c.h.b16 %v4706
    %v5623 = vunpack.c.l.b16 %v4707
    %v5624 = vunpack.c.h.b16 %v4707
    %v5625 = vunpack.c.l.b16 %v4708
    %v5626 = vunpack.c.h.b16 %v4708
    %v5627 = vunpack.c.l.b16 %v4709
    %v5628 = vunpack.c.h.b16 %v4709
    %v5629 = vunpack.c.l.b16 %v4710
    %v5630 = vunpack.c.h.b16 %v4710
    %v5631 = vunpack.c.l.b16 %v4711
    %v5632 = vunpack.c.h.b16 %v4711
    %v5633 = vunpack.c.l.b16 %v4712
    %v5634 = vunpack.c.h.b16 %v4712
    %v5635 = vunpack.c.l.b16 %v4713
    %v5636 = vunpack.c.h.b16 %v4713
    %v5637 = vunpack.c.l.b16 %v4714
    %v5638 = vunpack.c.h.b16 %v4714
    %v5639 = vunpack.c.l.b16 %v4715
    %v5640 = vunpack.c.h.b16 %v4715
    %v5641 = vunpack.c.l.b16 %v4716
    %v5642 = vunpack.c.h.b16 %v4716
    %v5643 = vunpack.c.l.b16 %v4717
    %v5644 = vunpack.c.h.b16 %v4717
    %v5645 = vunpack.c.l.b16 %v4718
    %v5646 = vunpack.c.h.b16 %v4718
    %v5647 = vunpack.c.l.b16 %v4719
    %v5648 = vunpack.c.h.b16 %v4719
    %v5649 = vunpack.c.l.b16 %v4720
    %v5650 = vunpack.c.h.b16 %v4720
    %v5651 = vunpack.c.l.b16 %v4721
    %v5652 = vunpack.c.h.b16 %v4721
    %v5653 = vunpack.c.l.b16 %v4722
    %v5654 = vunpack.c.h.b16 %v4722
    %v5655 = vunpack.c.l.b16 %v4723
    %v5656 = vunpack.c.h.b16 %v4723
    %v5657 = vunpack.c.l.b16 %v4724
    %v5658 = vunpack.c.h.b16 %v4724
    %v5659 = vunpack.c.l.b16 %v4725
    %v5660 = vunpack.c.h.b16 %v4725
    %v5661 = vunpack.c.l.b16 %v4726
    %v5662 = vunpack.c.h.b16 %v4726
    %v5663 = vunpack.c.l.b16 %v4727
    %v5664 = vunpack.c.h.b16 %v4727
    %v5665 = vunpack.c.l.b16 %v4728
    %v5666 = vunpack.c.h.b16 %v4728
    %v5667 = vunpack.c.l.b16 %v4729
    %v5668 = vunpack.c.h.b16 %v4729
    %v5669 = vunpack.c.l.b16 %v4730
    %v5670 = vunpack.c.h.b16 %v4730
    %v5671 = vunpack.c.l.b16 %v4731
    %v5672 = vunpack.c.h.b16 %v4731
    %v5673 = vunpack.c.l.b16 %v4732
    %v5674 = vunpack.c.h.b16 %v4732
    %v5675 = vunpack.c.l.b16 %v4733
    %v5676 = vunpack.c.h.b16 %v4733
    %v5677 = vunpack.c.l.b16 %v4734
    %v5678 = vunpack.c.h.b16 %v4734
    %v5679 = vunpack.c.l.b16 %v4735
    %v5680 = vunpack.c.h.b16 %v4735
    %v5681 = vunpack.c.l.b16 %v4736
    %v5682 = vunpack.c.h.b16 %v4736
    %v5683 = vunpack.c.l.b16 %v4737
    %v5684 = vunpack.c.h.b16 %v4737
    %v5685 = vunpack.c.l.b16 %v4738
    %v5686 = vunpack.c.h.b16 %v4738
    %v5687 = vunpack.c.l.b16 %v4739
    %v5688 = vunpack.c.h.b16 %v4739
    %v5689 = vunpack.c.l.b16 %v4740
    %v5690 = vunpack.c.h.b16 %v4740
    %v5691 = vunpack.c.l.b16 %v4741
    %v5692 = vunpack.c.h.b16 %v4741
    %v5693 = vunpack.c.l.b16 %v4742
    %v5694 = vunpack.c.h.b16 %v4742
    %v5695 = vunpack.c.l.b16 %v4743
    %v5696 = vunpack.c.h.b16 %v4743
    %v5697 = vunpack.c.l.b16 %v4744
    %v5698 = vunpack.c.h.b16 %v4744
    %v5699 = vunpack.c.l.b16 %v4745
    %v5700 = vunpack.c.h.b16 %v4745
    %v5701 = vunpack.c.l.b16 %v4746
    %v5702 = vunpack.c.h.b16 %v4746
    %v5703 = vunpack.c.l.b16 %v4747
    %v5704 = vunpack.c.h.b16 %v4747
    %v5705 = vunpack.c.l.b16 %v4748
    %v5706 = vunpack.c.h.b16 %v4748
    %v5707 = vunpack.c.l.b16 %v4749
    %v5708 = vunpack.c.h.b16 %v4749
    %v5709 = vunpack.c.l.b16 %v4750
    %v5710 = vunpack.c.h.b16 %v4750
    %v5711 = vunpack.c.l.b16 %v4751
    %v5712 = vunpack.c.h.b16 %v4751
    %v5713 = vunpack.c.l.b16 %v4752
    %v5714 = vunpack.c.h.b16 %v4752
    %v5715 = vunpack.c.l.b16 %v4753
    %v5716 = vunpack.c.h.b16 %v4753
    %v5717 = vunpack.c.l.b16 %v4754
    %v5718 = vunpack.c.h.b16 %v4754
    %v5719 = vunpack.c.l.b16 %v4755
    %v5720 = vunpack.c.h.b16 %v4755
    %v5721 = vunpack.c.l.b16 %v4756
    %v5722 = vunpack.c.h.b16 %v4756
    %v5723 = vunpack.c.l.b16 %v4757
    %v5724 = vunpack.c.h.b16 %v4757
    %v5725 = vunpack.c.l.b16 %v4758
    %v5726 = vunpack.c.h.b16 %v4758
    %v5727 = vunpack.c.l.b16 %v4759
    %v5728 = vunpack.c.h.b16 %v4759
    %v5729 = vunpack.c.l.b16 %v4760
    %v5730 = vunpack.c.h.b16 %v4760
    %v5731 = vunpack.c.l.b16 %v4761
    %v5732 = vunpack.c.h.b16 %v4761
    %v5733 = vunpack.c.l.b16 %v4762
    %v5734 = vunpack.c.h.b16 %v4762
    %v5735 = vunpack.c.l.b16 %v4763
    %v5736 = vunpack.c.h.b16 %v4763
    %v5737 = vunpack.c.l.b16 %v4764
    %v5738 = vunpack.c.h.b16 %v4764
    %v5739 = vunpack.c.l.b16 %v4765
    %v5740 = vunpack.c.h.b16 %v4765
    %v5741 = vunpack.c.l.b16 %v4766
    %v5742 = vunpack.c.h.b16 %v4766
    %v5743 = vunpack.c.l.b16 %v4767
    %v5744 = vunpack.c.h.b16 %v4767
    %v5745 = vunpack.c.l.b16 %v4768
    %v5746 = vunpack.c.h.b16 %v4768
    %v5747 = vunpack.c.l.b16 %v4769
    %v5748 = vunpack.c.h.b16 %v4769
    %v5749 = vunpack.c.l.b16 %v4770
    %v5750 = vunpack.c.h.b16 %v4770
    %v5751 = vunpack.c.l.b16 %v4771
    %v5752 = vunpack.c.h.b16 %v4771
    %v5753 = vunpack.c.l.b16 %v4772
    %v5754 = vunpack.c.h.b16 %v4772
    %v5755 = vunpack.c.l.b16 %v4773
    %v5756 = vunpack.c.h.b16 %v4773
    %v5757 = vunpack.c.l.b16 %v4774
    %v5758 = vunpack.c.h.b16 %v4774
    %v5759 = vunpack.c.l.b16 %v4775
    %v5760 = vunpack.c.h.b16 %v4775
    %v5761 = vunpack.c.l.b16 %v4776
    %v5762 = vunpack.c.h.b16 %v4776
    %v5763 = vunpack.c.l.b16 %v4777
    %v5764 = vunpack.c.h.b16 %v4777
    %v5765 = vunpack.c.l.b16 %v4778
    %v5766 = vunpack.c.h.b16 %v4778
    %v5767 = vunpack.c.l.b16 %v4779
    %v5768 = vunpack.c.h.b16 %v4779
    %v5769 = vunpack.c.l.b16 %v4780
    %v5770 = vunpack.c.h.b16 %v4780
    %v5771 = vunpack.c.l.b16 %v4781
    %v5772 = vunpack.c.h.b16 %v4781
    %v5773 = vunpack.c.l.b16 %v4782
    %v5774 = vunpack.c.h.b16 %v4782
    %v5775 = vunpack.c.l.b16 %v4783
    %v5776 = vunpack.c.h.b16 %v4783
    %v5777 = vunpack.c.l.b16 %v4784
    %v5778 = vunpack.c.h.b16 %v4784
    %v5779 = vunpack.c.l.b16 %v4785
    %v5780 = vunpack.c.h.b16 %v4785
    %v5781 = vunpack.c.l.b16 %v4786
    %v5782 = vunpack.c.h.b16 %v4786
    %v5783 = vunpack.c.l.b16 %v4787
    %v5784 = vunpack.c.h.b16 %v4787
    %v5785 = vunpack.c.l.b16 %v4788
    %v5786 = vunpack.c.h.b16 %v4788
    %v5787 = vunpack.c.l.b16 %v4789
    %v5788 = vunpack.c.h.b16 %v4789
    %v5789 = vunpack.c.l.b16 %v4790
    %v5790 = vunpack.c.h.b16 %v4790
    %v5791 = vunpack.c.l.b16 %v4791
    %v5792 = vunpack.c.h.b16 %v4791
    %v5793 = vunpack.c.l.b16 %v4792
    %v5794 = vunpack.c.h.b16 %v4792
    %v5795 = vunpack.c.l.b16 %v4793
    %v5796 = vunpack.c.h.b16 %v4793
    %v5797 = vunpack.c.l.b16 %v4794
    %v5798 = vunpack.c.h.b16 %v4794
    %v5799 = vunpack.c.l.b16 %v4795
    %v5800 = vunpack.c.h.b16 %v4795
    %v5801 = vunpack.c.l.b16 %v4796
    %v5802 = vunpack.c.h.b16 %v4796
    %v5803 = vunpack.c.l.b16 %v4797
    %v5804 = vunpack.c.h.b16 %v4797
    %v5805 = vunpack.c.l.b16 %v4798
    %v5806 = vunpack.c.h.b16 %v4798
    %v5807 = vunpack.c.l.b16 %v4799
    %v5808 = vunpack.c.h.b16 %v4799
    %v5809 = vunpack.c.l.b16 %v4800
    %v5810 = vunpack.c.h.b16 %v4800
    %v5811 = vunpack.c.l.b16 %v4801
    %v5812 = vunpack.c.h.b16 %v4801
    %v5813 = vunpack.c.l.b16 %v4802
    %v5814 = vunpack.c.h.b16 %v4802
    %v5815 = vunpack.c.l.b16 %v4803
    %v5816 = vunpack.c.h.b16 %v4803
    %v5817 = vunpack.c.l.b16 %v4804
    %v5818 = vunpack.c.h.b16 %v4804
    %v5819 = vunpack.c.l.b16 %v4805
    %v5820 = vunpack.c.h.b16 %v4805
    %v5821 = vunpack.c.l.b16 %v4806
    %v5822 = vunpack.c.h.b16 %v4806
    %v5823 = vunpack.c.l.b16 %v4807
    %v5824 = vunpack.c.h.b16 %v4807
    %v5825 = vunpack.c.l.b16 %v4808
    %v5826 = vunpack.c.h.b16 %v4808
    %v5827 = vunpack.c.l.b16 %v4809
    %v5828 = vunpack.c.h.b16 %v4809
    %v5829 = vunpack.c.l.b16 %v4810
    %v5830 = vunpack.c.h.b16 %v4810
    %v5831 = vunpack.c.l.b16 %v4811
    %v5832 = vunpack.c.h.b16 %v4811
    %v5833 = vunpack.c.l.b16 %v4812
    %v5834 = vunpack.c.h.b16 %v4812
    %v5835 = vunpack.c.l.b16 %v4813
    %v5836 = vunpack.c.h.b16 %v4813
    %v5837 = vunpack.c.l.b16 %v4814
    %v5838 = vunpack.c.h.b16 %v4814
    %v5839 = vunpack.c.l.b16 %v4815
    %v5840 = vunpack.c.h.b16 %v4815
    %v5841 = vunpack.c.l.b16 %v4816
    %v5842 = vunpack.c.h.b16 %v4816
    %v5843 = vunpack.c.l.b16 %v4817
    %v5844 = vunpack.c.h.b16 %v4817
    %v5845 = vunpack.c.l.b16 %v4818
    %v5846 = vunpack.c.h.b16 %v4818
    %v5847 = vunpack.c.l.b16 %v4819
    %v5848 = vunpack.c.h.b16 %v4819
    %v5849 = vunpack.c.l.b16 %v4820
    %v5850 = vunpack.c.h.b16 %v4820
    %v5851 = vunpack.c.l.b16 %v4821
    %v5852 = vunpack.c.h.b16 %v4821
    %v5853 = vunpack.c.l.b16 %v4822
    %v5854 = vunpack.c.h.b16 %v4822
    %v5855 = vunpack.c.l.b16 %v4823
    %v5856 = vunpack.c.h.b16 %v4823
    %v5857 = vunpack.c.l.b16 %v4824
    %v5858 = vunpack.c.h.b16 %v4824
    %v5859 = vunpack.c.l.b16 %v4825
    %v5860 = vunpack.c.h.b16 %v4825
    %v5861 = vunpack.c.l.b16 %v4826
    %v5862 = vunpack.c.h.b16 %v4826
    %v5863 = vunpack.c.l.b16 %v4827
    %v5864 = vunpack.c.h.b16 %v4827
    %v5865 = vunpack.c.l.b16 %v4828
    %v5866 = vunpack.c.h.b16 %v4828
    %v5867 = vunpack.c.l.b16 %v4829
    %v5868 = vunpack.c.h.b16 %v4829
    %v5869 = vunpack.c.l.b16 %v4830
    %v5870 = vunpack.c.h.b16 %v4830
    %v5871 = vunpack.c.l.b16 %v4831
    %v5872 = vunpack.c.h.b16 %v4831
    %v5873 = vunpack.c.l.b16 %v4832
    %v5874 = vunpack.c.h.b16 %v4832
    %v5875 = vunpack.c.l.b16 %v4833
    %v5876 = vunpack.c.h.b16 %v4833
    %v5877 = vunpack.c.l.b16 %v4834
    %v5878 = vunpack.c.h.b16 %v4834
    %v5879 = vunpack.c.l.b16 %v4835
    %v5880 = vunpack.c.h.b16 %v4835
    %v5881 = vunpack.c.l.b16 %v4836
    %v5882 = vunpack.c.h.b16 %v4836
    %v5883 = vunpack.c.l.b16 %v4837
    %v5884 = vunpack.c.h.b16 %v4837
    %v5885 = vunpack.c.l.b16 %v4838
    %v5886 = vunpack.c.h.b16 %v4838
    %v5887 = vunpack.c.l.b16 %v4839
    %v5888 = vunpack.c.h.b16 %v4839
    %v5889 = vunpack.c.l.b16 %v4840
    %v5890 = vunpack.c.h.b16 %v4840
    %v5891 = vunpack.c.l.b16 %v4841
    %v5892 = vunpack.c.h.b16 %v4841
    %v5893 = vunpack.c.l.b16 %v4842
    %v5894 = vunpack.c.h.b16 %v4842
    %v5895 = vunpack.c.l.b16 %v4843
    %v5896 = vunpack.c.h.b16 %v4843
    %v5897 = vunpack.c.l.b16 %v4844
    %v5898 = vunpack.c.h.b16 %v4844
    %v5899 = vunpack.c.l.b16 %v4845
    %v5900 = vunpack.c.h.b16 %v4845
    %v5901 = vunpack.c.l.b16 %v4846
    %v5902 = vunpack.c.h.b16 %v4846
    %v5903 = vunpack.c.l.b16 %v4847
    %v5904 = vunpack.c.h.b16 %v4847
    %v5905 = vunpack.c.l.b16 %v4848
    %v5906 = vunpack.c.h.b16 %v4848
    %v5907 = vunpack.c.l.b16 %v4849
    %v5908 = vunpack.c.h.b16 %v4849
    %v5909 = vunpack.c.l.b16 %v4850
    %v5910 = vunpack.c.h.b16 %v4850
    %v5911 = vunpack.c.l.b16 %v4851
    %v5912 = vunpack.c.h.b16 %v4851
    %v5913 = vunpack.c.l.b16 %v4852
    %v5914 = vunpack.c.h.b16 %v4852
    %v5915 = vunpack.c.l.b16 %v4853
    %v5916 = vunpack.c.h.b16 %v4853
    %v5917 = vunpack.c.l.b16 %v4854
    %v5918 = vunpack.c.h.b16 %v4854
    %v5919 = vunpack.c.l.b16 %v4855
    %v5920 = vunpack.c.h.b16 %v4855
    %v5921 = vunpack.c.l.b16 %v4856
    %v5922 = vunpack.c.h.b16 %v4856
    %v5923 = vunpack.c.l.b16 %v4857
    %v5924 = vunpack.c.h.b16 %v4857
    %v5925 = vunpack.c.l.b16 %v4858
    %v5926 = vunpack.c.h.b16 %v4858
    %v5927 = vunpack.c.l.b16 %v4859
    %v5928 = vunpack.c.h.b16 %v4859
    %v5929 = vunpack.c.l.b16 %v4860
    %v5930 = vunpack.c.h.b16 %v4860
    %v5931 = vunpack.c.l.b16 %v4861
    %v5932 = vunpack.c.h.b16 %v4861
    %v5933 = vunpack.c.l.b16 %v4862
    %v5934 = vunpack.c.h.b16 %v4862
    %v5935 = vunpack.c.l.b16 %v4863
    %v5936 = vunpack.c.h.b16 %v4863
    %v5937 = vunpack.c.l.b16 %v4864
    %v5938 = vunpack.c.h.b16 %v4864
    %v5939 = vunpack.c.l.b16 %v4865
    %v5940 = vunpack.c.h.b16 %v4865
    %v5941 = vunpack.c.l.b16 %v4866
    %v5942 = vunpack.c.h.b16 %v4866
    %v5943 = vunpack.c.l.b16 %v4867
    %v5944 = vunpack.c.h.b16 %v4867
    %v5945 = vunpack.c.l.b16 %v4868
    %v5946 = vunpack.c.h.b16 %v4868
    %v5947 = vunpack.c.l.b16 %v4869
    %v5948 = vunpack.c.h.b16 %v4869
    %v5949 = vunpack.c.l.b16 %v4870
    %v5950 = vunpack.c.h.b16 %v4870
    %v5951 = vunpack.c.l.b16 %v4871
    %v5952 = vunpack.c.h.b16 %v4871
    %v5953 = vunpack.c.l.b16 %v4872
    %v5954 = vunpack.c.h.b16 %v4872
    %v5955 = vunpack.c.l.b16 %v4873
    %v5956 = vunpack.c.h.b16 %v4873
    %v5957 = vunpack.c.l.b16 %v4874
    %v5958 = vunpack.c.h.b16 %v4874
    %v5959 = vunpack.c.l.b16 %v4875
    %v5960 = vunpack.c.h.b16 %v4875
    %v5961 = vunpack.c.l.b16 %v4876
    %v5962 = vunpack.c.h.b16 %v4876
    %v5963 = vunpack.c.l.b16 %v4877
    %v5964 = vunpack.c.h.b16 %v4877
    %v5965 = vunpack.c.l.b16 %v4878
    %v5966 = vunpack.c.h.b16 %v4878
    %v5967 = vunpack.c.l.b16 %v4879
    %v5968 = vunpack.c.h.b16 %v4879
    %v5969 = vunpack.c.l.b16 %v4880
    %v5970 = vunpack.c.h.b16 %v4880
    %v5971 = vunpack.c.l.b16 %v4881
    %v5972 = vunpack.c.h.b16 %v4881
    %v5973 = vunpack.c.l.b16 %v4882
    %v5974 = vunpack.c.h.b16 %v4882
    %v5975 = vunpack.c.l.b16 %v4883
    %v5976 = vunpack.c.h.b16 %v4883
    %v5977 = vunpack.c.l.b16 %v4884
    %v5978 = vunpack.c.h.b16 %v4884
    %v5979 = vunpack.c.l.b16 %v4885
    %v5980 = vunpack.c.h.b16 %v4885
    %v5981 = vunpack.c.l.b16 %v4886
    %v5982 = vunpack.c.h.b16 %v4886
    %v5983 = vunpack.c.l.b16 %v4887
    %v5984 = vunpack.c.h.b16 %v4887
    %v5985 = vunpack.c.l.b16 %v4888
    %v5986 = vunpack.c.h.b16 %v4888
    %v5987 = vunpack.c.l.b16 %v4889
    %v5988 = vunpack.c.h.b16 %v4889
    %v5989 = vunpack.c.l.b16 %v4890
    %v5990 = vunpack.c.h.b16 %v4890
    %v5991 = vunpack.c.l.b16 %v4891
    %v5992 = vunpack.c.h.b16 %v4891
    %v5993 = vunpack.c.l.b16 %v4892
    %v5994 = vunpack.c.h.b16 %v4892
    %v5995 = vunpack.c.l.b16 %v4893
    %v5996 = vunpack.c.h.b16 %v4893
    %v5997 = vunpack.c.l.b16 %v4894
    %v5998 = vunpack.c.h.b16 %v4894
    %v5999 = vunpack.c.l.b16 %v4895
    %v6000 = vunpack.c.h.b16 %v4895
    %v6001 = vunpack.c.l.b16 %v4896
    %v6002 = vunpack.c.h.b16 %v4896
    %v6003 = vunpack.c.l.b16 %v4897
    %v6004 = vunpack.c.h.b16 %v4897
    %v6005 = vunpack.c.l.b16 %v4898
    %v6006 = vunpack.c.h.b16 %v4898
    %v6007 = vunpack.c.l.b16 %v4899
    %v6008 = vunpack.c.h.b16 %v4899
    %v6009 = vunpack.c.l.b16 %v4900
    %v6010 = vunpack.c.h.b16 %v4900
    %v6011 = vunpack.c.l.b16 %v4901
    %v6012 = vunpack.c.h.b16 %v4901
    %v6013 = vunpack.c.l.b16 %v4902
    %v6014 = vunpack.c.h.b16 %v4902
    %v6015 = vunpack.c.l.b16 %v4903
    %v6016 = vunpack.c.h.b16 %v4903
    %v6017 = vunpack.c.l.b16 %v4904
    %v6018 = vunpack.c.h.b16 %v4904
    %v6019 = vunpack.c.l.b16 %v4905
    %v6020 = vunpack.c.h.b16 %v4905
    %v6021 = vunpack.c.l.b16 %v4906
    %v6022 = vunpack.c.h.b16 %v4906
    %v6023 = vunpack.c.l.b16 %v4907
    %v6024 = vunpack.c.h.b16 %v4907
    %v6025 = vunpack.c.l.b16 %v4908
    %v6026 = vunpack.c.h.b16 %v4908
    %v6027 = vunpack.c.l.b16 %v4909
    %v6028 = vunpack.c.h.b16 %v4909
    %v6029 = vunpack.c.l.b16 %v4910
    %v6030 = vunpack.c.h.b16 %v4910
    %v6031 = vunpack.c.l.b16 %v4911
    %v6032 = vunpack.c.h.b16 %v4911
    %v6033 = vunpack.c.l.b16 %v4912
    %v6034 = vunpack.c.h.b16 %v4912
    %v6035 = vunpack.c.l.b16 %v4913
    %v6036 = vunpack.c.h.b16 %v4913
    %v6037 = vunpack.c.l.b16 %v4914
    %v6038 = vunpack.c.h.b16 %v4914
    %v6039 = vunpack.c.l.b16 %v4915
    %v6040 = vunpack.c.h.b16 %v4915
    %v6041 = vunpack.c.l.b16 %v4916
    %v6042 = vunpack.c.h.b16 %v4916
    %v6043 = vunpack.c.l.b16 %v4917
    %v6044 = vunpack.c.h.b16 %v4917
    %v6045 = vunpack.c.l.b16 %v4918
    %v6046 = vunpack.c.h.b16 %v4918
    %v6047 = vunpack.c.l.b16 %v4919
    %v6048 = vunpack.c.h.b16 %v4919
    %v6049 = vunpack.c.l.b16 %v4920
    %v6050 = vunpack.c.h.b16 %v4920
    %v6051 = vunpack.c.l.b16 %v4921
    %v6052 = vunpack.c.h.b16 %v4921
    %v6053 = vunpack.c.l.b16 %v4922
    %v6054 = vunpack.c.h.b16 %v4922
    %v6055 = vunpack.c.l.b16 %v4923
    %v6056 = vunpack.c.h.b16 %v4923
    %v6057 = vunpack.c.l.b16 %v4924
    %v6058 = vunpack.c.h.b16 %v4924
    %v6059 = vunpack.c.l.b16 %v4925
    %v6060 = vunpack.c.h.b16 %v4925
    %v6061 = vunpack.c.l.b16 %v4926
    %v6062 = vunpack.c.h.b16 %v4926
    %v6063 = vunpack.c.l.b16 %v4927
    %v6064 = vunpack.c.h.b16 %v4927
    %v6065 = vunpack.c.l.b16 %v4928
    %v6066 = vunpack.c.h.b16 %v4928
    %v6067 = vunpack.c.l.b16 %v4929
    %v6068 = vunpack.c.h.b16 %v4929
    %v6069 = vunpack.c.l.b16 %v4930
    %v6070 = vunpack.c.h.b16 %v4930
    %v6071 = vunpack.c.l.b16 %v4931
    %v6072 = vunpack.c.h.b16 %v4931
    %v6073 = vunpack.c.l.b16 %v4932
    %v6074 = vunpack.c.h.b16 %v4932
    %v6075 = vunpack.c.l.b16 %v4933
    %v6076 = vunpack.c.h.b16 %v4933
    %v6077 = vunpack.c.l.b16 %v4934
    %v6078 = vunpack.c.h.b16 %v4934
    %v6079 = vunpack.c.l.b16 %v4935
    %v6080 = vunpack.c.h.b16 %v4935
    %v6081 = vunpack.c.l.b16 %v4936
    %v6082 = vunpack.c.h.b16 %v4936
    %v6083 = vunpack.c.l.b16 %v4937
    %v6084 = vunpack.c.h.b16 %v4937
    %v6085 = vunpack.c.l.b16 %v4938
    %v6086 = vunpack.c.h.b16 %v4938
    %v6087 = vunpack.c.l.b16 %v4939
    %v6088 = vunpack.c.h.b16 %v4939
    %v6089 = vunpack.c.l.b16 %v4940
    %v6090 = vunpack.c.h.b16 %v4940
    %v6091 = vunpack.c.l.b16 %v4941
    %v6092 = vunpack.c.h.b16 %v4941
    %v6093 = vunpack.c.l.b16 %v4942
    %v6094 = vunpack.c.h.b16 %v4942
    %v6095 = vunpack.c.l.b16 %v4943
    %v6096 = vunpack.c.h.b16 %v4943
    %v6097 = vunpack.c.l.b16 %v4944
    %v6098 = vunpack.c.h.b16 %v4944
    %v6099 = vunpack.c.l.b16 %v4945
    %v6100 = vunpack.c.h.b16 %v4945
    %v6101 = vunpack.c.l.b16 %v4946
    %v6102 = vunpack.c.h.b16 %v4946
    %v6103 = vunpack.c.l.b16 %v4947
    %v6104 = vunpack.c.h.b16 %v4947
    %v6105 = vunpack.c.l.b16 %v4948
    %v6106 = vunpack.c.h.b16 %v4948
    %v6107 = vunpack.c.l.b16 %v4949
    %v6108 = vunpack.c.h.b16 %v4949
    %v6109 = vunpack.c.l.b16 %v4950
    %v6110 = vunpack.c.h.b16 %v4950
    %v6111 = vunpack.c.l.b16 %v4951
    %v6112 = vunpack.c.h.b16 %v4951
    %v6113 = vunpack.c.l.b16 %v4952
    %v6114 = vunpack.c.h.b16 %v4952
    %v6115 = vunpack.c.l.b16 %v4953
    %v6116 = vunpack.c.h.b16 %v4953
    %v6117 = vunpack.c.l.b16 %v4954
    %v6118 = vunpack.c.h.b16 %v4954
    %v6119 = vunpack.c.l.b16 %v4955
    %v6120 = vunpack.c.h.b16 %v4955
    %v6121 = vunpack.c.l.b16 %v4956
    %v6122 = vunpack.c.h.b16 %v4956
    %v6123 = vunpack.c.l.b16 %v4957
    %v6124 = vunpack.c.h.b16 %v4957
    %v6125 = vunpack.c.l.b16 %v4958
    %v6126 = vunpack.c.h.b16 %v4958
    %v6127 = vpack.c.b16 %v5365, %v5359
    %v6128 = vpack.c.b16 %v5366, %v5360
    %v6129 = vpack.c.b16 %v5367, %v5361
    %v6130 = vpack.c.b16 %v5368, %v5362
    %v6131 = vpack.c.b16 %v5369, %v5363
    %v6132 = vpack.c.b16 %v5370, %v5364
    %v6133 = vpack.c.b16 %v5377, %v5371
    %v6134 = vpack.c.b16 %v5378, %v5372
    %v6135 = vpack.c.b16 %v5379, %v5373
    %v6136 = vpack.c.b16 %v5380, %v5374
    %v6137 = vpack.c.b16 %v5381, %v5375
    %v6138 = vpack.c.b16 %v5382, %v5376
    %v6139 = vpack.c.b16 %v5389, %v5383
    %v6140 = vpack.c.b16 %v5390, %v5384
    %v6141 = vpack.c.b16 %v5391, %v5385
    %v6142 = vpack.c.b16 %v5392, %v5386
    %v6143 = vpack.c.b16 %v5393, %v5387
    %v6144 = vpack.c.b16 %v5394, %v5388
    %v6145 = vpack.c.b16 %v5401, %v5395
    %v6146 = vpack.c.b16 %v5402, %v5396
    %v6147 = vpack.c.b16 %v5403, %v5397
    %v6148 = vpack.c.b16 %v5404, %v5398
    %v6149 = vpack.c.b16 %v5405, %v5399
    %v6150 = vpack.c.b16 %v5406, %v5400
    %v6151 = vpack.c.b16 %v5413, %v5407
    %v6152 = vpack.c.b16 %v5414, %v5408
    %v6153 = vpack.c.b16 %v5415, %v5409
    %v6154 = vpack.c.b16 %v5416, %v5410
    %v6155 = vpack.c.b16 %v5417, %v5411
    %v6156 = vpack.c.b16 %v5418, %v5412
    %v6157 = vpack.c.b16 %v5425, %v5419
    %v6158 = vpack.c.b16 %v5426, %v5420
    %v6159 = vpack.c.b16 %v5427, %v5421
    %v6160 = vpack.c.b16 %v5428, %v5422
    %v6161 = vpack.c.b16 %v5429, %v5423
    %v6162 = vpack.c.b16 %v5430, %v5424
    %v6163 = vpack.c.b16 %v5437, %v5431
    %v6164 = vpack.c.b16 %v5438, %v5432
    %v6165 = vpack.c.b16 %v5439, %v5433
    %v6166 = vpack.c.b16 %v5440, %v5434
    %v6167 = vpack.c.b16 %v5441, %v5435
    %v6168 = vpack.c.b16 %v5442, %v5436
    %v6169 = vpack.c.b16 %v5449, %v5443
    %v6170 = vpack.c.b16 %v5450, %v5444
    %v6171 = vpack.c.b16 %v5451, %v5445
    %v6172 = vpack.c.b16 %v5452, %v5446
    %v6173 = vpack.c.b16 %v5453, %v5447
    %v6174 = vpack.c.b16 %v5454, %v5448
    %v6175 = vpack.c.b16 %v5461, %v5455
    %v6176 = vpack.c.b16 %v5462, %v5456
    %v6177 = vpack.c.b16 %v5463, %v5457
    %v6178 = vpack.c.b16 %v5464, %v5458
    %v6179 = vpack.c.b16 %v5465, %v5459
    %v6180 = vpack.c.b16 %v5466, %v5460
    %v6181 = vpack.c.b16 %v5473, %v5467
    %v6182 = vpack.c.b16 %v5474, %v5468
    %v6183 = vpack.c.b16 %v5475, %v5469
    %v6184 = vpack.c.b16 %v5476, %v5470
    %v6185 = vpack.c.b16 %v5477, %v5471
    %v6186 = vpack.c.b16 %v5478, %v5472
    %v6187 = vpack.c.b16 %v5485, %v5479
    %v6188 = vpack.c.b16 %v5486, %v5480
    %v6189 = vpack.c.b16 %v5487, %v5481
    %v6190 = vpack.c.b16 %v5488, %v5482
    %v6191 = vpack.c.b16 %v5489, %v5483
    %v6192 = vpack.c.b16 %v5490, %v5484
    %v6193 = vpack.c.b16 %v5497, %v5491
    %v6194 = vpack.c.b16 %v5498, %v5492
    %v6195 = vpack.c.b16 %v5499, %v5493
    %v6196 = vpack.c.b16 %v5500, %v5494
    %v6197 = vpack.c.b16 %v5501, %v5495
    %v6198 = vpack.c.b16 %v5502, %v5496
    %v6199 = vpack.c.b16 %v5509, %v5503
    %v6200 = vpack.c.b16 %v5510, %v5504
    %v6201 = vpack.c.b16 %v5511, %v5505
    %v6202 = vpack.c.b16 %v5512, %v5506
    %v6203 = vpack.c.b16 %v5513, %v5507
    %v6204 = vpack.c.b16 %v5514, %v5508
    %v6205 = vpack.c.b16 %v5521, %v5515
    %v6206 = vpack.c.b16 %v5522, %v5516
    %v6207 = vpack.c.b16 %v5523, %v5517
    %v6208 = vpack.c.b16 %v5524, %v5518
    %v6209 = vpack.c.b16 %v5525, %v5519
    %v6210 = vpack.c.b16 %v5526, %v5520
    %v6211 = vpack.c.b16 %v5533, %v5527
    %v6212 = vpack.c.b16 %v5534, %v5528
    %v6213 = vpack.c.b16 %v5535, %v5529
    %v6214 = vpack.c.b16 %v5536, %v5530
    %v6215 = vpack.c.b16 %v5537, %v5531
    %v6216 = vpack.c.b16 %v5538, %v5532
    %v6217 = vpack.c.b16 %v5545, %v5539
    %v6218 = vpack.c.b16 %v5546, %v5540
    %v6219 = vpack.c.b16 %v5547, %v5541
    %v6220 = vpack.c.b16 %v5548, %v5542
    %v6221 = vpack.c.b16 %v5549, %v5543
    %v6222 = vpack.c.b16 %v5550, %v5544
    %v6223 = vpack.c.b16 %v5557, %v5551
    %v6224 = vpack.c.b16 %v5558, %v5552
    %v6225 = vpack.c.b16 %v5559, %v5553
    %v6226 = vpack.c.b16 %v5560, %v5554
    %v6227 = vpack.c.b16 %v5561, %v5555
    %v6228 = vpack.c.b16 %v5562, %v5556
    %v6229 = vpack.c.b16 %v5569, %v5563
    %v6230 = vpack.c.b16 %v5570, %v5564
    %v6231 = vpack.c.b16 %v5571, %v5565
    %v6232 = vpack.c.b16 %v5572, %v5566
    %v6233 = vpack.c.b16 %v5573, %v5567
    %v6234 = vpack.c.b16 %v5574, %v5568
    %v6235 = vpack.c.b16 %v5581, %v5575
    %v6236 = vpack.c.b16 %v5582, %v5576
    %v6237 = vpack.c.b16 %v5583, %v5577
    %v6238 = vpack.c.b16 %v5584, %v5578
    %v6239 = vpack.c.b16 %v5585, %v5579
    %v6240 = vpack.c.b16 %v5586, %v5580
    %v6241 = vpack.c.b16 %v5593, %v5587
    %v6242 = vpack.c.b16 %v5594, %v5588
    %v6243 = vpack.c.b16 %v5595, %v5589
    %v6244 = vpack.c.b16 %v5596, %v5590
    %v6245 = vpack.c.b16 %v5597, %v5591
    %v6246 = vpack.c.b16 %v5598, %v5592
    %v6247 = vpack.c.b16 %v5605, %v5599
    %v6248 = vpack.c.b16 %v5606, %v5600
    %v6249 = vpack.c.b16 %v5607, %v5601
    %v6250 = vpack.c.b16 %v5608, %v5602
    %v6251 = vpack.c.b16 %v5609, %v5603
    %v6252 = vpack.c.b16 %v5610, %v5604
    %v6253 = vpack.c.b16 %v5617, %v5611
    %v6254 = vpack.c.b16 %v5618, %v5612
    %v6255 = vpack.c.b16 %v5619, %v5613
    %v6256 = vpack.c.b16 %v5620, %v5614
    %v6257 = vpack.c.b16 %v5621, %v5615
    %v6258 = vpack.c.b16 %v5622, %v5616
    %v6259 = vpack.c.b16 %v5629, %v5623
    %v6260 = vpack.c.b16 %v5630, %v5624
    %v6261 = vpack.c.b16 %v5631, %v5625
    %v6262 = vpack.c.b16 %v5632, %v5626
    %v6263 = vpack.c.b16 %v5633, %v5627
    %v6264 = vpack.c.b16 %v5634, %v5628
    %v6265 = vpack.c.b16 %v5641, %v5635
    %v6266 = vpack.c.b16 %v5642, %v5636
    %v6267 = vpack.c.b16 %v5643, %v5637
    %v6268 = vpack.c.b16 %v5644, %v5638
    %v6269 = vpack.c.b16 %v5645, %v5639
    %v6270 = vpack.c.b16 %v5646, %v5640
    %v6271 = vpack.c.b16 %v5653, %v5647
    %v6272 = vpack.c.b16 %v5654, %v5648
    %v6273 = vpack.c.b16 %v5655, %v5649
    %v6274 = vpack.c.b16 %v5656, %v5650
    %v6275 = vpack.c.b16 %v5657, %v5651
    %v6276 = vpack.c.b16 %v5658, %v5652
    %v6277 = vpack.c.b16 %v5665, %v5659
    %v6278 = vpack.c.b16 %v5666, %v5660
    %v6279 = vpack.c.b16 %v5667, %v5661
    %v6280 = vpack.c.b16 %v5668, %v5662
    %v6281 = vpack.c.b16 %v5669, %v5663
    %v6282 = vpack.c.b16 %v5670, %v5664
    %v6283 = vpack.c.b16 %v5677, %v5671
    %v6284 = vpack.c.b16 %v5678, %v5672
    %v6285 = vpack.c.b16 %v5679, %v5673
    %v6286 = vpack.c.b16 %v5680, %v5674
    %v6287 = vpack.c.b16 %v5681, %v5675
    %v6288 = vpack.c.b16 %v5682, %v5676
    %v6289 = vpack.c.b16 %v5689, %v5683
    %v6290 = vpack.c.b16 %v5690, %v5684
    %v6291 = vpack.c.b16 %v5691, %v5685
    %v6292 = vpack.c.b16 %v5692, %v5686
    %v6293 = vpack.c.b16 %v5693, %v5687
    %v6294 = vpack.c.b16 %v5694, %v5688
    %v6295 = vpack.c.b16 %v5701, %v5695
    %v6296 = vpack.c.b16 %v5702, %v5696
    %v6297 = vpack.c.b16 %v5703, %v5697
    %v6298 = vpack.c.b16 %v5704, %v5698
    %v6299 = vpack.c.b16 %v5705, %v5699
    %v6300 = vpack.c.b16 %v5706, %v5700
    %v6301 = vpack.c.b16 %v5713, %v5707
    %v6302 = vpack.c.b16 %v5714, %v5708
    %v6303 = vpack.c.b16 %v5715, %v5709
    %v6304 = vpack.c.b16 %v5716, %v5710
    %v6305 = vpack.c.b16 %v5717, %v5711
    %v6306 = vpack.c.b16 %v5718, %v5712
    %v6307 = vpack.c.b16 %v5725, %v5719
    %v6308 = vpack.c.b16 %v5726, %v5720
    %v6309 = vpack.c.b16 %v5727, %v5721
    %v6310 = vpack.c.b16 %v5728, %v5722
    %v6311 = vpack.c.b16 %v5729, %v5723
    %v6312 = vpack.c.b16 %v5730, %v5724
    %v6313 = vpack.c.b16 %v5737, %v5731
    %v6314 = vpack.c.b16 %v5738, %v5732
    %v6315 = vpack.c.b16 %v5739, %v5733
    %v6316 = vpack.c.b16 %v5740, %v5734
    %v6317 = vpack.c.b16 %v5741, %v5735
    %v6318 = vpack.c.b16 %v5742, %v5736
    %v6319 = vpack.c.b16 %v5749, %v5743
    %v6320 = vpack.c.b16 %v5750, %v5744
    %v6321 = vpack.c.b16 %v5751, %v5745
    %v6322 = vpack.c.b16 %v5752, %v5746
    %v6323 = vpack.c.b16 %v5753, %v5747
    %v6324 = vpack.c.b16 %v5754, %v5748
    %v6325 = vpack.c.b16 %v5761, %v5755
    %v6326 = vpack.c.b16 %v5762, %v5756
    %v6327 = vpack.c.b16 %v5763, %v5757
    %v6328 = vpack.c.b16 %v5764, %v5758
    %v6329 = vpack.c.b16 %v5765, %v5759
    %v6330 = vpack.c.b16 %v5766, %v5760
    %v6331 = vpack.c.b16 %v5773, %v5767
    %v6332 = vpack.c.b16 %v5774, %v5768
    %v6333 = vpack.c.b16 %v5775, %v5769
    %v6334 = vpack.c.b16 %v5776, %v5770
    %v6335 = vpack.c.b16 %v5777, %v5771
    %v6336 = vpack.c.b16 %v5778, %v5772
    %v6337 = vpack.c.b16 %v5785, %v5779
    %v6338 = vpack.c.b16 %v5786, %v5780
    %v6339 = vpack.c.b16 %v5787, %v5781
    %v6340 = vpack.c.b16 %v5788, %v5782
    %v6341 = vpack.c.b16 %v5789, %v5783
    %v6342 = vpack.c.b16 %v5790, %v5784
    %v6343 = vpack.c.b16 %v5797, %v5791
    %v6344 = vpack.c.b16 %v5798, %v5792
    %v6345 = vpack.c.b16 %v5799, %v5793
    %v6346 = vpack.c.b16 %v5800, %v5794
    %v6347 = vpack.c.b16 %v5801, %v5795
    %v6348 = vpack.c.b16 %v5802, %v5796
    %v6349 = vpack.c.b16 %v5809, %v5803
    %v6350 = vpack.c.b16 %v5810, %v5804
    %v6351 = vpack.c.b16 %v5811, %v5805
    %v6352 = vpack.c.b16 %v5812, %v5806
    %v6353 = vpack.c.b16 %v5813, %v5807
    %v6354 = vpack.c.b16 %v5814, %v5808
    %v6355 = vpack.c.b16 %v5821, %v5815
    %v6356 = vpack.c.b16 %v5822, %v5816
    %v6357 = vpack.c.b16 %v5823, %v5817
    %v6358 = vpack.c.b16 %v5824, %v5818
    %v6359 = vpack.c.b16 %v5825, %v5819
    %v6360 = vpack.c.b16 %v5826, %v5820
    %v6361 = vpack.c.b16 %v5833, %v5827
    %v6362 = vpack.c.b16 %v5834, %v5828
    %v6363 = vpack.c.b16 %v5835, %v5829
    %v6364 = vpack.c.b16 %v5836, %v5830
    %v6365 = vpack.c.b16 %v5837, %v5831
    %v6366 = vpack.c.b16 %v5838, %v5832
    %v6367 = vpack.c.b16 %v5845, %v5839
    %v6368 = vpack.c.b16 %v5846, %v5840
    %v6369 = vpack.c.b16 %v5847, %v5841
    %v6370 = vpack.c.b16 %v5848, %v5842
    %v6371 = vpack.c.b16 %v5849, %v5843
    %v6372 = vpack.c.b16 %v5850, %v5844
    %v6373 = vpack.c.b16 %v5857, %v5851
    %v6374 = vpack.c.b16 %v5858, %v5852
    %v6375 = vpack.c.b16 %v5859, %v5853
    %v6376 = vpack.c.b16 %v5860, %v5854
    %v6377 = vpack.c.b16 %v5861, %v5855
    %v6378 = vpack.c.b16 %v5862, %v5856
    %v6379 = vpack.c.b16 %v5869, %v5863
    %v6380 = vpack.c.b16 %v5870, %v5864
    %v6381 = vpack.c.b16 %v5871, %v5865
    %v6382 = vpack.c.b16 %v5872, %v5866
    %v6383 = vpack.c.b16 %v5873, %v5867
    %v6384 = vpack.c.b16 %v5874, %v5868
    %v6385 = vpack.c.b16 %v5881, %v5875
    %v6386 = vpack.c.b16 %v5882, %v5876
    %v6387 = vpack.c.b16 %v5883, %v5877
    %v6388 = vpack.c.b16 %v5884, %v5878
    %v6389 = vpack.c.b16 %v5885, %v5879
    %v6390 = vpack.c.b16 %v5886, %v5880
    %v6391 = vpack.c.b16 %v5893, %v5887
    %v6392 = vpack.c.b16 %v5894, %v5888
    %v6393 = vpack.c.b16 %v5895, %v5889
    %v6394 = vpack.c.b16 %v5896, %v5890
    %v6395 = vpack.c.b16 %v5897, %v5891
    %v6396 = vpack.c.b16 %v5898, %v5892
    %v6397 = vpack.c.b16 %v5905, %v5899
    %v6398 = vpack.c.b16 %v5906, %v5900
    %v6399 = vpack.c.b16 %v5907, %v5901
    %v6400 = vpack.c.b16 %v5908, %v5902
    %v6401 = vpack.c.b16 %v5909, %v5903
    %v6402 = vpack.c.b16 %v5910, %v5904
    %v6403 = vpack.c.b16 %v5917, %v5911
    %v6404 = vpack.c.b16 %v5918, %v5912
    %v6405 = vpack.c.b16 %v5919, %v5913
    %v6406 = vpack.c.b16 %v5920, %v5914
    %v6407 = vpack.c.b16 %v5921, %v5915
    %v6408 = vpack.c.b16 %v5922, %v5916
    %v6409 = vpack.c.b16 %v5929, %v5923
    %v6410 = vpack.c.b16 %v5930, %v5924
    %v6411 = vpack.c.b16 %v5931, %v5925
    %v6412 = vpack.c.b16 %v5932, %v5926
    %v6413 = vpack.c.b16 %v5933, %v5927
    %v6414 = vpack.c.b16 %v5934, %v5928
    %v6415 = vpack.c.b16 %v5941, %v5935
    %v6416 = vpack.c.b16 %v5942, %v5936
    %v6417 = vpack.c.b16 %v5943, %v5937
    %v6418 = vpack.c.b16 %v5944, %v5938
    %v6419 = vpack.c.b16 %v5945, %v5939
    %v6420 = vpack.c.b16 %v5946, %v5940
    %v6421 = vpack.c.b16 %v5953, %v5947
    %v6422 = vpack.c.b16 %v5954, %v5948
    %v6423 = vpack.c.b16 %v5955, %v5949
    %v6424 = vpack.c.b16 %v5956, %v5950
    %v6425 = vpack.c.b16 %v5957, %v5951
    %v6426 = vpack.c.b16 %v5958, %v5952
    %v6427 = vpack.c.b16 %v5965, %v5959
    %v6428 = vpack.c.b16 %v5966, %v5960
    %v6429 = vpack.c.b16 %v5967, %v5961
    %v6430 = vpack.c.b16 %v5968, %v5962
    %v6431 = vpack.c.b16 %v5969, %v5963
    %v6432 = vpack.c.b16 %v5970, %v5964
    %v6433 = vpack.c.b16 %v5977, %v5971
    %v6434 = vpack.c.b16 %v5978, %v5972
    %v6435 = vpack.c.b16 %v5979, %v5973
    %v6436 = vpack.c.b16 %v5980, %v5974
    %v6437 = vpack.c.b16 %v5981, %v5975
    %v6438 = vpack.c.b16 %v5982, %v5976
    %v6439 = vpack.c.b16 %v5989, %v5983
    %v6440 = vpack.c.b16 %v5990, %v5984
    %v6441 = vpack.c.b16 %v5991, %v5985
    %v6442 = vpack.c.b16 %v5992, %v5986
    %v6443 = vpack.c.b16 %v5993, %v5987
    %v6444 = vpack.c.b16 %v5994, %v5988
    %v6445 = vpack.c.b16 %v6001, %v5995
    %v6446 = vpack.c.b16 %v6002, %v5996
    %v6447 = vpack.c.b16 %v6003, %v5997
    %v6448 = vpack.c.b16 %v6004, %v5998
    %v6449 = vpack.c.b16 %v6005, %v5999
    %v6450 = vpack.c.b16 %v6006, %v6000
    %v6451 = vpack.c.b16 %v6013, %v6007
    %v6452 = vpack.c.b16 %v6014, %v6008
    %v6453 = vpack.c.b16 %v6015, %v6009
    %v6454 = vpack.c.b16 %v6016, %v6010
    %v6455 = vpack.c.b16 %v6017, %v6011
    %v6456 = vpack.c.b16 %v6018, %v6012
    %v6457 = vpack.c.b16 %v6025, %v6019
    %v6458 = vpack.c.b16 %v6026, %v6020
    %v6459 = vpack.c.b16 %v6027, %v6021
    %v6460 = vpack.c.b16 %v6028, %v6022
    %v6461 = vpack.c.b16 %v6029, %v6023
    %v6462 = vpack.c.b16 %v6030, %v6024
    %v6463 = vpack.c.b16 %v6037, %v6031
    %v6464 = vpack.c.b16 %v6038, %v6032
    %v6465 = vpack.c.b16 %v6039, %v6033
    %v6466 = vpack.c.b16 %v6040, %v6034
    %v6467 = vpack.c.b16 %v6041, %v6035
    %v6468 = vpack.c.b16 %v6042, %v6036
    %v6469 = vpack.c.b16 %v6049, %v6043
    %v6470 = vpack.c.b16 %v6050, %v6044
    %v6471 = vpack.c.b16 %v6051, %v6045
    %v6472 = vpack.c.b16 %v6052, %v6046
    %v6473 = vpack.c.b16 %v6053, %v6047
    %v6474 = vpack.c.b16 %v6054, %v6048
    %v6475 = vpack.c.b16 %v6061, %v6055
    %v6476 = vpack.c.b16 %v6062, %v6056
    %v6477 = vpack.c.b16 %v6063, %v6057
    %v6478 = vpack.c.b16 %v6064, %v6058
    %v6479 = vpack.c.b16 %v6065, %v6059
    %v6480 = vpack.c.b16 %v6066, %v6060
    %v6481 = vpack.c.b16 %v6073, %v6067
    %v6482 = vpack.c.b16 %v6074, %v6068
    %v6483 = vpack.c.b16 %v6075, %v6069
    %v6484 = vpack.c.b16 %v6076, %v6070
    %v6485 = vpack.c.b16 %v6077, %v6071
    %v6486 = vpack.c.b16 %v6078, %v6072
    %v6487 = vpack.c.b16 %v6085, %v6079
    %v6488 = vpack.c.b16 %v6086, %v6080
    %v6489 = vpack.c.b16 %v6087, %v6081
    %v6490 = vpack.c.b16 %v6088, %v6082
    %v6491 = vpack.c.b16 %v6089, %v6083
    %v6492 = vpack.c.b16 %v6090, %v6084
    %v6493 = vpack.c.b16 %v6097, %v6091
    %v6494 = vpack.c.b16 %v6098, %v6092
    %v6495 = vpack.c.b16 %v6099, %v6093
    %v6496 = vpack.c.b16 %v6100, %v6094
    %v6497 = vpack.c.b16 %v6101, %v6095
    %v6498 = vpack.c.b16 %v6102, %v6096
    %v6499 = vpack.c.b16 %v6109, %v6103
    %v6500 = vpack.c.b16 %v6110, %v6104
    %v6501 = vpack.c.b16 %v6111, %v6105
    %v6502 = vpack.c.b16 %v6112, %v6106
    %v6503 = vpack.c.b16 %v6113, %v6107
    %v6504 = vpack.c.b16 %v6114, %v6108
    %v6505 = vpack.c.b16 %v6121, %v6115
    %v6506 = vpack.c.b16 %v6122, %v6116
    %v6507 = vpack.c.b16 %v6123, %v6117
    %v6508 = vpack.c.b16 %v6124, %v6118
    %v6509 = vpack.c.b16 %v6125, %v6119
    %v6510 = vpack.c.b16 %v6126, %v6120
    %6895 = vmatpush.bf16.msra.mxu0 %v6169
    %6896 = vmatpush.bf16.msra.mxu0 %v6163
    %6897 = vmatpush.bf16.msra.mxu0 %v6157
    %6898 = vmatpush.bf16.msra.mxu0 %v6151
    %6899 = vmatpush.bf16.msra.mxu0 %v6145
    %6900 = vmatpush.bf16.msra.mxu0 %v6139
    %6901 = vmatpush.bf16.msra.mxu0 %v6133
    %6902 = vmatpush.bf16.msra.mxu0 %v6127
    %6903 = vmatmul.bf16.gmra.mxu0 %v4567
    %v6904 = vpop.f32.mrf.mxu0
    %v6905 = vadd.f32 %v4963, %v6904
    %v6906 = vpop.f32.mrf.mxu0
    %6907 = vdwg.mxu0
    %6908 = vmatpush.bf16.msra.mxu0 %v6217
    %6909 = vmatpush.bf16.msra.mxu0 %v6211
    %6910 = vmatpush.bf16.msra.mxu0 %v6205
    %6911 = vmatpush.bf16.msra.mxu0 %v6199
    %6912 = vmatpush.bf16.msra.mxu0 %v6193
    %6913 = vmatpush.bf16.msra.mxu0 %v6187
    %6914 = vmatpush.bf16.msra.mxu0 %v6181
    %6915 = vmatpush.bf16.msra.mxu0 %v6175
    %6916 = vmatmul.bf16.gmra.mxu0 %v4568
    %v6917 = vpop.f32.mrf.mxu0
    %v6918 = vadd.f32 %v6905, %v6917
    %v6919 = vpop.f32.mrf.mxu0
    %6920 = vdwg.mxu0
    %6921 = vmatpush.bf16.msra.mxu0 %v6265
    %6922 = vmatpush.bf16.msra.mxu0 %v6259
    %6923 = vmatpush.bf16.msra.mxu0 %v6253
    %6924 = vmatpush.bf16.msra.mxu0 %v6247
    %6925 = vmatpush.bf16.msra.mxu0 %v6241
    %6926 = vmatpush.bf16.msra.mxu0 %v6235
    %6927 = vmatpush.bf16.msra.mxu0 %v6229
    %6928 = vmatpush.bf16.msra.mxu0 %v6223
    %6929 = vmatmul.bf16.gmra.mxu0 %v4569
    %v6930 = vpop.f32.mrf.mxu0
    %v6931 = vadd.f32 %v6918, %v6930
    %v6932 = vpop.f32.mrf.mxu0
    %6933 = vdwg.mxu0
    %6934 = vmatpush.bf16.msra.mxu0 %v6313
    %6935 = vmatpush.bf16.msra.mxu0 %v6307
    %6936 = vmatpush.bf16.msra.mxu0 %v6301
    %6937 = vmatpush.bf16.msra.mxu0 %v6295
    %6938 = vmatpush.bf16.msra.mxu0 %v6289
    %6939 = vmatpush.bf16.msra.mxu0 %v6283
    %6940 = vmatpush.bf16.msra.mxu0 %v6277
    %6941 = vmatpush.bf16.msra.mxu0 %v6271
    %6942 = vmatmul.bf16.gmra.mxu0 %v4570
    %v6943 = vpop.f32.mrf.mxu0
    %v6944 = vadd.f32 %v6931, %v6943
    %v6945 = vpop.f32.mrf.mxu0
    %6946 = vdwg.mxu0
    %6947 = vmatpush.bf16.msra.mxu0 %v6361
    %6948 = vmatpush.bf16.msra.mxu0 %v6355
    %6949 = vmatpush.bf16.msra.mxu0 %v6349
    %6950 = vmatpush.bf16.msra.mxu0 %v6343
    %6951 = vmatpush.bf16.msra.mxu0 %v6337
    %6952 = vmatpush.bf16.msra.mxu0 %v6331
    %6953 = vmatpush.bf16.msra.mxu0 %v6325
    %6954 = vmatpush.bf16.msra.mxu0 %v6319
    %6955 = vmatmul.bf16.gmra.mxu0 %v4571
    %v6956 = vpop.f32.mrf.mxu0
    %v6957 = vadd.f32 %v6944, %v6956
    %v6958 = vpop.f32.mrf.mxu0
    %6959 = vdwg.mxu0
    %6960 = vmatpush.bf16.msra.mxu0 %v6409
    %6961 = vmatpush.bf16.msra.mxu0 %v6403
    %6962 = vmatpush.bf16.msra.mxu0 %v6397
    %6963 = vmatpush.bf16.msra.mxu0 %v6391
    %6964 = vmatpush.bf16.msra.mxu0 %v6385
    %6965 = vmatpush.bf16.msra.mxu0 %v6379
    %6966 = vmatpush.bf16.msra.mxu0 %v6373
    %6967 = vmatpush.bf16.msra.mxu0 %v6367
    %6968 = vmatmul.bf16.gmra.mxu0 %v4572
    %v6969 = vpop.f32.mrf.mxu0
    %v6970 = vadd.f32 %v6957, %v6969
    %v6971 = vpop.f32.mrf.mxu0
    %6972 = vdwg.mxu0
    %6973 = vmatpush.bf16.msra.mxu0 %v6457
    %6974 = vmatpush.bf16.msra.mxu0 %v6451
    %6975 = vmatpush.bf16.msra.mxu0 %v6445
    %6976 = vmatpush.bf16.msra.mxu0 %v6439
    %6977 = vmatpush.bf16.msra.mxu0 %v6433
    %6978 = vmatpush.bf16.msra.mxu0 %v6427
    %6979 = vmatpush.bf16.msra.mxu0 %v6421
    %6980 = vmatpush.bf16.msra.mxu0 %v6415
    %6981 = vmatmul.bf16.gmra.mxu0 %v4573
    %v6982 = vpop.f32.mrf.mxu0
    %v6983 = vadd.f32 %v6970, %v6982
    %v6984 = vpop.f32.mrf.mxu0
    %6985 = vdwg.mxu0
    %6986 = vmatpush.bf16.msra.mxu0 %v6505
    %6987 = vmatpush.bf16.msra.mxu0 %v6499
    %6988 = vmatpush.bf16.msra.mxu0 %v6493
    %6989 = vmatpush.bf16.msra.mxu0 %v6487
    %6990 = vmatpush.bf16.msra.mxu0 %v6481
    %6991 = vmatpush.bf16.msra.mxu0 %v6475
    %6992 = vmatpush.bf16.msra.mxu0 %v6469
    %6993 = vmatpush.bf16.msra.mxu0 %v6463
    %6994 = vmatmul.bf16.gmra.mxu0 %v4574
    %v6995 = vpop.f32.mrf.mxu0
    %v6996 = vadd.f32 %v6983, %v6995
    %v6997 = vpop.f32.mrf.mxu0
    %6998 = vdwg.mxu0
    %6999 = vmatpush.bf16.msra.mxu0 %v6170
    %7000 = vmatpush.bf16.msra.mxu0 %v6164
    %7001 = vmatpush.bf16.msra.mxu0 %v6158
    %7002 = vmatpush.bf16.msra.mxu0 %v6152
    %7003 = vmatpush.bf16.msra.mxu0 %v6146
    %7004 = vmatpush.bf16.msra.mxu0 %v6140
    %7005 = vmatpush.bf16.msra.mxu0 %v6134
    %7006 = vmatpush.bf16.msra.mxu0 %v6128
    %7007 = vmatmul.bf16.gmra.mxu0 %v4567
    %v7008 = vpop.f32.mrf.mxu0
    %v7009 = vadd.f32 %v4964, %v7008
    %v7010 = vpop.f32.mrf.mxu0
    %7011 = vdwg.mxu0
    %7012 = vmatpush.bf16.msra.mxu0 %v6218
    %7013 = vmatpush.bf16.msra.mxu0 %v6212
    %7014 = vmatpush.bf16.msra.mxu0 %v6206
    %7015 = vmatpush.bf16.msra.mxu0 %v6200
    %7016 = vmatpush.bf16.msra.mxu0 %v6194
    %7017 = vmatpush.bf16.msra.mxu0 %v6188
    %7018 = vmatpush.bf16.msra.mxu0 %v6182
    %7019 = vmatpush.bf16.msra.mxu0 %v6176
    %7020 = vmatmul.bf16.gmra.mxu0 %v4568
    %v7021 = vpop.f32.mrf.mxu0
    %v7022 = vadd.f32 %v7009, %v7021
    %v7023 = vpop.f32.mrf.mxu0
    %7024 = vdwg.mxu0
    %7025 = vmatpush.bf16.msra.mxu0 %v6266
    %7026 = vmatpush.bf16.msra.mxu0 %v6260
    %7027 = vmatpush.bf16.msra.mxu0 %v6254
    %7028 = vmatpush.bf16.msra.mxu0 %v6248
    %7029 = vmatpush.bf16.msra.mxu0 %v6242
    %7030 = vmatpush.bf16.msra.mxu0 %v6236
    %7031 = vmatpush.bf16.msra.mxu0 %v6230
    %7032 = vmatpush.bf16.msra.mxu0 %v6224
    %7033 = vmatmul.bf16.gmra.mxu0 %v4569
    %v7034 = vpop.f32.mrf.mxu0
    %v7035 = vadd.f32 %v7022, %v7034
    %v7036 = vpop.f32.mrf.mxu0
    %7037 = vdwg.mxu0
    %7038 = vmatpush.bf16.msra.mxu0 %v6314
    %7039 = vmatpush.bf16.msra.mxu0 %v6308
    %7040 = vmatpush.bf16.msra.mxu0 %v6302
    %7041 = vmatpush.bf16.msra.mxu0 %v6296
    %7042 = vmatpush.bf16.msra.mxu0 %v6290
    %7043 = vmatpush.bf16.msra.mxu0 %v6284
    %7044 = vmatpush.bf16.msra.mxu0 %v6278
    %7045 = vmatpush.bf16.msra.mxu0 %v6272
    %7046 = vmatmul.bf16.gmra.mxu0 %v4570
    %v7047 = vpop.f32.mrf.mxu0
    %v7048 = vadd.f32 %v7035, %v7047
    %v7049 = vpop.f32.mrf.mxu0
    %7050 = vdwg.mxu0
    %7051 = vmatpush.bf16.msra.mxu0 %v6362
    %7052 = vmatpush.bf16.msra.mxu0 %v6356
    %7053 = vmatpush.bf16.msra.mxu0 %v6350
    %7054 = vmatpush.bf16.msra.mxu0 %v6344
    %7055 = vmatpush.bf16.msra.mxu0 %v6338
    %7056 = vmatpush.bf16.msra.mxu0 %v6332
    %7057 = vmatpush.bf16.msra.mxu0 %v6326
    %7058 = vmatpush.bf16.msra.mxu0 %v6320
    %7059 = vmatmul.bf16.gmra.mxu0 %v4571
    %v7060 = vpop.f32.mrf.mxu0
    %v7061 = vadd.f32 %v7048, %v7060
    %v7062 = vpop.f32.mrf.mxu0
    %7063 = vdwg.mxu0
    %7064 = vmatpush.bf16.msra.mxu0 %v6410
    %7065 = vmatpush.bf16.msra.mxu0 %v6404
    %7066 = vmatpush.bf16.msra.mxu0 %v6398
    %7067 = vmatpush.bf16.msra.mxu0 %v6392
    %7068 = vmatpush.bf16.msra.mxu0 %v6386
    %7069 = vmatpush.bf16.msra.mxu0 %v6380
    %7070 = vmatpush.bf16.msra.mxu0 %v6374
    %7071 = vmatpush.bf16.msra.mxu0 %v6368
    %7072 = vmatmul.bf16.gmra.mxu0 %v4572
    %v7073 = vpop.f32.mrf.mxu0
    %v7074 = vadd.f32 %v7061, %v7073
    %v7075 = vpop.f32.mrf.mxu0
    %7076 = vdwg.mxu0
    %7077 = vmatpush.bf16.msra.mxu0 %v6458
    %7078 = vmatpush.bf16.msra.mxu0 %v6452
    %7079 = vmatpush.bf16.msra.mxu0 %v6446
    %7080 = vmatpush.bf16.msra.mxu0 %v6440
    %7081 = vmatpush.bf16.msra.mxu0 %v6434
    %7082 = vmatpush.bf16.msra.mxu0 %v6428
    %7083 = vmatpush.bf16.msra.mxu0 %v6422
    %7084 = vmatpush.bf16.msra.mxu0 %v6416
    %7085 = vmatmul.bf16.gmra.mxu0 %v4573
    %v7086 = vpop.f32.mrf.mxu0
    %v7087 = vadd.f32 %v7074, %v7086
    %v7088 = vpop.f32.mrf.mxu0
    %7089 = vdwg.mxu0
    %7090 = vmatpush.bf16.msra.mxu0 %v6506
    %7091 = vmatpush.bf16.msra.mxu0 %v6500
    %7092 = vmatpush.bf16.msra.mxu0 %v6494
    %7093 = vmatpush.bf16.msra.mxu0 %v6488
    %7094 = vmatpush.bf16.msra.mxu0 %v6482
    %7095 = vmatpush.bf16.msra.mxu0 %v6476
    %7096 = vmatpush.bf16.msra.mxu0 %v6470
    %7097 = vmatpush.bf16.msra.mxu0 %v6464
    %7098 = vmatmul.bf16.gmra.mxu0 %v4574
    %v7099 = vpop.f32.mrf.mxu0
    %v7100 = vadd.f32 %v7087, %v7099
    %v7101 = vpop.f32.mrf.mxu0
    %7102 = vdwg.mxu0
    %7103 = vmatpush.bf16.msra.mxu0 %v6171
    %7104 = vmatpush.bf16.msra.mxu0 %v6165
    %7105 = vmatpush.bf16.msra.mxu0 %v6159
    %7106 = vmatpush.bf16.msra.mxu0 %v6153
    %7107 = vmatpush.bf16.msra.mxu0 %v6147
    %7108 = vmatpush.bf16.msra.mxu0 %v6141
    %7109 = vmatpush.bf16.msra.mxu0 %v6135
    %7110 = vmatpush.bf16.msra.mxu0 %v6129
    %7111 = vmatmul.bf16.gmra.mxu0 %v4567
    %v7112 = vpop.f32.mrf.mxu0
    %v7113 = vadd.f32 %v4965, %v7112
    %v7114 = vpop.f32.mrf.mxu0
    %7115 = vdwg.mxu0
    %7116 = vmatpush.bf16.msra.mxu0 %v6219
    %7117 = vmatpush.bf16.msra.mxu0 %v6213
    %7118 = vmatpush.bf16.msra.mxu0 %v6207
    %7119 = vmatpush.bf16.msra.mxu0 %v6201
    %7120 = vmatpush.bf16.msra.mxu0 %v6195
    %7121 = vmatpush.bf16.msra.mxu0 %v6189
    %7122 = vmatpush.bf16.msra.mxu0 %v6183
    %7123 = vmatpush.bf16.msra.mxu0 %v6177
    %7124 = vmatmul.bf16.gmra.mxu0 %v4568
    %v7125 = vpop.f32.mrf.mxu0
    %v7126 = vadd.f32 %v7113, %v7125
    %v7127 = vpop.f32.mrf.mxu0
    %7128 = vdwg.mxu0
    %7129 = vmatpush.bf16.msra.mxu0 %v6267
    %7130 = vmatpush.bf16.msra.mxu0 %v6261
    %7131 = vmatpush.bf16.msra.mxu0 %v6255
    %7132 = vmatpush.bf16.msra.mxu0 %v6249
    %7133 = vmatpush.bf16.msra.mxu0 %v6243
    %7134 = vmatpush.bf16.msra.mxu0 %v6237
    %7135 = vmatpush.bf16.msra.mxu0 %v6231
    %7136 = vmatpush.bf16.msra.mxu0 %v6225
    %7137 = vmatmul.bf16.gmra.mxu0 %v4569
    %v7138 = vpop.f32.mrf.mxu0
    %v7139 = vadd.f32 %v7126, %v7138
    %v7140 = vpop.f32.mrf.mxu0
    %7141 = vdwg.mxu0
    %7142 = vmatpush.bf16.msra.mxu0 %v6315
    %7143 = vmatpush.bf16.msra.mxu0 %v6309
    %7144 = vmatpush.bf16.msra.mxu0 %v6303
    %7145 = vmatpush.bf16.msra.mxu0 %v6297
    %7146 = vmatpush.bf16.msra.mxu0 %v6291
    %7147 = vmatpush.bf16.msra.mxu0 %v6285
    %7148 = vmatpush.bf16.msra.mxu0 %v6279
    %7149 = vmatpush.bf16.msra.mxu0 %v6273
    %7150 = vmatmul.bf16.gmra.mxu0 %v4570
    %v7151 = vpop.f32.mrf.mxu0
    %v7152 = vadd.f32 %v7139, %v7151
    %v7153 = vpop.f32.mrf.mxu0
    %7154 = vdwg.mxu0
    %7155 = vmatpush.bf16.msra.mxu0 %v6363
    %7156 = vmatpush.bf16.msra.mxu0 %v6357
    %7157 = vmatpush.bf16.msra.mxu0 %v6351
    %7158 = vmatpush.bf16.msra.mxu0 %v6345
    %7159 = vmatpush.bf16.msra.mxu0 %v6339
    %7160 = vmatpush.bf16.msra.mxu0 %v6333
    %7161 = vmatpush.bf16.msra.mxu0 %v6327
    %7162 = vmatpush.bf16.msra.mxu0 %v6321
    %7163 = vmatmul.bf16.gmra.mxu0 %v4571
    %v7164 = vpop.f32.mrf.mxu0
    %v7165 = vadd.f32 %v7152, %v7164
    %v7166 = vpop.f32.mrf.mxu0
    %7167 = vdwg.mxu0
    %7168 = vmatpush.bf16.msra.mxu0 %v6411
    %7169 = vmatpush.bf16.msra.mxu0 %v6405
    %7170 = vmatpush.bf16.msra.mxu0 %v6399
    %7171 = vmatpush.bf16.msra.mxu0 %v6393
    %7172 = vmatpush.bf16.msra.mxu0 %v6387
    %7173 = vmatpush.bf16.msra.mxu0 %v6381
    %7174 = vmatpush.bf16.msra.mxu0 %v6375
    %7175 = vmatpush.bf16.msra.mxu0 %v6369
    %7176 = vmatmul.bf16.gmra.mxu0 %v4572
    %v7177 = vpop.f32.mrf.mxu0
    %v7178 = vadd.f32 %v7165, %v7177
    %v7179 = vpop.f32.mrf.mxu0
    %7180 = vdwg.mxu0
    %7181 = vmatpush.bf16.msra.mxu0 %v6459
    %7182 = vmatpush.bf16.msra.mxu0 %v6453
    %7183 = vmatpush.bf16.msra.mxu0 %v6447
    %7184 = vmatpush.bf16.msra.mxu0 %v6441
    %7185 = vmatpush.bf16.msra.mxu0 %v6435
    %7186 = vmatpush.bf16.msra.mxu0 %v6429
    %7187 = vmatpush.bf16.msra.mxu0 %v6423
    %7188 = vmatpush.bf16.msra.mxu0 %v6417
    %7189 = vmatmul.bf16.gmra.mxu0 %v4573
    %v7190 = vpop.f32.mrf.mxu0
    %v7191 = vadd.f32 %v7178, %v7190
    %v7192 = vpop.f32.mrf.mxu0
    %7193 = vdwg.mxu0
    %7194 = vmatpush.bf16.msra.mxu0 %v6507
    %7195 = vmatpush.bf16.msra.mxu0 %v6501
    %7196 = vmatpush.bf16.msra.mxu0 %v6495
    %7197 = vmatpush.bf16.msra.mxu0 %v6489
    %7198 = vmatpush.bf16.msra.mxu0 %v6483
    %7199 = vmatpush.bf16.msra.mxu0 %v6477
    %7200 = vmatpush.bf16.msra.mxu0 %v6471
    %7201 = vmatpush.bf16.msra.mxu0 %v6465
    %7202 = vmatmul.bf16.gmra.mxu0 %v4574
    %v7203 = vpop.f32.mrf.mxu0
    %v7204 = vadd.f32 %v7191, %v7203
    %v7205 = vpop.f32.mrf.mxu0
    %7206 = vdwg.mxu0
    %7207 = vmatpush.bf16.msra.mxu0 %v6172
    %7208 = vmatpush.bf16.msra.mxu0 %v6166
    %7209 = vmatpush.bf16.msra.mxu0 %v6160
    %7210 = vmatpush.bf16.msra.mxu0 %v6154
    %7211 = vmatpush.bf16.msra.mxu0 %v6148
    %7212 = vmatpush.bf16.msra.mxu0 %v6142
    %7213 = vmatpush.bf16.msra.mxu0 %v6136
    %7214 = vmatpush.bf16.msra.mxu0 %v6130
    %7215 = vmatmul.bf16.gmra.mxu0 %v4567
    %v7216 = vpop.f32.mrf.mxu0
    %v7217 = vadd.f32 %v4966, %v7216
    %v7218 = vpop.f32.mrf.mxu0
    %7219 = vdwg.mxu0
    %7220 = vmatpush.bf16.msra.mxu0 %v6220
    %7221 = vmatpush.bf16.msra.mxu0 %v6214
    %7222 = vmatpush.bf16.msra.mxu0 %v6208
    %7223 = vmatpush.bf16.msra.mxu0 %v6202
    %7224 = vmatpush.bf16.msra.mxu0 %v6196
    %7225 = vmatpush.bf16.msra.mxu0 %v6190
    %7226 = vmatpush.bf16.msra.mxu0 %v6184
    %7227 = vmatpush.bf16.msra.mxu0 %v6178
    %7228 = vmatmul.bf16.gmra.mxu0 %v4568
    %v7229 = vpop.f32.mrf.mxu0
    %v7230 = vadd.f32 %v7217, %v7229
    %v7231 = vpop.f32.mrf.mxu0
    %7232 = vdwg.mxu0
    %7233 = vmatpush.bf16.msra.mxu0 %v6268
    %7234 = vmatpush.bf16.msra.mxu0 %v6262
    %7235 = vmatpush.bf16.msra.mxu0 %v6256
    %7236 = vmatpush.bf16.msra.mxu0 %v6250
    %7237 = vmatpush.bf16.msra.mxu0 %v6244
    %7238 = vmatpush.bf16.msra.mxu0 %v6238
    %7239 = vmatpush.bf16.msra.mxu0 %v6232
    %7240 = vmatpush.bf16.msra.mxu0 %v6226
    %7241 = vmatmul.bf16.gmra.mxu0 %v4569
    %v7242 = vpop.f32.mrf.mxu0
    %v7243 = vadd.f32 %v7230, %v7242
    %v7244 = vpop.f32.mrf.mxu0
    %7245 = vdwg.mxu0
    %7246 = vmatpush.bf16.msra.mxu0 %v6316
    %7247 = vmatpush.bf16.msra.mxu0 %v6310
    %7248 = vmatpush.bf16.msra.mxu0 %v6304
    %7249 = vmatpush.bf16.msra.mxu0 %v6298
    %7250 = vmatpush.bf16.msra.mxu0 %v6292
    %7251 = vmatpush.bf16.msra.mxu0 %v6286
    %7252 = vmatpush.bf16.msra.mxu0 %v6280
    %7253 = vmatpush.bf16.msra.mxu0 %v6274
    %7254 = vmatmul.bf16.gmra.mxu0 %v4570
    %v7255 = vpop.f32.mrf.mxu0
    %v7256 = vadd.f32 %v7243, %v7255
    %v7257 = vpop.f32.mrf.mxu0
    %7258 = vdwg.mxu0
    %7259 = vmatpush.bf16.msra.mxu0 %v6364
    %7260 = vmatpush.bf16.msra.mxu0 %v6358
    %7261 = vmatpush.bf16.msra.mxu0 %v6352
    %7262 = vmatpush.bf16.msra.mxu0 %v6346
    %7263 = vmatpush.bf16.msra.mxu0 %v6340
    %7264 = vmatpush.bf16.msra.mxu0 %v6334
    %7265 = vmatpush.bf16.msra.mxu0 %v6328
    %7266 = vmatpush.bf16.msra.mxu0 %v6322
    %7267 = vmatmul.bf16.gmra.mxu0 %v4571
    %v7268 = vpop.f32.mrf.mxu0
    %v7269 = vadd.f32 %v7256, %v7268
    %v7270 = vpop.f32.mrf.mxu0
    %7271 = vdwg.mxu0
    %7272 = vmatpush.bf16.msra.mxu0 %v6412
    %7273 = vmatpush.bf16.msra.mxu0 %v6406
    %7274 = vmatpush.bf16.msra.mxu0 %v6400
    %7275 = vmatpush.bf16.msra.mxu0 %v6394
    %7276 = vmatpush.bf16.msra.mxu0 %v6388
    %7277 = vmatpush.bf16.msra.mxu0 %v6382
    %7278 = vmatpush.bf16.msra.mxu0 %v6376
    %7279 = vmatpush.bf16.msra.mxu0 %v6370
    %7280 = vmatmul.bf16.gmra.mxu0 %v4572
    %v7281 = vpop.f32.mrf.mxu0
    %v7282 = vadd.f32 %v7269, %v7281
    %v7283 = vpop.f32.mrf.mxu0
    %7284 = vdwg.mxu0
    %7285 = vmatpush.bf16.msra.mxu0 %v6460
    %7286 = vmatpush.bf16.msra.mxu0 %v6454
    %7287 = vmatpush.bf16.msra.mxu0 %v6448
    %7288 = vmatpush.bf16.msra.mxu0 %v6442
    %7289 = vmatpush.bf16.msra.mxu0 %v6436
    %7290 = vmatpush.bf16.msra.mxu0 %v6430
    %7291 = vmatpush.bf16.msra.mxu0 %v6424
    %7292 = vmatpush.bf16.msra.mxu0 %v6418
    %7293 = vmatmul.bf16.gmra.mxu0 %v4573
    %v7294 = vpop.f32.mrf.mxu0
    %v7295 = vadd.f32 %v7282, %v7294
    %v7296 = vpop.f32.mrf.mxu0
    %7297 = vdwg.mxu0
    %7298 = vmatpush.bf16.msra.mxu0 %v6508
    %7299 = vmatpush.bf16.msra.mxu0 %v6502
    %7300 = vmatpush.bf16.msra.mxu0 %v6496
    %7301 = vmatpush.bf16.msra.mxu0 %v6490
    %7302 = vmatpush.bf16.msra.mxu0 %v6484
    %7303 = vmatpush.bf16.msra.mxu0 %v6478
    %7304 = vmatpush.bf16.msra.mxu0 %v6472
    %7305 = vmatpush.bf16.msra.mxu0 %v6466
    %7306 = vmatmul.bf16.gmra.mxu0 %v4574
    %v7307 = vpop.f32.mrf.mxu0
    %v7308 = vadd.f32 %v7295, %v7307
    %v7309 = vpop.f32.mrf.mxu0
    %7310 = vdwg.mxu0
    %7311 = vmatpush.bf16.msra.mxu0 %v6173
    %7312 = vmatpush.bf16.msra.mxu0 %v6167
    %7313 = vmatpush.bf16.msra.mxu0 %v6161
    %7314 = vmatpush.bf16.msra.mxu0 %v6155
    %7315 = vmatpush.bf16.msra.mxu0 %v6149
    %7316 = vmatpush.bf16.msra.mxu0 %v6143
    %7317 = vmatpush.bf16.msra.mxu0 %v6137
    %7318 = vmatpush.bf16.msra.mxu0 %v6131
    %7319 = vmatmul.bf16.gmra.mxu0 %v4567
    %v7320 = vpop.f32.mrf.mxu0
    %v7321 = vadd.f32 %v4967, %v7320
    %v7322 = vpop.f32.mrf.mxu0
    %7323 = vdwg.mxu0
    %7324 = vmatpush.bf16.msra.mxu0 %v6221
    %7325 = vmatpush.bf16.msra.mxu0 %v6215
    %7326 = vmatpush.bf16.msra.mxu0 %v6209
    %7327 = vmatpush.bf16.msra.mxu0 %v6203
    %7328 = vmatpush.bf16.msra.mxu0 %v6197
    %7329 = vmatpush.bf16.msra.mxu0 %v6191
    %7330 = vmatpush.bf16.msra.mxu0 %v6185
    %7331 = vmatpush.bf16.msra.mxu0 %v6179
    %7332 = vmatmul.bf16.gmra.mxu0 %v4568
    %v7333 = vpop.f32.mrf.mxu0
    %v7334 = vadd.f32 %v7321, %v7333
    %v7335 = vpop.f32.mrf.mxu0
    %7336 = vdwg.mxu0
    %7337 = vmatpush.bf16.msra.mxu0 %v6269
    %7338 = vmatpush.bf16.msra.mxu0 %v6263
    %7339 = vmatpush.bf16.msra.mxu0 %v6257
    %7340 = vmatpush.bf16.msra.mxu0 %v6251
    %7341 = vmatpush.bf16.msra.mxu0 %v6245
    %7342 = vmatpush.bf16.msra.mxu0 %v6239
    %7343 = vmatpush.bf16.msra.mxu0 %v6233
    %7344 = vmatpush.bf16.msra.mxu0 %v6227
    %7345 = vmatmul.bf16.gmra.mxu0 %v4569
    %v7346 = vpop.f32.mrf.mxu0
    %v7347 = vadd.f32 %v7334, %v7346
    %v7348 = vpop.f32.mrf.mxu0
    %7349 = vdwg.mxu0
    %7350 = vmatpush.bf16.msra.mxu0 %v6317
    %7351 = vmatpush.bf16.msra.mxu0 %v6311
    %7352 = vmatpush.bf16.msra.mxu0 %v6305
    %7353 = vmatpush.bf16.msra.mxu0 %v6299
    %7354 = vmatpush.bf16.msra.mxu0 %v6293
    %7355 = vmatpush.bf16.msra.mxu0 %v6287
    %7356 = vmatpush.bf16.msra.mxu0 %v6281
    %7357 = vmatpush.bf16.msra.mxu0 %v6275
    %7358 = vmatmul.bf16.gmra.mxu0 %v4570
    %v7359 = vpop.f32.mrf.mxu0
    %v7360 = vadd.f32 %v7347, %v7359
    %v7361 = vpop.f32.mrf.mxu0
    %7362 = vdwg.mxu0
    %7363 = vmatpush.bf16.msra.mxu0 %v6365
    %7364 = vmatpush.bf16.msra.mxu0 %v6359
    %7365 = vmatpush.bf16.msra.mxu0 %v6353
    %7366 = vmatpush.bf16.msra.mxu0 %v6347
    %7367 = vmatpush.bf16.msra.mxu0 %v6341
    %7368 = vmatpush.bf16.msra.mxu0 %v6335
    %7369 = vmatpush.bf16.msra.mxu0 %v6329
    %7370 = vmatpush.bf16.msra.mxu0 %v6323
    %7371 = vmatmul.bf16.gmra.mxu0 %v4571
    %v7372 = vpop.f32.mrf.mxu0
    %v7373 = vadd.f32 %v7360, %v7372
    %v7374 = vpop.f32.mrf.mxu0
    %7375 = vdwg.mxu0
    %7376 = vmatpush.bf16.msra.mxu0 %v6413
    %7377 = vmatpush.bf16.msra.mxu0 %v6407
    %7378 = vmatpush.bf16.msra.mxu0 %v6401
    %7379 = vmatpush.bf16.msra.mxu0 %v6395
    %7380 = vmatpush.bf16.msra.mxu0 %v6389
    %7381 = vmatpush.bf16.msra.mxu0 %v6383
    %7382 = vmatpush.bf16.msra.mxu0 %v6377
    %7383 = vmatpush.bf16.msra.mxu0 %v6371
    %7384 = vmatmul.bf16.gmra.mxu0 %v4572
    %v7385 = vpop.f32.mrf.mxu0
    %v7386 = vadd.f32 %v7373, %v7385
    %v7387 = vpop.f32.mrf.mxu0
    %7388 = vdwg.mxu0
    %7389 = vmatpush.bf16.msra.mxu0 %v6461
    %7390 = vmatpush.bf16.msra.mxu0 %v6455
    %7391 = vmatpush.bf16.msra.mxu0 %v6449
    %7392 = vmatpush.bf16.msra.mxu0 %v6443
    %7393 = vmatpush.bf16.msra.mxu0 %v6437
    %7394 = vmatpush.bf16.msra.mxu0 %v6431
    %7395 = vmatpush.bf16.msra.mxu0 %v6425
    %7396 = vmatpush.bf16.msra.mxu0 %v6419
    %7397 = vmatmul.bf16.gmra.mxu0 %v4573
    %v7398 = vpop.f32.mrf.mxu0
    %v7399 = vadd.f32 %v7386, %v7398
    %v7400 = vpop.f32.mrf.mxu0
    %7401 = vdwg.mxu0
    %7402 = vmatpush.bf16.msra.mxu0 %v6509
    %7403 = vmatpush.bf16.msra.mxu0 %v6503
    %7404 = vmatpush.bf16.msra.mxu0 %v6497
    %7405 = vmatpush.bf16.msra.mxu0 %v6491
    %7406 = vmatpush.bf16.msra.mxu0 %v6485
    %7407 = vmatpush.bf16.msra.mxu0 %v6479
    %7408 = vmatpush.bf16.msra.mxu0 %v6473
    %7409 = vmatpush.bf16.msra.mxu0 %v6467
    %7410 = vmatmul.bf16.gmra.mxu0 %v4574
    %v7411 = vpop.f32.mrf.mxu0
    %v7412 = vadd.f32 %v7399, %v7411
    %v7413 = vpop.f32.mrf.mxu0
    %7414 = vdwg.mxu0
    %7415 = vmatpush.bf16.msra.mxu0 %v6174
    %7416 = vmatpush.bf16.msra.mxu0 %v6168
    %7417 = vmatpush.bf16.msra.mxu0 %v6162
    %7418 = vmatpush.bf16.msra.mxu0 %v6156
    %7419 = vmatpush.bf16.msra.mxu0 %v6150
    %7420 = vmatpush.bf16.msra.mxu0 %v6144
    %7421 = vmatpush.bf16.msra.mxu0 %v6138
    %7422 = vmatpush.bf16.msra.mxu0 %v6132
    %7423 = vmatmul.bf16.gmra.mxu0 %v4567
    %v7424 = vpop.f32.mrf.mxu0
    %v7425 = vadd.f32 %v4968, %v7424
    %v7426 = vpop.f32.mrf.mxu0
    %7427 = vdwg.mxu0
    %7428 = vmatpush.bf16.msra.mxu0 %v6222
    %7429 = vmatpush.bf16.msra.mxu0 %v6216
    %7430 = vmatpush.bf16.msra.mxu0 %v6210
    %7431 = vmatpush.bf16.msra.mxu0 %v6204
    %7432 = vmatpush.bf16.msra.mxu0 %v6198
    %7433 = vmatpush.bf16.msra.mxu0 %v6192
    %7434 = vmatpush.bf16.msra.mxu0 %v6186
    %7435 = vmatpush.bf16.msra.mxu0 %v6180
    %7436 = vmatmul.bf16.gmra.mxu0 %v4568
    %v7437 = vpop.f32.mrf.mxu0
    %v7438 = vadd.f32 %v7425, %v7437
    %v7439 = vpop.f32.mrf.mxu0
    %7440 = vdwg.mxu0
    %7441 = vmatpush.bf16.msra.mxu0 %v6270
    %7442 = vmatpush.bf16.msra.mxu0 %v6264
    %7443 = vmatpush.bf16.msra.mxu0 %v6258
    %7444 = vmatpush.bf16.msra.mxu0 %v6252
    %7445 = vmatpush.bf16.msra.mxu0 %v6246
    %7446 = vmatpush.bf16.msra.mxu0 %v6240
    %7447 = vmatpush.bf16.msra.mxu0 %v6234
    %7448 = vmatpush.bf16.msra.mxu0 %v6228
    %7449 = vmatmul.bf16.gmra.mxu0 %v4569
    %v7450 = vpop.f32.mrf.mxu0
    %v7451 = vadd.f32 %v7438, %v7450
    %v7452 = vpop.f32.mrf.mxu0
    %7453 = vdwg.mxu0
    %7454 = vmatpush.bf16.msra.mxu0 %v6318
    %7455 = vmatpush.bf16.msra.mxu0 %v6312
    %7456 = vmatpush.bf16.msra.mxu0 %v6306
    %7457 = vmatpush.bf16.msra.mxu0 %v6300
    %7458 = vmatpush.bf16.msra.mxu0 %v6294
    %7459 = vmatpush.bf16.msra.mxu0 %v6288
    %7460 = vmatpush.bf16.msra.mxu0 %v6282
    %7461 = vmatpush.bf16.msra.mxu0 %v6276
    %7462 = vmatmul.bf16.gmra.mxu0 %v4570
    %v7463 = vpop.f32.mrf.mxu0
    %v7464 = vadd.f32 %v7451, %v7463
    %v7465 = vpop.f32.mrf.mxu0
    %7466 = vdwg.mxu0
    %7467 = vmatpush.bf16.msra.mxu0 %v6366
    %7468 = vmatpush.bf16.msra.mxu0 %v6360
    %7469 = vmatpush.bf16.msra.mxu0 %v6354
    %7470 = vmatpush.bf16.msra.mxu0 %v6348
    %7471 = vmatpush.bf16.msra.mxu0 %v6342
    %7472 = vmatpush.bf16.msra.mxu0 %v6336
    %7473 = vmatpush.bf16.msra.mxu0 %v6330
    %7474 = vmatpush.bf16.msra.mxu0 %v6324
    %7475 = vmatmul.bf16.gmra.mxu0 %v4571
    %v7476 = vpop.f32.mrf.mxu0
    %v7477 = vadd.f32 %v7464, %v7476
    %v7478 = vpop.f32.mrf.mxu0
    %7479 = vdwg.mxu0
    %7480 = vmatpush.bf16.msra.mxu0 %v6414
    %7481 = vmatpush.bf16.msra.mxu0 %v6408
    %7482 = vmatpush.bf16.msra.mxu0 %v6402
    %7483 = vmatpush.bf16.msra.mxu0 %v6396
    %7484 = vmatpush.bf16.msra.mxu0 %v6390
    %7485 = vmatpush.bf16.msra.mxu0 %v6384
    %7486 = vmatpush.bf16.msra.mxu0 %v6378
    %7487 = vmatpush.bf16.msra.mxu0 %v6372
    %7488 = vmatmul.bf16.gmra.mxu0 %v4572
    %v7489 = vpop.f32.mrf.mxu0
    %v7490 = vadd.f32 %v7477, %v7489
    %v7491 = vpop.f32.mrf.mxu0
    %7492 = vdwg.mxu0
    %7493 = vmatpush.bf16.msra.mxu0 %v6462
    %7494 = vmatpush.bf16.msra.mxu0 %v6456
    %7495 = vmatpush.bf16.msra.mxu0 %v6450
    %7496 = vmatpush.bf16.msra.mxu0 %v6444
    %7497 = vmatpush.bf16.msra.mxu0 %v6438
    %7498 = vmatpush.bf16.msra.mxu0 %v6432
    %7499 = vmatpush.bf16.msra.mxu0 %v6426
    %7500 = vmatpush.bf16.msra.mxu0 %v6420
    %7501 = vmatmul.bf16.gmra.mxu0 %v4573
    %v7502 = vpop.f32.mrf.mxu0
    %v7503 = vadd.f32 %v7490, %v7502
    %v7504 = vpop.f32.mrf.mxu0
    %7505 = vdwg.mxu0
    %7506 = vmatpush.bf16.msra.mxu0 %v6510
    %7507 = vmatpush.bf16.msra.mxu0 %v6504
    %7508 = vmatpush.bf16.msra.mxu0 %v6498
    %7509 = vmatpush.bf16.msra.mxu0 %v6492
    %7510 = vmatpush.bf16.msra.mxu0 %v6486
    %7511 = vmatpush.bf16.msra.mxu0 %v6480
    %7512 = vmatpush.bf16.msra.mxu0 %v6474
    %7513 = vmatpush.bf16.msra.mxu0 %v6468
    %7514 = vmatmul.bf16.gmra.mxu0 %v4574
    %v7515 = vpop.f32.mrf.mxu0
    %v7516 = vadd.f32 %v7503, %v7515
    %v7517 = vpop.f32.mrf.mxu0
    %7518 = vdwg.mxu0
    %7519 = vst [vmem:[%s7] sm:$0xff] %v6996
    %7520 = vst [vmem:[%s7 + $0x8] sm:$0xff] %v7100
    %7521 = vst [vmem:[%s7 + $0x10] sm:$0xff] %v7204
    %7522 = vst [vmem:[%s7 + $0x18] sm:$0xff] %v7308
    %7523 = vst [vmem:[%s7 + $0x20] sm:$0xff] %v7412
    %7524 = vst [vmem:[%s7 + $0x28] sm:$0xff] %v7516
    // Predicated region
    $region54: #{fc_decoder_forward.1} parent=1 // pred_check
      _
    $region55: #{fc_decoder_forward.1} parent=1 // pred_check_branch
      %7526 = sbr.rel (0) target = $region57
    $region56: #{fc_decoder_forward.1} parent=1 // pred_region
      _
    $region57: #{fc_decoder_forward.1} parent=1 // pred_fallthru
      _
    // Predicated region
    $region58: #{fc_decoder_forward.1} parent=1 // pred_check
      _
    $region59: #{fc_decoder_forward.1} parent=1 // pred_check_branch
      %7528 = sbr.rel (0) target = $region61
    $region60: #{fc_decoder_forward.1} parent=1 // pred_region
      _
    $region61: #{fc_decoder_forward.1} parent=1 // pred_fallthru
      _
    %7529 = vsyncpa [#allocation3], 1
    %7530 = vsyncpa [#allocation5], 1
    %7531 = vsyncpa [#allocation8], 1
    %7532 = vsyncpa [#allocation11], 1

</llo_original>
